<compile_context>
chip_gen: v7x
topology: tpu7x:2x2x1
jax: 0.10.0
libtpu: 0.0.40
codegen_flags: <defaults>
</compile_context>

<pallas_src>
import functools

import numpy as np
import jax
import jax.numpy as jnp
from jax import lax
from jax.experimental import pallas as pl
from jax.experimental.pallas import tpu as pltpu


LANE = 128                     # lane width: keep last dims multiples of 128
SUB = 8                        # sublane granularity
BN_EPS = 1e-5
BN_SCALE = float(1.0 / (1.0 + BN_EPS) ** 0.5)   # BatchNorm1d eval, default running stats
VMEM_LIMIT = 48 * 1024 * 1024  # fits v5e/v6e/v7x (v7x has 64 MiB physical per TC)


def _round_up(x, m):
    return ((x + m - 1) // m) * m


def _pick_tiles(n):
    """(TM, TK) for the SAGE aggregation grid. n must be a multiple of 128."""
    assert n % LANE == 0, "pad node count to a multiple of 128"
    # destination tile: keep >= 2 i-blocks so both v7x TensorCores stay busy
    tm = 256 if (n % 256 == 0 and n // 256 >= 2) else 128
    # reduction tile: as large as divides n (amortize per-step grid overhead)
    tk = next(c for c in (512, 256, 128) if n % c == 0)
    return tm, tk


def _pick_node_tile(n):
    return next(c for c in (512, 256, 128) if n % c == 0)


# ----------------------------- Pallas kernels -----------------------------

def _encoder_kernel(x_ref, w_ref, b_ref, o_ref):
    # node_encoder LinearLayer; in_feat_dropout is identity in eval mode.
    y = (jnp.dot(x_ref[...], w_ref[...], preferred_element_type=jnp.float32)
         + b_ref[...])
    o_ref[...] = y.astype(o_ref.dtype)


def _sage_layer_kernel(nnz_ref, idx_ref, h_self_ref, adj_ref, h_src_ref, dinv_ref,
                       ws_ref, wn_ref, b_ref, o_ref, acc_ref, self_ref):
    i = pl.program_id(0)
    k = pl.program_id(1)

    @pl.when(k == 0)
    def _():
        acc_ref[...] = jnp.zeros_like(acc_ref)
        # hoisted self path: one bf16 MXU pass, overlaps later adj/h_src DMAs
        self_ref[...] = (jnp.dot(h_self_ref[...], ws_ref[...],
                                 preferred_element_type=jnp.float32) + b_ref[...])

    # block-sparse neighbor-sum partial: {0,1} bf16 adj block x bf16 h block on the
    # MXU with f32 accumulation; padded tail steps (k >= nnz[i]) are skipped.
    @pl.when(k < nnz_ref[i])
    def _():
        acc_ref[...] += jnp.dot(adj_ref[...], h_src_ref[...],
                                preferred_element_type=jnp.float32)

    @pl.when(k == pl.num_programs(1) - 1)
    def _():
        # exact f32 1/deg turns the neighbor sum into the DGL 'mean' aggregate
        c = (acc_ref[...] * dinv_ref[...]).astype(jnp.bfloat16)
        y = self_ref[...] + jnp.dot(c, wn_ref[...],
                                    preferred_element_type=jnp.float32)
        # F.normalize(y, dim=1) -> ReLU -> BatchNorm1d(eval, default running stats).
        # ReLU commutes with the positive per-row scale, so the BN constant is
        # folded into the rsqrt factor: one EUP rsqrt + one per-tile multiply.
        sumsq = jnp.sum(y * y, axis=1, keepdims=True)
        inv = lax.rsqrt(jnp.maximum(sumsq, 1e-24)) * BN_SCALE
        o_ref[...] = (jnp.maximum(y, 0.0) * inv).astype(o_ref.dtype)


def _pool_readout_kernel(pool_ref, h_ref, ginv_ref, w1_ref, b1_ref, w2_ref, b2_ref,
                         w3_ref, b3_ref, o_ref, acc_ref):
    k = pl.program_id(0)

    @pl.when(k == 0)
    def _():
        acc_ref[...] = jnp.zeros_like(acc_ref)

    # mean_nodes: per-graph sum via {0,1} membership matrix (reduction over node tiles)
    acc_ref[...] += jnp.dot(pool_ref[...], h_ref[...],
                            preferred_element_type=jnp.float32)

    @pl.when(k == pl.num_programs(0) - 1)
    def _():
        hg = (acc_ref[...] * ginv_ref[...]).astype(jnp.bfloat16)   # exact f32 1/|G|
        hg = jnp.maximum(
            jnp.dot(hg, w1_ref[...], preferred_element_type=jnp.float32)
            + b1_ref[...], 0.0)
        hg = jnp.maximum(
            jnp.dot(hg.astype(jnp.bfloat16), w2_ref[...],
                    preferred_element_type=jnp.float32) + b2_ref[...], 0.0)
        o_ref[...] = (jnp.dot(hg.astype(jnp.bfloat16), w3_ref[...],
                              preferred_element_type=jnp.float32) + b3_ref[...])


# ----------------------------- wrappers -----------------------------------

def encoder_forward(x, w, b):
    n, in_pad = x.shape
    hid_pad = w.shape[1]
    tn = _pick_node_tile(n)
    return pl.pallas_call(
        _encoder_kernel,
        out_shape=jax.ShapeDtypeStruct((n, hid_pad), jnp.bfloat16),
        grid_spec=pltpu.PrefetchScalarGridSpec(
            num_scalar_prefetch=0, grid=(n // tn,),
            in_specs=[pl.BlockSpec((tn, in_pad), lambda i: (i, 0)),
                      pl.BlockSpec((in_pad, hid_pad), lambda i: (0, 0)),
                      pl.BlockSpec((1, hid_pad), lambda i: (0, 0))],
            out_specs=pl.BlockSpec((tn, hid_pad), lambda i: (i, 0))),
        compiler_params=pltpu.CompilerParams(
            dimension_semantics=("parallel",),
            vmem_limit_bytes=VMEM_LIMIT),
    )(x, w, b)


def sage_layer(h, adj01, deg_inv, blk_nnz, blk_idx, w_self, w_neigh, b):
    n, hid_pad = h.shape
    tm, tk = _pick_tiles(n)
    max_nnz = blk_idx.shape[1]
    return pl.pallas_call(
        _sage_layer_kernel,
        out_shape=jax.ShapeDtypeStruct((n, hid_pad), jnp.bfloat16),
        grid_spec=pltpu.PrefetchScalarGridSpec(
            num_scalar_prefetch=2, grid=(n // tm, max_nnz),
            in_specs=[
                pl.BlockSpec((tm, hid_pad), lambda i, k, nnz, idx: (i, 0)),         # h (self)
                pl.BlockSpec((tm, tk), lambda i, k, nnz, idx: (i, idx[i, k])),       # adj block
                pl.BlockSpec((tk, hid_pad), lambda i, k, nnz, idx: (idx[i, k], 0)),  # h (src)
                pl.BlockSpec((tm, 1), lambda i, k, nnz, idx: (i, 0)),                # 1/deg
                pl.BlockSpec((hid_pad, hid_pad), lambda i, k, nnz, idx: (0, 0)),     # W_self
                pl.BlockSpec((hid_pad, hid_pad), lambda i, k, nnz, idx: (0, 0)),     # W_neigh
                pl.BlockSpec((1, hid_pad), lambda i, k, nnz, idx: (0, 0)),           # bias
            ],
            out_specs=pl.BlockSpec((tm, hid_pad), lambda i, k, nnz, idx: (i, 0)),
            scratch_shapes=[pltpu.VMEM((tm, hid_pad), jnp.float32),   # neighbor-sum acc
                            pltpu.VMEM((tm, hid_pad), jnp.float32)]), # hoisted self path
        compiler_params=pltpu.CompilerParams(
            dimension_semantics=("parallel", "arbitrary"),
            vmem_limit_bytes=VMEM_LIMIT),
    )(blk_nnz, blk_idx, h, adj01, h, deg_inv, w_self, w_neigh, b)


def pool_readout(pool01, h, ginv, w1, b1, w2, b2, w3, b3):
    g_pad, n = pool01.shape
    hid_pad = h.shape[1]
    c_pad = w3.shape[1]
    tk = _pick_node_tile(n)
    return pl.pallas_call(
        _pool_readout_kernel,
        out_shape=jax.ShapeDtypeStruct((g_pad, c_pad), jnp.float32),
        grid_spec=pltpu.PrefetchScalarGridSpec(
            num_scalar_prefetch=0, grid=(n // tk,),
            in_specs=[pl.BlockSpec((g_pad, tk), lambda k: (0, k)),
                      pl.BlockSpec((tk, hid_pad), lambda k: (k, 0)),
                      pl.BlockSpec((g_pad, 1), lambda k: (0, 0)),
                      pl.BlockSpec(w1.shape, lambda k: (0, 0)),
                      pl.BlockSpec(b1.shape, lambda k: (0, 0)),
                      pl.BlockSpec(w2.shape, lambda k: (0, 0)),
                      pl.BlockSpec(b2.shape, lambda k: (0, 0)),
                      pl.BlockSpec(w3.shape, lambda k: (0, 0)),
                      pl.BlockSpec(b3.shape, lambda k: (0, 0))],
            out_specs=pl.BlockSpec((g_pad, c_pad), lambda k: (0, 0)),
            scratch_shapes=[pltpu.VMEM((g_pad, hid_pad), jnp.float32)]),
        compiler_params=pltpu.CompilerParams(
            dimension_semantics=("arbitrary",),
            vmem_limit_bytes=VMEM_LIMIT),
    )(pool01, h, ginv, w1, b1, w2, b2, w3, b3)


# ----------------------------- graph preprocessing -------------------------

def build_graph_inputs(adj, membership):
    """Host-side (non-jit) graph preprocessing.

    adj:        [N, N] {0,1}, adj[i, j] = 1 iff edge j -> i.
    membership: [G, N] {0,1}, membership[g, j] = 1 iff node j belongs to graph g.
    Produces the {0,1} bf16 adjacency, exact f32 1/deg and 1/|G| vectors, and the
    per-destination-tile block-CSR (nnz counts + padded block-column indices).
    """
    adj = np.asarray(adj, np.float32)
    membership = np.asarray(membership, np.float32)
    n = adj.shape[0]
    tm, tk = _pick_tiles(n)
    nb_i, nb_k = n // tm, n // tk

    blk_mask = adj.reshape(nb_i, tm, nb_k, tk).sum(axis=(1, 3)) > 0
    nnz = blk_mask.sum(axis=1).astype(np.int32)
    max_nnz = max(1, int(nnz.max()))
    blk_idx = np.zeros((nb_i, max_nnz), np.int32)
    for i in range(nb_i):
        cols = np.nonzero(blk_mask[i])[0]
        if cols.size:
            blk_idx[i, :cols.size] = cols
            blk_idx[i, cols.size:] = cols[-1]   # repeat last idx: tail steps re-use buffer

    deg = adj.sum(axis=1, keepdims=True)
    deg_inv = (1.0 / np.maximum(deg, 1.0)).astype(np.float32)

    g = membership.shape[0]
    g_pad = _round_up(max(g, SUB), SUB)
    pool01 = np.zeros((g_pad, n), np.float32)
    pool01[:g] = membership
    gsize = pool01.sum(axis=1, keepdims=True)
    ginv = (1.0 / np.maximum(gsize, 1.0)).astype(np.float32)

    return {'adj': jnp.asarray(adj, jnp.bfloat16),       # {0,1}: exact in bf16
            'deg_inv': jnp.asarray(deg_inv),
            'blk_nnz': jnp.asarray(nnz),
            'blk_idx': jnp.asarray(blk_idx),
            'pool01': jnp.asarray(pool01, jnp.bfloat16),  # {0,1}: exact in bf16
            'ginv': jnp.asarray(ginv)}


# ----------------------------- parameter init ------------------------------

def _pad2(x, rows, cols, dtype):
    return jnp.zeros((rows, cols), dtype).at[:x.shape[0], :x.shape[1]].set(x.astype(dtype))


def _init_linear(key, fan_in, fan_out):
    kw, kb = jax.random.split(key)
    bound = 1.0 / float(fan_in) ** 0.5
    w = jax.random.uniform(kw, (fan_in, fan_out), jnp.float32, -bound, bound)
    b = jax.random.uniform(kb, (1, fan_out), jnp.float32, -bound, bound)
    return w, b


def init_params(key, in_dim, hidden, n_classes, n_layers):
    in_pad = _round_up(in_dim, LANE)
    hid_pad = _round_up(hidden, LANE)
    h2_pad = _round_up(max(hidden // 2, 1), LANE)
    h4_pad = _round_up(max(hidden // 4, 1), LANE)
    cls_pad = _round_up(n_classes, LANE)

    keys = jax.random.split(key, n_layers + 4)
    params = {}
    w, b = _init_linear(keys[0], in_dim, hidden)
    params['enc_w'] = _pad2(w, in_pad, hid_pad, jnp.bfloat16)
    params['enc_b'] = _pad2(b, 1, hid_pad, jnp.float32)

    layers = []
    for l in range(n_layers):
        # NodeApply linear (2*hidden -> hidden), split into self / neighbor halves.
        w_full, b = _init_linear(keys[1 + l], 2 * hidden, hidden)
        layers.append({'w_self': _pad2(w_full[:hidden, :], hid_pad, hid_pad, jnp.bfloat16),
                       'w_neigh': _pad2(w_full[hidden:, :], hid_pad, hid_pad, jnp.bfloat16),
                       'b': _pad2(b, 1, hid_pad, jnp.float32)})
    params['layers'] = layers

    w, b = _init_linear(keys[-3], hidden, hidden // 2)
    params['r1_w'], params['r1_b'] = _pad2(w, hid_pad, h2_pad, jnp.bfloat16), _pad2(b, 1, h2_pad, jnp.float32)
    w, b = _init_linear(keys[-2], hidden // 2, hidden // 4)
    params['r2_w'], params['r2_b'] = _pad2(w, h2_pad, h4_pad, jnp.bfloat16), _pad2(b, 1, h4_pad, jnp.float32)
    w, b = _init_linear(keys[-1], hidden // 4, n_classes)
    params['r3_w'], params['r3_b'] = _pad2(w, h4_pad, cls_pad, jnp.bfloat16), _pad2(b, 1, cls_pad, jnp.float32)
    return params


# ----------------------------- forward pass --------------------------------

def activation_graphsage_net_forward(h0, graph, params, *, n_graphs, n_classes):
    n = h0.shape[0]
    in_pad = params['enc_w'].shape[0]

    # zero-pad input features to a lane-dense width; bf16 feeds the bf16 MXU path.
    x = jnp.zeros((n, in_pad), jnp.bfloat16).at[:, :h0.shape[1]].set(h0.astype(jnp.bfloat16))

    # node encoder (LinearLayer); in_feat_dropout / per-layer dropout: identity in eval.
    h = encoder_forward(x, params['enc_w'], params['enc_b'])

    # ActivationGraphSageLayer stack (block-sparse mean neighbor aggregation).
    # TODO(synk): fuse the L layers (plus the pool accumulation) into one pallas_call
    # with h resident in VMEM (budget < ~48 MiB on v7x) to remove the per-layer HBM
    # round-trip of h; fall back to this streaming path above the VMEM cutover.
    for lp in params['layers']:
        h = sage_layer(h, graph['adj'], graph['deg_inv'], graph['blk_nnz'],
                       graph['blk_idx'], lp['w_self'], lp['w_neigh'], lp['b'])

    # mean graph pooling + 3-layer readout MLP, fused into a single kernel.
    out = pool_readout(graph['pool01'], h, graph['ginv'],
                       params['r1_w'], params['r1_b'],
                       params['r2_w'], params['r2_b'],
                       params['r3_w'], params['r3_b'])
    return out[:n_graphs, :n_classes]


# ----------------------------- main ----------------------------------------

if __name__ == "__main__":
    IN_DIM, HIDDEN, N_CLASSES, N_LAYERS = 16, 32, 4, 2
    NODES_PER_GRAPH, N_GRAPHS = 128, 2
    N = NODES_PER_GRAPH * N_GRAPHS                     # 256 nodes

    key = jax.random.PRNGKey(0)
    k_feat, k_param = jax.random.split(key)

    # node features [N, in_dim]
    h0 = jax.random.normal(k_feat, (N, IN_DIM), jnp.float32)

    # deterministic batched graph: bidirectional ring inside each graph,
    # block-diagonal over graphs. A[i, j] = 1 iff edge j -> i.
    eye = np.eye(NODES_PER_GRAPH, dtype=np.float32)
    ring = np.roll(eye, 1, axis=0) + np.roll(eye, -1, axis=0)
    adj = np.kron(np.eye(N_GRAPHS, dtype=np.float32), ring)

    # {0,1} graph-membership matrix [G, N] (mean pooling scale applied in-kernel).
    membership = np.kron(np.eye(N_GRAPHS, dtype=np.float32),
                         np.ones((1, NODES_PER_GRAPH), np.float32))

    graph = build_graph_inputs(adj, membership)
    params = init_params(k_param, IN_DIM, HIDDEN, N_CLASSES, N_LAYERS)

    fwd = jax.jit(functools.partial(activation_graphsage_net_forward,
                                    n_graphs=N_GRAPHS, n_classes=N_CLASSES))
    out = fwd(h0, graph, params)
    out = jax.block_until_ready(out)
    assert out.shape == (N_GRAPHS, N_CLASSES)
    assert bool(jnp.all(jnp.isfinite(out)))
    print("KERNEL_OK")
</pallas_src>

<mosaic_0001>
module attributes {stable_mosaic.version = 11 : i64} {
  func.func @_encoder_kernel(%arg0: i32, %arg1: memref<256x128xbf16, #tpu.memory_space<vmem>>, %arg2: memref<128x128xbf16, #tpu.memory_space<vmem>>, %arg3: memref<1x128xf32, #tpu.memory_space<vmem>>, %arg4: memref<256x128xbf16, #tpu.memory_space<vmem>>) attributes {dimension_semantics = [#tpu.dimension_semantics<parallel>], iteration_bounds = array<i64: 1>, scalar_prefetch = 0 : i64, scratch_operands = 0 : i64, tpu.core_type = #tpu.core_type<tc>, window_params = [{transform_indices = @transform_0, window_bounds = array<i64: 256, 128>}, {pipeline_mode = #tpu.pipeline_mode<synchronous>, transform_indices = @transform_1, window_bounds = array<i64: 128, 128>}, {pipeline_mode = #tpu.pipeline_mode<synchronous>, transform_indices = @transform_2, window_bounds = array<i64: 1, 128>}, {transform_indices = @transform_3, window_bounds = array<i64: 256, 128>}]} {
    %c0 = arith.constant 0 : index
    %c0_0 = arith.constant 0 : index
    %0 = vector.load %arg1[%c0, %c0_0] : memref<256x128xbf16, #tpu.memory_space<vmem>>, vector<256x128xbf16>
    %c0_1 = arith.constant 0 : index
    %c0_2 = arith.constant 0 : index
    %1 = vector.load %arg2[%c0_1, %c0_2] : memref<128x128xbf16, #tpu.memory_space<vmem>>, vector<128x128xbf16>
    %cst = arith.constant dense<0.000000e+00> : vector<256x128xf32>
    %2 = tpu.matmul %0, %1, %cst {dimension_numbers = #tpu.dot_dimension_numbers<[1], [0], [0], [1], [0, 0, 1, 1], [], []>} : vector<256x128xbf16>, vector<128x128xbf16>, vector<256x128xf32> -> vector<256x128xf32>
    %c0_3 = arith.constant 0 : index
    %c0_4 = arith.constant 0 : index
    %3 = vector.load %arg3[%c0_3, %c0_4] : memref<1x128xf32, #tpu.memory_space<vmem>>, vector<1x128xf32>
    %4 = vector.broadcast %3 : vector<1x128xf32> to vector<256x128xf32>
    %5 = arith.addf %2, %4 : vector<256x128xf32>
    %6 = arith.truncf %5 : vector<256x128xf32> to vector<256x128xbf16>
    %c0_5 = arith.constant 0 : index
    %c0_6 = arith.constant 0 : index
    %7 = vector.load %arg4[%c0_5, %c0_6] : memref<256x128xbf16, #tpu.memory_space<vmem>>, vector<256x128xbf16>
    tpu.vector_store %arg4[%c0_5, %c0_6], %6 {strides = array<i32>} : memref<256x128xbf16, #tpu.memory_space<vmem>>, vector<256x128xbf16>,
    return
  }
  func.func @transform_0(%arg0: i32) -> (i32, i32) {
    %c0_i32 = arith.constant 0 : i32
    %c0_i32_0 = arith.constant 0 : i32
    return %arg0, %c0_i32 : i32, i32
  }
  func.func @transform_1(%arg0: i32) -> (i32, i32) {
    %c0_i32 = arith.constant 0 : i32
    %c0_i32_0 = arith.constant 0 : i32
    %c0_i32_1 = arith.constant 0 : i32
    return %c0_i32, %c0_i32_0 : i32, i32
  }
  func.func @transform_2(%arg0: i32) -> (i32, i32) {
    %c0_i32 = arith.constant 0 : i32
    %c0_i32_0 = arith.constant 0 : i32
    %c0_i32_1 = arith.constant 0 : i32
    return %c0_i32, %c0_i32_0 : i32, i32
  }
  func.func @transform_3(%arg0: i32) -> (i32, i32) {
    %c0_i32 = arith.constant 0 : i32
    %c0_i32_0 = arith.constant 0 : i32
    return %arg0, %c0_i32 : i32, i32
  }
}

module attributes {stable_mosaic.version = 11 : i64} {
  func.func @_sage_layer_kernel(%arg0: i32, %arg1: i32, %arg2: memref<2xi32, #tpu.memory_space<smem>>, %arg3: memref<2x1xi32, #tpu.memory_space<smem>>, %arg4: memref<128x128xbf16, #tpu.memory_space<vmem>>, %arg5: memref<128x256xbf16, #tpu.memory_space<vmem>>, %arg6: memref<256x128xbf16, #tpu.memory_space<vmem>>, %arg7: memref<128x1xf32, #tpu.memory_space<vmem>>, %arg8: memref<128x128xbf16, #tpu.memory_space<vmem>>, %arg9: memref<128x128xbf16, #tpu.memory_space<vmem>>, %arg10: memref<1x128xf32, #tpu.memory_space<vmem>>, %arg11: memref<128x128xbf16, #tpu.memory_space<vmem>>, %arg12: memref<128x128xf32, #tpu.memory_space<vmem>>, %arg13: memref<128x128xf32, #tpu.memory_space<vmem>>) attributes {dimension_semantics = [#tpu.dimension_semantics<parallel>, #tpu.dimension_semantics<arbitrary>], iteration_bounds = array<i64: 2, 1>, scalar_prefetch = 2 : i64, scratch_operands = 2 : i64, tpu.core_type = #tpu.core_type<tc>, window_params = [{transform_indices = @transform_0, window_bounds = array<i64: 128, 128>}, {transform_indices = @transform_1, window_bounds = array<i64: 128, 256>}, {transform_indices = @transform_2, window_bounds = array<i64: 256, 128>}, {transform_indices = @transform_3, window_bounds = array<i64: 128, 1>}, {pipeline_mode = #tpu.pipeline_mode<synchronous>, transform_indices = @transform_4, window_bounds = array<i64: 128, 128>}, {pipeline_mode = #tpu.pipeline_mode<synchronous>, transform_indices = @transform_5, window_bounds = array<i64: 128, 128>}, {pipeline_mode = #tpu.pipeline_mode<synchronous>, transform_indices = @transform_6, window_bounds = array<i64: 1, 128>}, {transform_indices = @transform_7, window_bounds = array<i64: 128, 128>}]} {
    %c0_i32 = arith.constant 0 : i32
    %0 = arith.cmpi eq, %arg1, %c0_i32 : i32
    %1 = arith.extui %0 : i1 to i32
    %c0_i32_0 = arith.constant 0 : i32
    %2 = arith.cmpi ne, %1, %c0_i32_0 : i32
    scf.if %2 {
      %cst = arith.constant 0.000000e+00 : f32
      %11 = vector.broadcast %cst : f32 to vector<128x128xf32>
      %c0 = arith.constant 0 : index
      %c0_4 = arith.constant 0 : index
      %12 = vector.load %arg12[%c0, %c0_4] : memref<128x128xf32, #tpu.memory_space<vmem>>, vector<128x128xf32>
      tpu.vector_store %arg12[%c0, %c0_4], %11 {strides = array<i32>} : memref<128x128xf32, #tpu.memory_space<vmem>>, vector<128x128xf32>,
      %c0_5 = arith.constant 0 : index
      %c0_6 = arith.constant 0 : index
      %13 = vector.load %arg4[%c0_5, %c0_6] : memref<128x128xbf16, #tpu.memory_space<vmem>>, vector<128x128xbf16>
      %c0_7 = arith.constant 0 : index
      %c0_8 = arith.constant 0 : index
      %14 = vector.load %arg8[%c0_7, %c0_8] : memref<128x128xbf16, #tpu.memory_space<vmem>>, vector<128x128xbf16>
      %cst_9 = arith.constant dense<0.000000e+00> : vector<128x128xf32>
      %15 = tpu.matmul %13, %14, %cst_9 {dimension_numbers = #tpu.dot_dimension_numbers<[1], [0], [0], [1], [0, 0, 1, 1], [], []>} : vector<128x128xbf16>, vector<128x128xbf16>, vector<128x128xf32> -> vector<128x128xf32>
      %c0_10 = arith.constant 0 : index
      %c0_11 = arith.constant 0 : index
      %16 = vector.load %arg10[%c0_10, %c0_11] : memref<1x128xf32, #tpu.memory_space<vmem>>, vector<1x128xf32>
      %17 = vector.broadcast %16 : vector<1x128xf32> to vector<128x128xf32>
      %18 = arith.addf %15, %17 : vector<128x128xf32>
      %c0_12 = arith.constant 0 : index
      %c0_13 = arith.constant 0 : index
      %19 = vector.load %arg13[%c0_12, %c0_13] : memref<128x128xf32, #tpu.memory_space<vmem>>, vector<128x128xf32>
      tpu.vector_store %arg13[%c0_12, %c0_13], %18 {strides = array<i32>} : memref<128x128xf32, #tpu.memory_space<vmem>>, vector<128x128xf32>,
    } else {
    }
    %3 = arith.index_cast %arg0 : i32 to index
    %4 = memref.load %arg2[%3] : memref<2xi32, #tpu.memory_space<smem>>
    %5 = arith.cmpi slt, %arg1, %4 : i32
    %6 = arith.extui %5 : i1 to i32
    %c0_i32_1 = arith.constant 0 : i32
    %7 = arith.cmpi ne, %6, %c0_i32_1 : i32
    scf.if %7 {
      %c0 = arith.constant 0 : index
      %c0_4 = arith.constant 0 : index
      %11 = vector.load %arg12[%c0, %c0_4] : memref<128x128xf32, #tpu.memory_space<vmem>>, vector<128x128xf32>
      %c0_5 = arith.constant 0 : index
      %c0_6 = arith.constant 0 : index
      %12 = vector.load %arg5[%c0_5, %c0_6] : memref<128x256xbf16, #tpu.memory_space<vmem>>, vector<128x256xbf16>
      %c0_7 = arith.constant 0 : index
      %c0_8 = arith.constant 0 : index
      %13 = vector.load %arg6[%c0_7, %c0_8] : memref<256x128xbf16, #tpu.memory_space<vmem>>, vector<256x128xbf16>
      %cst = arith.constant dense<0.000000e+00> : vector<128x128xf32>
      %14 = tpu.matmul %12, %13, %cst {dimension_numbers = #tpu.dot_dimension_numbers<[1], [0], [0], [1], [0, 0, 1, 1], [], []>} : vector<128x256xbf16>, vector<256x128xbf16>, vector<128x128xf32> -> vector<128x128xf32>
      %15 = arith.addf %11, %14 : vector<128x128xf32>
      %c0_9 = arith.constant 0 : index
      %c0_10 = arith.constant 0 : index
      %16 = vector.load %arg12[%c0_9, %c0_10] : memref<128x128xf32, #tpu.memory_space<vmem>>, vector<128x128xf32>
      tpu.vector_store %arg12[%c0_9, %c0_10], %15 {strides = array<i32>} : memref<128x128xf32, #tpu.memory_space<vmem>>, vector<128x128xf32>,
    } else {
    }
    %c0_i32_2 = arith.constant 0 : i32
    %8 = arith.cmpi eq, %arg1, %c0_i32_2 : i32
    %9 = arith.extui %8 : i1 to i32
    %c0_i32_3 = arith.constant 0 : i32
    %10 = arith.cmpi ne, %9, %c0_i32_3 : i32
    scf.if %10 {
      %c0 = arith.constant 0 : index
      %c0_4 = arith.constant 0 : index
      %11 = vector.load %arg12[%c0, %c0_4] : memref<128x128xf32, #tpu.memory_space<vmem>>, vector<128x128xf32>
      %c0_5 = arith.constant 0 : index
      %c0_6 = arith.constant 0 : index
      %12 = vector.load %arg7[%c0_5, %c0_6] : memref<128x1xf32, #tpu.memory_space<vmem>>, vector<128x1xf32>
      %13 = vector.broadcast %12 : vector<128x1xf32> to vector<128x128xf32>
      %14 = arith.mulf %11, %13 : vector<128x128xf32>
      %15 = arith.truncf %14 : vector<128x128xf32> to vector<128x128xbf16>
      %c0_7 = arith.constant 0 : index
      %c0_8 = arith.constant 0 : index
      %16 = vector.load %arg13[%c0_7, %c0_8] : memref<128x128xf32, #tpu.memory_space<vmem>>, vector<128x128xf32>
      %c0_9 = arith.constant 0 : index
      %c0_10 = arith.constant 0 : index
      %17 = vector.load %arg9[%c0_9, %c0_10] : memref<128x128xbf16, #tpu.memory_space<vmem>>, vector<128x128xbf16>
      %cst = arith.constant dense<0.000000e+00> : vector<128x128xf32>
      %18 = tpu.matmul %15, %17, %cst {dimension_numbers = #tpu.dot_dimension_numbers<[1], [0], [0], [1], [0, 0, 1, 1], [], []>} : vector<128x128xbf16>, vector<128x128xbf16>, vector<128x128xf32> -> vector<128x128xf32>
      %19 = arith.addf %16, %18 : vector<128x128xf32>
      %20 = arith.mulf %19, %19 : vector<128x128xf32>
      %cst_11 = arith.constant dense<0.000000e+00> : vector<128xf32>
      %21 = vector.multi_reduction <add>, %20, %cst_11 [1] : vector<128x128xf32> to vector<128xf32>
      %22 = vector.shape_cast %21 : vector<128xf32> to vector<128x1xf32>
      %cst_12 = arith.constant 1.000000e-24 : f32
      %23 = vector.broadcast %cst_12 : f32 to vector<128x1xf32>
      %24 = arith.maximumf %22, %23 : vector<128x1xf32>
      %25 = math.rsqrt %24 : vector<128x1xf32>
      %cst_13 = arith.constant 0.999994993 : f32
      %26 = vector.broadcast %cst_13 : f32 to vector<128x1xf32>
      %27 = arith.mulf %25, %26 : vector<128x1xf32>
      %cst_14 = arith.constant 0.000000e+00 : f32
      %28 = vector.broadcast %cst_14 : f32 to vector<128x128xf32>
      %29 = arith.maximumf %19, %28 : vector<128x128xf32>
      %30 = vector.broadcast %27 : vector<128x1xf32> to vector<128x128xf32>
      %31 = arith.mulf %29, %30 : vector<128x128xf32>
      %32 = arith.truncf %31 : vector<128x128xf32> to vector<128x128xbf16>
      %c0_15 = arith.constant 0 : index
      %c0_16 = arith.constant 0 : index
      %33 = vector.load %arg11[%c0_15, %c0_16] : memref<128x128xbf16, #tpu.memory_space<vmem>>, vector<128x128xbf16>
      tpu.vector_store %arg11[%c0_15, %c0_16], %32 {strides = array<i32>} : memref<128x128xbf16, #tpu.memory_space<vmem>>, vector<128x128xbf16>,
    } else {
    }
    return
  }
  func.func @transform_0(%arg0: i32, %arg1: i32, %arg2: memref<2xi32, #tpu.memory_space<smem>>, %arg3: memref<2x1xi32, #tpu.memory_space<smem>>) -> (i32, i32) {
    %c0_i32 = arith.constant 0 : i32
    %c0_i32_0 = arith.constant 0 : i32
    return %arg0, %c0_i32 : i32, i32
  }
  func.func @transform_1(%arg0: i32, %arg1: i32, %arg2: memref<2xi32, #tpu.memory_space<smem>>, %arg3: memref<2x1xi32, #tpu.memory_space<smem>>) -> (i32, i32) {
    %0 = arith.index_cast %arg0 : i32 to index
    %1 = arith.index_cast %arg1 : i32 to index
    %2 = memref.load %arg3[%0, %1] : memref<2x1xi32, #tpu.memory_space<smem>>
    %c0_i32 = arith.constant 0 : i32
    return %arg0, %2 : i32, i32
  }
  func.func @transform_2(%arg0: i32, %arg1: i32, %arg2: memref<2xi32, #tpu.memory_space<smem>>, %arg3: memref<2x1xi32, #tpu.memory_space<smem>>) -> (i32, i32) {
    %0 = arith.index_cast %arg0 : i32 to index
    %1 = arith.index_cast %arg1 : i32 to index
    %2 = memref.load %arg3[%0, %1] : memref<2x1xi32, #tpu.memory_space<smem>>
    %c0_i32 = arith.constant 0 : i32
    %c0_i32_0 = arith.constant 0 : i32
    return %2, %c0_i32 : i32, i32
  }
  func.func @transform_3(%arg0: i32, %arg1: i32, %arg2: memref<2xi32, #tpu.memory_space<smem>>, %arg3: memref<2x1xi32, #tpu.memory_space<smem>>) -> (i32, i32) {
    %c0_i32 = arith.constant 0 : i32
    %c0_i32_0 = arith.constant 0 : i32
    return %arg0, %c0_i32 : i32, i32
  }
  func.func @transform_4(%arg0: i32, %arg1: i32, %arg2: memref<2xi32, #tpu.memory_space<smem>>, %arg3: memref<2x1xi32, #tpu.memory_space<smem>>) -> (i32, i32) {
    %c0_i32 = arith.constant 0 : i32
    %c0_i32_0 = arith.constant 0 : i32
    %c0_i32_1 = arith.constant 0 : i32
    return %c0_i32, %c0_i32_0 : i32, i32
  }
  func.func @transform_5(%arg0: i32, %arg1: i32, %arg2: memref<2xi32, #tpu.memory_space<smem>>, %arg3: memref<2x1xi32, #tpu.memory_space<smem>>) -> (i32, i32) {
    %c0_i32 = arith.constant 0 : i32
    %c0_i32_0 = arith.constant 0 : i32
    %c0_i32_1 = arith.constant 0 : i32
    return %c0_i32, %c0_i32_0 : i32, i32
  }
  func.func @transform_6(%arg0: i32, %arg1: i32, %arg2: memref<2xi32, #tpu.memory_space<smem>>, %arg3: memref<2x1xi32, #tpu.memory_space<smem>>) -> (i32, i32) {
    %c0_i32 = arith.constant 0 : i32
    %c0_i32_0 = arith.constant 0 : i32
    %c0_i32_1 = arith.constant 0 : i32
    return %c0_i32, %c0_i32_0 : i32, i32
  }
  func.func @transform_7(%arg0: i32, %arg1: i32, %arg2: memref<2xi32, #tpu.memory_space<smem>>, %arg3: memref<2x1xi32, #tpu.memory_space<smem>>) -> (i32, i32) {
    %c0_i32 = arith.constant 0 : i32
    %c0_i32_0 = arith.constant 0 : i32
    return %arg0, %c0_i32 : i32, i32
  }
}

module attributes {stable_mosaic.version = 11 : i64} {
  func.func @_pool_readout_kernel(%arg0: i32, %arg1: memref<8x256xbf16, #tpu.memory_space<vmem>>, %arg2: memref<256x128xbf16, #tpu.memory_space<vmem>>, %arg3: memref<8x1xf32, #tpu.memory_space<vmem>>, %arg4: memref<128x128xbf16, #tpu.memory_space<vmem>>, %arg5: memref<1x128xf32, #tpu.memory_space<vmem>>, %arg6: memref<128x128xbf16, #tpu.memory_space<vmem>>, %arg7: memref<1x128xf32, #tpu.memory_space<vmem>>, %arg8: memref<128x128xbf16, #tpu.memory_space<vmem>>, %arg9: memref<1x128xf32, #tpu.memory_space<vmem>>, %arg10: memref<8x128xf32, #tpu.memory_space<vmem>>, %arg11: memref<8x128xf32, #tpu.memory_space<vmem>>) attributes {dimension_semantics = [#tpu.dimension_semantics<arbitrary>], iteration_bounds = array<i64: 1>, scalar_prefetch = 0 : i64, scratch_operands = 1 : i64, tpu.core_type = #tpu.core_type<tc>, window_params = [{transform_indices = @transform_0, window_bounds = array<i64: 8, 256>}, {transform_indices = @transform_1, window_bounds = array<i64: 256, 128>}, {pipeline_mode = #tpu.pipeline_mode<synchronous>, transform_indices = @transform_2, window_bounds = array<i64: 8, 1>}, {pipeline_mode = #tpu.pipeline_mode<synchronous>, transform_indices = @transform_3, window_bounds = array<i64: 128, 128>}, {pipeline_mode = #tpu.pipeline_mode<synchronous>, transform_indices = @transform_4, window_bounds = array<i64: 1, 128>}, {pipeline_mode = #tpu.pipeline_mode<synchronous>, transform_indices = @transform_5, window_bounds = array<i64: 128, 128>}, {pipeline_mode = #tpu.pipeline_mode<synchronous>, transform_indices = @transform_6, window_bounds = array<i64: 1, 128>}, {pipeline_mode = #tpu.pipeline_mode<synchronous>, transform_indices = @transform_7, window_bounds = array<i64: 128, 128>}, {pipeline_mode = #tpu.pipeline_mode<synchronous>, transform_indices = @transform_8, window_bounds = array<i64: 1, 128>}, {pipeline_mode = #tpu.pipeline_mode<synchronous>, transform_indices = @transform_9, window_bounds = array<i64: 8, 128>}]} {
    %c0_i32 = arith.constant 0 : i32
    %0 = arith.cmpi eq, %arg0, %c0_i32 : i32
    %1 = arith.extui %0 : i1 to i32
    %c0_i32_0 = arith.constant 0 : i32
    %2 = arith.cmpi ne, %1, %c0_i32_0 : i32
    scf.if %2 {
      %cst_10 = arith.constant 0.000000e+00 : f32
      %12 = vector.broadcast %cst_10 : f32 to vector<8x128xf32>
      %c0_11 = arith.constant 0 : index
      %c0_12 = arith.constant 0 : index
      %13 = vector.load %arg11[%c0_11, %c0_12] : memref<8x128xf32, #tpu.memory_space<vmem>>, vector<8x128xf32>
      tpu.vector_store %arg11[%c0_11, %c0_12], %12 {strides = array<i32>} : memref<8x128xf32, #tpu.memory_space<vmem>>, vector<8x128xf32>,
    } else {
    }
    %c0 = arith.constant 0 : index
    %c0_1 = arith.constant 0 : index
    %3 = vector.load %arg11[%c0, %c0_1] : memref<8x128xf32, #tpu.memory_space<vmem>>, vector<8x128xf32>
    %c0_2 = arith.constant 0 : index
    %c0_3 = arith.constant 0 : index
    %4 = vector.load %arg1[%c0_2, %c0_3] : memref<8x256xbf16, #tpu.memory_space<vmem>>, vector<8x256xbf16>
    %c0_4 = arith.constant 0 : index
    %c0_5 = arith.constant 0 : index
    %5 = vector.load %arg2[%c0_4, %c0_5] : memref<256x128xbf16, #tpu.memory_space<vmem>>, vector<256x128xbf16>
    %cst = arith.constant dense<0.000000e+00> : vector<8x128xf32>
    %6 = tpu.matmul %4, %5, %cst {dimension_numbers = #tpu.dot_dimension_numbers<[1], [0], [0], [1], [0, 0, 1, 1], [], []>} : vector<8x256xbf16>, vector<256x128xbf16>, vector<8x128xf32> -> vector<8x128xf32>
    %7 = arith.addf %3, %6 : vector<8x128xf32>
    %c0_6 = arith.constant 0 : index
    %c0_7 = arith.constant 0 : index
    %8 = vector.load %arg11[%c0_6, %c0_7] : memref<8x128xf32, #tpu.memory_space<vmem>>, vector<8x128xf32>
    tpu.vector_store %arg11[%c0_6, %c0_7], %7 {strides = array<i32>} : memref<8x128xf32, #tpu.memory_space<vmem>>, vector<8x128xf32>,
    %c0_i32_8 = arith.constant 0 : i32
    %9 = arith.cmpi eq, %arg0, %c0_i32_8 : i32
    %10 = arith.extui %9 : i1 to i32
    %c0_i32_9 = arith.constant 0 : i32
    %11 = arith.cmpi ne, %10, %c0_i32_9 : i32
    scf.if %11 {
      %c0_10 = arith.constant 0 : index
      %c0_11 = arith.constant 0 : index
      %12 = vector.load %arg11[%c0_10, %c0_11] : memref<8x128xf32, #tpu.memory_space<vmem>>, vector<8x128xf32>
      %c0_12 = arith.constant 0 : index
      %c0_13 = arith.constant 0 : index
      %13 = vector.load %arg3[%c0_12, %c0_13] : memref<8x1xf32, #tpu.memory_space<vmem>>, vector<8x1xf32>
      %14 = vector.broadcast %13 : vector<8x1xf32> to vector<8x128xf32>
      %15 = arith.mulf %12, %14 : vector<8x128xf32>
      %16 = arith.truncf %15 : vector<8x128xf32> to vector<8x128xbf16>
      %c0_14 = arith.constant 0 : index
      %c0_15 = arith.constant 0 : index
      %17 = vector.load %arg4[%c0_14, %c0_15] : memref<128x128xbf16, #tpu.memory_space<vmem>>, vector<128x128xbf16>
      %cst_16 = arith.constant dense<0.000000e+00> : vector<8x128xf32>
      %18 = tpu.matmul %16, %17, %cst_16 {dimension_numbers = #tpu.dot_dimension_numbers<[1], [0], [0], [1], [0, 0, 1, 1], [], []>} : vector<8x128xbf16>, vector<128x128xbf16>, vector<8x128xf32> -> vector<8x128xf32>
      %c0_17 = arith.constant 0 : index
      %c0_18 = arith.constant 0 : index
      %19 = vector.load %arg5[%c0_17, %c0_18] : memref<1x128xf32, #tpu.memory_space<vmem>>, vector<1x128xf32>
      %20 = vector.broadcast %19 : vector<1x128xf32> to vector<8x128xf32>
      %21 = arith.addf %18, %20 : vector<8x128xf32>
      %cst_19 = arith.constant 0.000000e+00 : f32
      %22 = vector.broadcast %cst_19 : f32 to vector<8x128xf32>
      %23 = arith.maximumf %21, %22 : vector<8x128xf32>
      %24 = arith.truncf %23 : vector<8x128xf32> to vector<8x128xbf16>
      %c0_20 = arith.constant 0 : index
      %c0_21 = arith.constant 0 : index
      %25 = vector.load %arg6[%c0_20, %c0_21] : memref<128x128xbf16, #tpu.memory_space<vmem>>, vector<128x128xbf16>
      %cst_22 = arith.constant dense<0.000000e+00> : vector<8x128xf32>
      %26 = tpu.matmul %24, %25, %cst_22 {dimension_numbers = #tpu.dot_dimension_numbers<[1], [0], [0], [1], [0, 0, 1, 1], [], []>} : vector<8x128xbf16>, vector<128x128xbf16>, vector<8x128xf32> -> vector<8x128xf32>
      %c0_23 = arith.constant 0 : index
      %c0_24 = arith.constant 0 : index
      %27 = vector.load %arg7[%c0_23, %c0_24] : memref<1x128xf32, #tpu.memory_space<vmem>>, vector<1x128xf32>
      %28 = vector.broadcast %27 : vector<1x128xf32> to vector<8x128xf32>
      %29 = arith.addf %26, %28 : vector<8x128xf32>
      %cst_25 = arith.constant 0.000000e+00 : f32
      %30 = vector.broadcast %cst_25 : f32 to vector<8x128xf32>
      %31 = arith.maximumf %29, %30 : vector<8x128xf32>
      %32 = arith.truncf %31 : vector<8x128xf32> to vector<8x128xbf16>
      %c0_26 = arith.constant 0 : index
      %c0_27 = arith.constant 0 : index
      %33 = vector.load %arg8[%c0_26, %c0_27] : memref<128x128xbf16, #tpu.memory_space<vmem>>, vector<128x128xbf16>
      %cst_28 = arith.constant dense<0.000000e+00> : vector<8x128xf32>
      %34 = tpu.matmul %32, %33, %cst_28 {dimension_numbers = #tpu.dot_dimension_numbers<[1], [0], [0], [1], [0, 0, 1, 1], [], []>} : vector<8x128xbf16>, vector<128x128xbf16>, vector<8x128xf32> -> vector<8x128xf32>
      %c0_29 = arith.constant 0 : index
      %c0_30 = arith.constant 0 : index
      %35 = vector.load %arg9[%c0_29, %c0_30] : memref<1x128xf32, #tpu.memory_space<vmem>>, vector<1x128xf32>
      %36 = vector.broadcast %35 : vector<1x128xf32> to vector<8x128xf32>
      %37 = arith.addf %34, %36 : vector<8x128xf32>
      %c0_31 = arith.constant 0 : index
      %c0_32 = arith.constant 0 : index
      %38 = vector.load %arg10[%c0_31, %c0_32] : memref<8x128xf32, #tpu.memory_space<vmem>>, vector<8x128xf32>
      tpu.vector_store %arg10[%c0_31, %c0_32], %37 {strides = array<i32>} : memref<8x128xf32, #tpu.memory_space<vmem>>, vector<8x128xf32>,
    } else {
    }
    return
  }
  func.func @transform_0(%arg0: i32) -> (i32, i32) {
    %c0_i32 = arith.constant 0 : i32
    %c0_i32_0 = arith.constant 0 : i32
    return %c0_i32, %arg0 : i32, i32
  }
  func.func @transform_1(%arg0: i32) -> (i32, i32) {
    %c0_i32 = arith.constant 0 : i32
    %c0_i32_0 = arith.constant 0 : i32
    return %arg0, %c0_i32 : i32, i32
  }
  func.func @transform_2(%arg0: i32) -> (i32, i32) {
    %c0_i32 = arith.constant 0 : i32
    %c0_i32_0 = arith.constant 0 : i32
    %c0_i32_1 = arith.constant 0 : i32
    return %c0_i32, %c0_i32_0 : i32, i32
  }
  func.func @transform_3(%arg0: i32) -> (i32, i32) {
    %c0_i32 = arith.constant 0 : i32
    %c0_i32_0 = arith.constant 0 : i32
    %c0_i32_1 = arith.constant 0 : i32
    return %c0_i32, %c0_i32_0 : i32, i32
  }
  func.func @transform_4(%arg0: i32) -> (i32, i32) {
    %c0_i32 = arith.constant 0 : i32
    %c0_i32_0 = arith.constant 0 : i32
    %c0_i32_1 = arith.constant 0 : i32
    return %c0_i32, %c0_i32_0 : i32, i32
  }
  func.func @transform_5(%arg0: i32) -> (i32, i32) {
    %c0_i32 = arith.constant 0 : i32
    %c0_i32_0 = arith.constant 0 : i32
    %c0_i32_1 = arith.constant 0 : i32
    return %c0_i32, %c0_i32_0 : i32, i32
  }
  func.func @transform_6(%arg0: i32) -> (i32, i32) {
    %c0_i32 = arith.constant 0 : i32
    %c0_i32_0 = arith.constant 0 : i32
    %c0_i32_1 = arith.constant 0 : i32
    return %c0_i32, %c0_i32_0 : i32, i32
  }
  func.func @transform_7(%arg0: i32) -> (i32, i32) {
    %c0_i32 = arith.constant 0 : i32
    %c0_i32_0 = arith.constant 0 : i32
    %c0_i32_1 = arith.constant 0 : i32
    return %c0_i32, %c0_i32_0 : i32, i32
  }
  func.func @transform_8(%arg0: i32) -> (i32, i32) {
    %c0_i32 = arith.constant 0 : i32
    %c0_i32_0 = arith.constant 0 : i32
    %c0_i32_1 = arith.constant 0 : i32
    return %c0_i32, %c0_i32_0 : i32, i32
  }
  func.func @transform_9(%arg0: i32) -> (i32, i32) {
    %c0_i32 = arith.constant 0 : i32
    %c0_i32_0 = arith.constant 0 : i32
    %c0_i32_1 = arith.constant 0 : i32
    return %c0_i32, %c0_i32_0 : i32, i32
  }
}

</mosaic_0001>

<llo_original>
// kernel: activation_graphsage_net_forward.7
$region0: #{activation_graphsage_net_forward.7}
  #allocation0 [shape = 'u32[]', space=smem, size = 0x4, offset = 0x4, fixed_abs, tag = 'smem constant byte address 0x4 - core index']
  #allocation1 [shape = 'u32[144,128]{1,0:T(1,128)}', space=vmem, size = 0x12000, scoped, tag = 'internal scratch']
  #allocation2 [shape = 'f32[8,128]{1,0:T(8,128)}', space=vmem, size = 0x1000, scoped, tag = 'scratch operand']
  %s0 = inlined_call_operand.vmem [shape: bf16[8,256], index: 0, kind: input, shape index: {}]
  %s1 = inlined_call_operand.vmem [shape: bf16[256,128], index: 1, kind: input, shape index: {}]
  %s2 = inlined_call_operand.vmem [shape: f32[8,1], index: 2, kind: input, shape index: {}]
  %s3 = inlined_call_operand.vmem [shape: bf16[128,128], index: 3, kind: input, shape index: {}]
  %s4 = inlined_call_operand.vmem [shape: f32[1,128], index: 4, kind: input, shape index: {}]
  %s5 = inlined_call_operand.vmem [shape: bf16[128,128], index: 5, kind: input, shape index: {}]
  %s6 = inlined_call_operand.vmem [shape: f32[1,128], index: 6, kind: input, shape index: {}]
  %s7 = inlined_call_operand.vmem [shape: bf16[128,128], index: 7, kind: input, shape index: {}]
  %s8 = inlined_call_operand.vmem [shape: f32[1,128], index: 8, kind: input, shape index: {}]
  %s9 = inlined_call_operand.vmem [shape: f32[8,128], index: 9, kind: output, shape index: {}]
  %s10 = sld [smem:[#allocation0]]
  $region54: #{activation_graphsage_net_forward.7} parent=0
    _
  %s12 = ssub.s32 1, %s10
  %s13 = scalar_select 0, %s12, %s10
  // Predicated region
  $region2: #{activation_graphsage_net_forward.7} parent=0 // pred_check
    _
  $region3: #{activation_graphsage_net_forward.7} parent=0 // pred_check_branch
    %15 = sbr.rel (0) target = $region5
  $region4: #{activation_graphsage_net_forward.7} parent=0 // pred_region
    _
  $region5: #{activation_graphsage_net_forward.7} parent=0 // pred_fallthru
    _
  // Predicated region
  $region6: #{activation_graphsage_net_forward.7} parent=0 // pred_check
    _
  $region7: #{activation_graphsage_net_forward.7} parent=0 // pred_check_branch
    %17 = sbr.rel (0) target = $region9
  $region8: #{activation_graphsage_net_forward.7} parent=0 // pred_region
    _
  $region9: #{activation_graphsage_net_forward.7} parent=0 // pred_fallthru
    _
  // Predicated region
  $region10: #{activation_graphsage_net_forward.7} parent=0 // pred_check
    _
  $region11: #{activation_graphsage_net_forward.7} parent=0 // pred_check_branch
    %19 = sbr.rel (0) target = $region13
  $region12: #{activation_graphsage_net_forward.7} parent=0 // pred_region
    _
  $region13: #{activation_graphsage_net_forward.7} parent=0 // pred_fallthru
    _
  // Predicated region
  $region14: #{activation_graphsage_net_forward.7} parent=0 // pred_check
    _
  $region15: #{activation_graphsage_net_forward.7} parent=0 // pred_check_branch
    %21 = sbr.rel (0) target = $region17
  $region16: #{activation_graphsage_net_forward.7} parent=0 // pred_region
    _
  $region17: #{activation_graphsage_net_forward.7} parent=0 // pred_fallthru
    _
  // Predicated region
  $region18: #{activation_graphsage_net_forward.7} parent=0 // pred_check
    _
  $region19: #{activation_graphsage_net_forward.7} parent=0 // pred_check_branch
    %23 = sbr.rel (0) target = $region21
  $region20: #{activation_graphsage_net_forward.7} parent=0 // pred_region
    _
  $region21: #{activation_graphsage_net_forward.7} parent=0 // pred_fallthru
    _
  // Predicated region
  $region22: #{activation_graphsage_net_forward.7} parent=0 // pred_check
    _
  $region23: #{activation_graphsage_net_forward.7} parent=0 // pred_check_branch
    %25 = sbr.rel (0) target = $region25
  $region24: #{activation_graphsage_net_forward.7} parent=0 // pred_region
    _
  $region25: #{activation_graphsage_net_forward.7} parent=0 // pred_fallthru
    _
  // Predicated region
  $region26: #{activation_graphsage_net_forward.7} parent=0 // pred_check
    _
  $region27: #{activation_graphsage_net_forward.7} parent=0 // pred_check_branch
    %27 = sbr.rel (0) target = $region29
  $region28: #{activation_graphsage_net_forward.7} parent=0 // pred_region
    _
  $region29: #{activation_graphsage_net_forward.7} parent=0 // pred_fallthru
    _
  // Predicated region
  $region30: #{activation_graphsage_net_forward.7} parent=0 // pred_check
    _
  $region31: #{activation_graphsage_net_forward.7} parent=0 // pred_check_branch
    %29 = sbr.rel (0) target = $region33
  $region32: #{activation_graphsage_net_forward.7} parent=0 // pred_region
    _
  $region33: #{activation_graphsage_net_forward.7} parent=0 // pred_fallthru
    _
  // Predicated region
  $region34: #{activation_graphsage_net_forward.7} parent=0 // pred_check
    _
  $region35: #{activation_graphsage_net_forward.7} parent=0 // pred_check_branch
    %31 = sbr.rel (0) target = $region37
  $region36: #{activation_graphsage_net_forward.7} parent=0 // pred_region
    _
  $region37: #{activation_graphsage_net_forward.7} parent=0 // pred_fallthru
    _
  %p33 = scmp.eq.s32.totalorder 0, 0
  // Predicated region
  $region38: #{activation_graphsage_net_forward.7} parent=0 // pred_check
    %p34 = pneg %p33
  $region39: #{activation_graphsage_net_forward.7} parent=0 // pred_check_branch
    %36 = sbr.rel (%p34) target = $region41
  $region40: #{activation_graphsage_net_forward.7} parent=0 // pred_region
    %37 = vst [vmem:[#allocation2] sm:$0xff] 0.0
  $region41: #{activation_graphsage_net_forward.7} parent=0 // pred_fallthru
    _
  %v38 = vld [vmem:[#allocation2] sm:$0xff]
  %v39 = vld [vmem:[%s0] sm:$0xff]
  %v40 = vld [vmem:[%s1] sm:$0xf]
  %v41 = vld [vmem:[%s1 + $0x4] sm:$0xf]
  %v42 = vld [vmem:[%s1 + $0x8] sm:$0xf]
  %v43 = vld [vmem:[%s1 + $0xc] sm:$0xf]
  %v44 = vld [vmem:[%s1 + $0x10] sm:$0xf]
  %v45 = vld [vmem:[%s1 + $0x14] sm:$0xf]
  %v46 = vld [vmem:[%s1 + $0x18] sm:$0xf]
  %v47 = vld [vmem:[%s1 + $0x1c] sm:$0xf]
  %v48 = vld [vmem:[%s1 + $0x20] sm:$0xf]
  %v49 = vld [vmem:[%s1 + $0x24] sm:$0xf]
  %v50 = vld [vmem:[%s1 + $0x28] sm:$0xf]
  %v51 = vld [vmem:[%s1 + $0x2c] sm:$0xf]
  %v52 = vld [vmem:[%s1 + $0x30] sm:$0xf]
  %v53 = vld [vmem:[%s1 + $0x34] sm:$0xf]
  %v54 = vld [vmem:[%s1 + $0x38] sm:$0xf]
  %v55 = vld [vmem:[%s1 + $0x3c] sm:$0xf]
  %v56 = vld [vmem:[%s1 + $0x40] sm:$0xf]
  %v57 = vld [vmem:[%s1 + $0x44] sm:$0xf]
  %v58 = vld [vmem:[%s1 + $0x48] sm:$0xf]
  %v59 = vld [vmem:[%s1 + $0x4c] sm:$0xf]
  %v60 = vld [vmem:[%s1 + $0x50] sm:$0xf]
  %v61 = vld [vmem:[%s1 + $0x54] sm:$0xf]
  %v62 = vld [vmem:[%s1 + $0x58] sm:$0xf]
  %v63 = vld [vmem:[%s1 + $0x5c] sm:$0xf]
  %v64 = vld [vmem:[%s1 + $0x60] sm:$0xf]
  %v65 = vld [vmem:[%s1 + $0x64] sm:$0xf]
  %v66 = vld [vmem:[%s1 + $0x68] sm:$0xf]
  %v67 = vld [vmem:[%s1 + $0x6c] sm:$0xf]
  %v68 = vld [vmem:[%s1 + $0x70] sm:$0xf]
  %v69 = vld [vmem:[%s1 + $0x74] sm:$0xf]
  %v70 = vld [vmem:[%s1 + $0x78] sm:$0xf]
  %v71 = vld [vmem:[%s1 + $0x7c] sm:$0xf]
  %v73 = vunpack.c.l.b16 %v39
  %v74 = vunpack.c.h.b16 %v39
  %v75 = vpack.c.b16 %v73, %v73
  %v76 = vpack.c.b16 %v74, %v74
  %v111 = vunpack.c.l.b16 %v40
  %v112 = vunpack.c.l.b16 %v41
  %v113 = vunpack.c.l.b16 %v42
  %v114 = vunpack.c.l.b16 %v43
  %v115 = vunpack.c.l.b16 %v44
  %v116 = vunpack.c.l.b16 %v45
  %v117 = vunpack.c.l.b16 %v46
  %v118 = vunpack.c.l.b16 %v47
  %v119 = vunpack.c.l.b16 %v48
  %v120 = vunpack.c.l.b16 %v49
  %v121 = vunpack.c.l.b16 %v50
  %v122 = vunpack.c.l.b16 %v51
  %v123 = vunpack.c.l.b16 %v52
  %v124 = vunpack.c.l.b16 %v53
  %v125 = vunpack.c.l.b16 %v54
  %v126 = vunpack.c.l.b16 %v55
  %v127 = vunpack.c.l.b16 %v56
  %v128 = vunpack.c.l.b16 %v57
  %v129 = vunpack.c.l.b16 %v58
  %v130 = vunpack.c.l.b16 %v59
  %v131 = vunpack.c.l.b16 %v60
  %v132 = vunpack.c.l.b16 %v61
  %v133 = vunpack.c.l.b16 %v62
  %v134 = vunpack.c.l.b16 %v63
  %v135 = vunpack.c.l.b16 %v64
  %v136 = vunpack.c.l.b16 %v65
  %v137 = vunpack.c.l.b16 %v66
  %v138 = vunpack.c.l.b16 %v67
  %v139 = vunpack.c.l.b16 %v68
  %v140 = vunpack.c.l.b16 %v69
  %v141 = vunpack.c.l.b16 %v70
  %v142 = vunpack.c.l.b16 %v71
  %v143 = vpack.c.b16 %v112, %v111
  %v144 = vpack.c.b16 %v114, %v113
  %v145 = vpack.c.b16 %v116, %v115
  %v146 = vpack.c.b16 %v118, %v117
  %v147 = vpack.c.b16 %v120, %v119
  %v148 = vpack.c.b16 %v122, %v121
  %v149 = vpack.c.b16 %v124, %v123
  %v150 = vpack.c.b16 %v126, %v125
  %v151 = vpack.c.b16 %v128, %v127
  %v152 = vpack.c.b16 %v130, %v129
  %v153 = vpack.c.b16 %v132, %v131
  %v154 = vpack.c.b16 %v134, %v133
  %v155 = vpack.c.b16 %v136, %v135
  %v156 = vpack.c.b16 %v138, %v137
  %v157 = vpack.c.b16 %v140, %v139
  %v158 = vpack.c.b16 %v142, %v141
  %175 = vmatprep.subr.bf16.mxu0 0
  %176 = vmatpush1.bf16.msra.mxu0 %v143
  %177 = vmatprep.subr.bf16.mxu0 0
  %178 = vmatpush1.bf16.msra.mxu0 %v144
  %179 = vmatprep.subr.bf16.mxu0 0
  %180 = vmatpush1.bf16.msra.mxu0 %v145
  %181 = vmatprep.subr.bf16.mxu0 0
  %182 = vmatpush1.bf16.msra.mxu0 %v146
  %183 = vmatprep.subr.bf16.mxu0 0
  %184 = vmatpush1.bf16.msra.mxu0 %v147
  %185 = vmatprep.subr.bf16.mxu0 0
  %186 = vmatpush1.bf16.msra.mxu0 %v148
  %187 = vmatprep.subr.bf16.mxu0 0
  %188 = vmatpush1.bf16.msra.mxu0 %v149
  %189 = vmatprep.subr.bf16.mxu0 0
  %190 = vmatpush1.bf16.msra.mxu0 %v150
  %191 = vmatprep.subr.bf16.mxu0 0
  %192 = vmatpush1.bf16.msra.mxu0 %v151
  %193 = vmatprep.subr.bf16.mxu0 0
  %194 = vmatpush1.bf16.msra.mxu0 %v152
  %195 = vmatprep.subr.bf16.mxu0 0
  %196 = vmatpush1.bf16.msra.mxu0 %v153
  %197 = vmatprep.subr.bf16.mxu0 0
  %198 = vmatpush1.bf16.msra.mxu0 %v154
  %199 = vmatprep.subr.bf16.mxu0 0
  %200 = vmatpush1.bf16.msra.mxu0 %v155
  %201 = vmatprep.subr.bf16.mxu0 0
  %202 = vmatpush1.bf16.msra.mxu0 %v156
  %203 = vmatprep.subr.bf16.mxu0 0
  %204 = vmatpush1.bf16.msra.mxu0 %v157
  %205 = vmatprep.subr.bf16.mxu0 0
  %206 = vmatpush1.bf16.msra.mxu0 %v158
  %207 = vmatprep.mubr.bf16.mxu0 %v76
  %208 = vmatmul.mubr.bf16.gmra.mrb[0].mxu0 %v75
  %v209 = vpop.f32.mrb[0].mxu0
  %v210 = vadd.f32 0.0, %v209
  %v211 = vpop.f32.mrb[0].mxu0
  %v212 = vpop.f32.mrb[0].mxu0
  %v213 = vpop.f32.mrb[0].mxu0
  %214 = vdwg.mxu0
  %v215 = vadd.f32 %v38, %v210
  %216 = vst [vmem:[#allocation2] sm:$0xff] %v215
  // Predicated region
  $region42: #{activation_graphsage_net_forward.7} parent=0 // pred_check
    %p217 = pneg %p33
  $region43: #{activation_graphsage_net_forward.7} parent=0 // pred_check_branch
    %219 = sbr.rel (%p217) target = $region45
  $region44: #{activation_graphsage_net_forward.7} parent=0 // pred_region
    %v220 = vld [vmem:[#allocation2] sm:$0xff]
    %v221 = vld [vmem:[%s2] sm:$0xff]
    %223 = vset.pattern.permute.xlu0 0
    %224 = vperm.xlu0 %223, %v221
    %v225 = vpop.permute.xlu0 %224
    %v227 = vmul.f32 %v220, %v225
    %v228 = vpack.c.bf16 %v227, %v227
    %v229 = vld [vmem:[%s3] sm:$0xf]
    %v230 = vld [vmem:[%s3 + $0x4] sm:$0xf]
    %v231 = vld [vmem:[%s3 + $0x8] sm:$0xf]
    %v232 = vld [vmem:[%s3 + $0xc] sm:$0xf]
    %v233 = vld [vmem:[%s3 + $0x10] sm:$0xf]
    %v234 = vld [vmem:[%s3 + $0x14] sm:$0xf]
    %v235 = vld [vmem:[%s3 + $0x18] sm:$0xf]
    %v236 = vld [vmem:[%s3 + $0x1c] sm:$0xf]
    %v237 = vld [vmem:[%s3 + $0x20] sm:$0xf]
    %v238 = vld [vmem:[%s3 + $0x24] sm:$0xf]
    %v239 = vld [vmem:[%s3 + $0x28] sm:$0xf]
    %v240 = vld [vmem:[%s3 + $0x2c] sm:$0xf]
    %v241 = vld [vmem:[%s3 + $0x30] sm:$0xf]
    %v242 = vld [vmem:[%s3 + $0x34] sm:$0xf]
    %v243 = vld [vmem:[%s3 + $0x38] sm:$0xf]
    %v244 = vld [vmem:[%s3 + $0x3c] sm:$0xf]
    %v245 = vld [vmem:[%s4] sm:$0x1]
    %v247 = vlaneseq
    %v248 = vshrl.u32 %v247, 7
    %v249 = vsub.s32 0, %v248
    %v250 = vrot.slane %v245, %v249
    %v268 = vunpack.c.l.b16 %v229
    %v269 = vunpack.c.l.b16 %v230
    %v270 = vunpack.c.l.b16 %v231
    %v271 = vunpack.c.l.b16 %v232
    %v272 = vunpack.c.l.b16 %v233
    %v273 = vunpack.c.l.b16 %v234
    %v274 = vunpack.c.l.b16 %v235
    %v275 = vunpack.c.l.b16 %v236
    %v276 = vunpack.c.l.b16 %v237
    %v277 = vunpack.c.l.b16 %v238
    %v278 = vunpack.c.l.b16 %v239
    %v279 = vunpack.c.l.b16 %v240
    %v280 = vunpack.c.l.b16 %v241
    %v281 = vunpack.c.l.b16 %v242
    %v282 = vunpack.c.l.b16 %v243
    %v283 = vunpack.c.l.b16 %v244
    %v284 = vpack.c.b16 %v269, %v268
    %v285 = vpack.c.b16 %v271, %v270
    %v286 = vpack.c.b16 %v273, %v272
    %v287 = vpack.c.b16 %v275, %v274
    %v288 = vpack.c.b16 %v277, %v276
    %v289 = vpack.c.b16 %v279, %v278
    %v290 = vpack.c.b16 %v281, %v280
    %v291 = vpack.c.b16 %v283, %v282
    %300 = vmatprep.subr.bf16.mxu0 0
    %301 = vmatpush1.bf16.msra.mxu0 %v284
    %302 = vmatprep.subr.bf16.mxu0 0
    %303 = vmatpush1.bf16.msra.mxu0 %v285
    %304 = vmatprep.subr.bf16.mxu0 0
    %305 = vmatpush1.bf16.msra.mxu0 %v286
    %306 = vmatprep.subr.bf16.mxu0 0
    %307 = vmatpush1.bf16.msra.mxu0 %v287
    %308 = vmatprep.subr.bf16.mxu0 0
    %309 = vmatpush1.bf16.msra.mxu0 %v288
    %310 = vmatprep.subr.bf16.mxu0 0
    %311 = vmatpush1.bf16.msra.mxu0 %v289
    %312 = vmatprep.subr.bf16.mxu0 0
    %313 = vmatpush1.bf16.msra.mxu0 %v290
    %314 = vmatprep.subr.bf16.mxu0 0
    %315 = vmatpush1.bf16.msra.mxu0 %v291
    %316 = vmatprep.subr.bf16.mxu0 0
    %317 = vmatpush1.bf16.msra.mxu0 0
    %318 = vmatprep.subr.bf16.mxu0 0
    %319 = vmatpush1.bf16.msra.mxu0 0
    %320 = vmatprep.subr.bf16.mxu0 0
    %321 = vmatpush1.bf16.msra.mxu0 0
    %322 = vmatprep.subr.bf16.mxu0 0
    %323 = vmatpush1.bf16.msra.mxu0 0
    %324 = vmatprep.subr.bf16.mxu0 0
    %325 = vmatpush1.bf16.msra.mxu0 0
    %326 = vmatprep.subr.bf16.mxu0 0
    %327 = vmatpush1.bf16.msra.mxu0 0
    %328 = vmatprep.subr.bf16.mxu0 0
    %329 = vmatpush1.bf16.msra.mxu0 0
    %330 = vmatprep.subr.bf16.mxu0 0
    %331 = vmatpush1.bf16.msra.mxu0 0
    %332 = vmatprep.mubr.bf16.mxu0 0
    %333 = vmatmul.mubr.bf16.gmra.mrb[0].mxu0 %v228
    %v334 = vpop.f32.mrb[0].mxu0
    %v335 = vadd.f32 %v250, %v334
    %v336 = vpop.f32.mrb[0].mxu0
    %v337 = vpop.f32.mrb[0].mxu0
    %v338 = vpop.f32.mrb[0].mxu0
    %339 = vdwg.mxu0
    %v340 = vmax.f32 %v335, 0.0
    %v341 = vpack.c.bf16 %v340, %v340
    %v342 = vld [vmem:[%s5] sm:$0xf]
    %v343 = vld [vmem:[%s5 + $0x4] sm:$0xf]
    %v344 = vld [vmem:[%s5 + $0x8] sm:$0xf]
    %v345 = vld [vmem:[%s5 + $0xc] sm:$0xf]
    %v346 = vld [vmem:[%s5 + $0x10] sm:$0xf]
    %v347 = vld [vmem:[%s5 + $0x14] sm:$0xf]
    %v348 = vld [vmem:[%s5 + $0x18] sm:$0xf]
    %v349 = vld [vmem:[%s5 + $0x1c] sm:$0xf]
    %v350 = vld [vmem:[%s5 + $0x20] sm:$0xf]
    %v351 = vld [vmem:[%s5 + $0x24] sm:$0xf]
    %v352 = vld [vmem:[%s5 + $0x28] sm:$0xf]
    %v353 = vld [vmem:[%s5 + $0x2c] sm:$0xf]
    %v354 = vld [vmem:[%s5 + $0x30] sm:$0xf]
    %v355 = vld [vmem:[%s5 + $0x34] sm:$0xf]
    %v356 = vld [vmem:[%s5 + $0x38] sm:$0xf]
    %v357 = vld [vmem:[%s5 + $0x3c] sm:$0xf]
    %v358 = vld [vmem:[%s6] sm:$0x1]
    %v360 = vlaneseq
    %v361 = vshrl.u32 %v360, 7
    %v362 = vsub.s32 0, %v361
    %v363 = vrot.slane %v358, %v362
    %v381 = vunpack.c.l.b16 %v342
    %v382 = vunpack.c.l.b16 %v343
    %v383 = vunpack.c.l.b16 %v344
    %v384 = vunpack.c.l.b16 %v345
    %v385 = vunpack.c.l.b16 %v346
    %v386 = vunpack.c.l.b16 %v347
    %v387 = vunpack.c.l.b16 %v348
    %v388 = vunpack.c.l.b16 %v349
    %v389 = vunpack.c.l.b16 %v350
    %v390 = vunpack.c.l.b16 %v351
    %v391 = vunpack.c.l.b16 %v352
    %v392 = vunpack.c.l.b16 %v353
    %v393 = vunpack.c.l.b16 %v354
    %v394 = vunpack.c.l.b16 %v355
    %v395 = vunpack.c.l.b16 %v356
    %v396 = vunpack.c.l.b16 %v357
    %v397 = vpack.c.b16 %v382, %v381
    %v398 = vpack.c.b16 %v384, %v383
    %v399 = vpack.c.b16 %v386, %v385
    %v400 = vpack.c.b16 %v388, %v387
    %v401 = vpack.c.b16 %v390, %v389
    %v402 = vpack.c.b16 %v392, %v391
    %v403 = vpack.c.b16 %v394, %v393
    %v404 = vpack.c.b16 %v396, %v395
    %413 = vmatprep.subr.bf16.mxu0 0
    %414 = vmatpush1.bf16.msra.mxu0 %v397
    %415 = vmatprep.subr.bf16.mxu0 0
    %416 = vmatpush1.bf16.msra.mxu0 %v398
    %417 = vmatprep.subr.bf16.mxu0 0
    %418 = vmatpush1.bf16.msra.mxu0 %v399
    %419 = vmatprep.subr.bf16.mxu0 0
    %420 = vmatpush1.bf16.msra.mxu0 %v400
    %421 = vmatprep.subr.bf16.mxu0 0
    %422 = vmatpush1.bf16.msra.mxu0 %v401
    %423 = vmatprep.subr.bf16.mxu0 0
    %424 = vmatpush1.bf16.msra.mxu0 %v402
    %425 = vmatprep.subr.bf16.mxu0 0
    %426 = vmatpush1.bf16.msra.mxu0 %v403
    %427 = vmatprep.subr.bf16.mxu0 0
    %428 = vmatpush1.bf16.msra.mxu0 %v404
    %429 = vmatprep.subr.bf16.mxu0 0
    %430 = vmatpush1.bf16.msra.mxu0 0
    %431 = vmatprep.subr.bf16.mxu0 0
    %432 = vmatpush1.bf16.msra.mxu0 0
    %433 = vmatprep.subr.bf16.mxu0 0
    %434 = vmatpush1.bf16.msra.mxu0 0
    %435 = vmatprep.subr.bf16.mxu0 0
    %436 = vmatpush1.bf16.msra.mxu0 0
    %437 = vmatprep.subr.bf16.mxu0 0
    %438 = vmatpush1.bf16.msra.mxu0 0
    %439 = vmatprep.subr.bf16.mxu0 0
    %440 = vmatpush1.bf16.msra.mxu0 0
    %441 = vmatprep.subr.bf16.mxu0 0
    %442 = vmatpush1.bf16.msra.mxu0 0
    %443 = vmatprep.subr.bf16.mxu0 0
    %444 = vmatpush1.bf16.msra.mxu0 0
    %445 = vmatprep.mubr.bf16.mxu0 0
    %446 = vmatmul.mubr.bf16.gmra.mrb[0].mxu0 %v341
    %v447 = vpop.f32.mrb[0].mxu0
    %v448 = vadd.f32 %v363, %v447
    %v449 = vpop.f32.mrb[0].mxu0
    %v450 = vpop.f32.mrb[0].mxu0
    %v451 = vpop.f32.mrb[0].mxu0
    %452 = vdwg.mxu0
    %v453 = vmax.f32 %v448, 0.0
    %v454 = vpack.c.bf16 %v453, %v453
    %v455 = vld [vmem:[%s7] sm:$0xf]
    %v456 = vld [vmem:[%s7 + $0x4] sm:$0xf]
    %v457 = vld [vmem:[%s7 + $0x8] sm:$0xf]
    %v458 = vld [vmem:[%s7 + $0xc] sm:$0xf]
    %v459 = vld [vmem:[%s7 + $0x10] sm:$0xf]
    %v460 = vld [vmem:[%s7 + $0x14] sm:$0xf]
    %v461 = vld [vmem:[%s7 + $0x18] sm:$0xf]
    %v462 = vld [vmem:[%s7 + $0x1c] sm:$0xf]
    %v463 = vld [vmem:[%s7 + $0x20] sm:$0xf]
    %v464 = vld [vmem:[%s7 + $0x24] sm:$0xf]
    %v465 = vld [vmem:[%s7 + $0x28] sm:$0xf]
    %v466 = vld [vmem:[%s7 + $0x2c] sm:$0xf]
    %v467 = vld [vmem:[%s7 + $0x30] sm:$0xf]
    %v468 = vld [vmem:[%s7 + $0x34] sm:$0xf]
    %v469 = vld [vmem:[%s7 + $0x38] sm:$0xf]
    %v470 = vld [vmem:[%s7 + $0x3c] sm:$0xf]
    %v471 = vld [vmem:[%s8] sm:$0x1]
    %v473 = vlaneseq
    %v474 = vshrl.u32 %v473, 7
    %v475 = vsub.s32 0, %v474
    %v476 = vrot.slane %v471, %v475
    %v494 = vunpack.c.l.b16 %v455
    %v495 = vunpack.c.l.b16 %v456
    %v496 = vunpack.c.l.b16 %v457
    %v497 = vunpack.c.l.b16 %v458
    %v498 = vunpack.c.l.b16 %v459
    %v499 = vunpack.c.l.b16 %v460
    %v500 = vunpack.c.l.b16 %v461
    %v501 = vunpack.c.l.b16 %v462
    %v502 = vunpack.c.l.b16 %v463
    %v503 = vunpack.c.l.b16 %v464
    %v504 = vunpack.c.l.b16 %v465
    %v505 = vunpack.c.l.b16 %v466
    %v506 = vunpack.c.l.b16 %v467
    %v507 = vunpack.c.l.b16 %v468
    %v508 = vunpack.c.l.b16 %v469
    %v509 = vunpack.c.l.b16 %v470
    %v510 = vpack.c.b16 %v495, %v494
    %v511 = vpack.c.b16 %v497, %v496
    %v512 = vpack.c.b16 %v499, %v498
    %v513 = vpack.c.b16 %v501, %v500
    %v514 = vpack.c.b16 %v503, %v502
    %v515 = vpack.c.b16 %v505, %v504
    %v516 = vpack.c.b16 %v507, %v506
    %v517 = vpack.c.b16 %v509, %v508
    %526 = vmatprep.subr.bf16.mxu0 0
    %527 = vmatpush1.bf16.msra.mxu0 %v510
    %528 = vmatprep.subr.bf16.mxu0 0
    %529 = vmatpush1.bf16.msra.mxu0 %v511
    %530 = vmatprep.subr.bf16.mxu0 0
    %531 = vmatpush1.bf16.msra.mxu0 %v512
    %532 = vmatprep.subr.bf16.mxu0 0
    %533 = vmatpush1.bf16.msra.mxu0 %v513
    %534 = vmatprep.subr.bf16.mxu0 0
    %535 = vmatpush1.bf16.msra.mxu0 %v514
    %536 = vmatprep.subr.bf16.mxu0 0
    %537 = vmatpush1.bf16.msra.mxu0 %v515
    %538 = vmatprep.subr.bf16.mxu0 0
    %539 = vmatpush1.bf16.msra.mxu0 %v516
    %540 = vmatprep.subr.bf16.mxu0 0
    %541 = vmatpush1.bf16.msra.mxu0 %v517
    %542 = vmatprep.subr.bf16.mxu0 0
    %543 = vmatpush1.bf16.msra.mxu0 0
    %544 = vmatprep.subr.bf16.mxu0 0
    %545 = vmatpush1.bf16.msra.mxu0 0
    %546 = vmatprep.subr.bf16.mxu0 0
    %547 = vmatpush1.bf16.msra.mxu0 0
    %548 = vmatprep.subr.bf16.mxu0 0
    %549 = vmatpush1.bf16.msra.mxu0 0
    %550 = vmatprep.subr.bf16.mxu0 0
    %551 = vmatpush1.bf16.msra.mxu0 0
    %552 = vmatprep.subr.bf16.mxu0 0
    %553 = vmatpush1.bf16.msra.mxu0 0
    %554 = vmatprep.subr.bf16.mxu0 0
    %555 = vmatpush1.bf16.msra.mxu0 0
    %556 = vmatprep.subr.bf16.mxu0 0
    %557 = vmatpush1.bf16.msra.mxu0 0
    %558 = vmatprep.mubr.bf16.mxu0 0
    %559 = vmatmul.mubr.bf16.gmra.mrb[0].mxu0 %v454
    %v560 = vpop.f32.mrb[0].mxu0
    %v561 = vadd.f32 %v476, %v560
    %v562 = vpop.f32.mrb[0].mxu0
    %v563 = vpop.f32.mrb[0].mxu0
    %v564 = vpop.f32.mrb[0].mxu0
    %565 = vdwg.mxu0
    %566 = vst [vmem:[%s9] sm:$0xff] %v561
  $region45: #{activation_graphsage_net_forward.7} parent=0 // pred_fallthru
    _
  // Predicated region
  $region46: #{activation_graphsage_net_forward.7} parent=0 // pred_check
    _
  $region47: #{activation_graphsage_net_forward.7} parent=0 // pred_check_branch
    %568 = sbr.rel (0) target = $region49
  $region48: #{activation_graphsage_net_forward.7} parent=0 // pred_region
    _
  $region49: #{activation_graphsage_net_forward.7} parent=0 // pred_fallthru
    _
  // Predicated region
  $region50: #{activation_graphsage_net_forward.7} parent=0 // pred_check
    _
  $region51: #{activation_graphsage_net_forward.7} parent=0 // pred_check_branch
    %570 = sbr.rel (0) target = $region53
  $region52: #{activation_graphsage_net_forward.7} parent=0 // pred_region
    _
  $region53: #{activation_graphsage_net_forward.7} parent=0 // pred_fallthru
    _

// kernel: activation_graphsage_net_forward.4
$region0: #{activation_graphsage_net_forward.4}
  #allocation0 [shape = 'u32[]', space=smem, size = 0x4, offset = 0x4, fixed_abs, tag = 'smem constant byte address 0x4 - core index']
  #allocation1 [shape = 'u32[144,128]{1,0:T(1,128)}', space=vmem, size = 0x12000, scoped, tag = 'internal scratch']
  %s0 = inlined_call_operand.vmem [shape: bf16[256,128], index: 0, kind: input, shape index: {}]
  %s1 = inlined_call_operand.vmem [shape: bf16[128,128], index: 1, kind: input, shape index: {}]
  %s2 = inlined_call_operand.vmem [shape: f32[1,128], index: 2, kind: input, shape index: {}]
  %s3 = inlined_call_operand.vmem [shape: bf16[256,128], index: 3, kind: output, shape index: {}]
  %s4 = sld [smem:[#allocation0]]
  $region22: #{activation_graphsage_net_forward.4} parent=0
    _
  %s6 = ssub.s32 1, %s4
  %s7 = scalar_select 0, %s6, %s4
  // Predicated region
  $region2: #{activation_graphsage_net_forward.4} parent=0 // pred_check
    _
  $region3: #{activation_graphsage_net_forward.4} parent=0 // pred_check_branch
    %9 = sbr.rel (0) target = $region5
  $region4: #{activation_graphsage_net_forward.4} parent=0 // pred_region
    _
  $region5: #{activation_graphsage_net_forward.4} parent=0 // pred_fallthru
    _
  // Predicated region
  $region6: #{activation_graphsage_net_forward.4} parent=0 // pred_check
    _
  $region7: #{activation_graphsage_net_forward.4} parent=0 // pred_check_branch
    %11 = sbr.rel (0) target = $region9
  $region8: #{activation_graphsage_net_forward.4} parent=0 // pred_region
    _
  $region9: #{activation_graphsage_net_forward.4} parent=0 // pred_fallthru
    _
  // Predicated region
  $region10: #{activation_graphsage_net_forward.4} parent=0 // pred_check
    _
  $region11: #{activation_graphsage_net_forward.4} parent=0 // pred_check_branch
    %13 = sbr.rel (0) target = $region13
  $region12: #{activation_graphsage_net_forward.4} parent=0 // pred_region
    _
  $region13: #{activation_graphsage_net_forward.4} parent=0 // pred_fallthru
    _
  %v15 = vld [vmem:[%s0] sm:$0xf]
  %v16 = vld [vmem:[%s0 + $0x4] sm:$0xf]
  %v17 = vld [vmem:[%s0 + $0x8] sm:$0xf]
  %v18 = vld [vmem:[%s0 + $0xc] sm:$0xf]
  %v19 = vld [vmem:[%s0 + $0x10] sm:$0xf]
  %v20 = vld [vmem:[%s0 + $0x14] sm:$0xf]
  %v21 = vld [vmem:[%s0 + $0x18] sm:$0xf]
  %v22 = vld [vmem:[%s0 + $0x1c] sm:$0xf]
  %v23 = vld [vmem:[%s0 + $0x20] sm:$0xf]
  %v24 = vld [vmem:[%s0 + $0x24] sm:$0xf]
  %v25 = vld [vmem:[%s0 + $0x28] sm:$0xf]
  %v26 = vld [vmem:[%s0 + $0x2c] sm:$0xf]
  %v27 = vld [vmem:[%s0 + $0x30] sm:$0xf]
  %v28 = vld [vmem:[%s0 + $0x34] sm:$0xf]
  %v29 = vld [vmem:[%s0 + $0x38] sm:$0xf]
  %v30 = vld [vmem:[%s0 + $0x3c] sm:$0xf]
  %v31 = vld [vmem:[%s0 + $0x40] sm:$0xf]
  %v32 = vld [vmem:[%s0 + $0x44] sm:$0xf]
  %v33 = vld [vmem:[%s0 + $0x48] sm:$0xf]
  %v34 = vld [vmem:[%s0 + $0x4c] sm:$0xf]
  %v35 = vld [vmem:[%s0 + $0x50] sm:$0xf]
  %v36 = vld [vmem:[%s0 + $0x54] sm:$0xf]
  %v37 = vld [vmem:[%s0 + $0x58] sm:$0xf]
  %v38 = vld [vmem:[%s0 + $0x5c] sm:$0xf]
  %v39 = vld [vmem:[%s0 + $0x60] sm:$0xf]
  %v40 = vld [vmem:[%s0 + $0x64] sm:$0xf]
  %v41 = vld [vmem:[%s0 + $0x68] sm:$0xf]
  %v42 = vld [vmem:[%s0 + $0x6c] sm:$0xf]
  %v43 = vld [vmem:[%s0 + $0x70] sm:$0xf]
  %v44 = vld [vmem:[%s0 + $0x74] sm:$0xf]
  %v45 = vld [vmem:[%s0 + $0x78] sm:$0xf]
  %v46 = vld [vmem:[%s0 + $0x7c] sm:$0xf]
  %v47 = vld [vmem:[%s1] sm:$0xf]
  %v48 = vld [vmem:[%s1 + $0x4] sm:$0xf]
  %v49 = vld [vmem:[%s1 + $0x8] sm:$0xf]
  %v50 = vld [vmem:[%s1 + $0xc] sm:$0xf]
  %v51 = vld [vmem:[%s1 + $0x10] sm:$0xf]
  %v52 = vld [vmem:[%s1 + $0x14] sm:$0xf]
  %v53 = vld [vmem:[%s1 + $0x18] sm:$0xf]
  %v54 = vld [vmem:[%s1 + $0x1c] sm:$0xf]
  %v55 = vld [vmem:[%s1 + $0x20] sm:$0xf]
  %v56 = vld [vmem:[%s1 + $0x24] sm:$0xf]
  %v57 = vld [vmem:[%s1 + $0x28] sm:$0xf]
  %v58 = vld [vmem:[%s1 + $0x2c] sm:$0xf]
  %v59 = vld [vmem:[%s1 + $0x30] sm:$0xf]
  %v60 = vld [vmem:[%s1 + $0x34] sm:$0xf]
  %v61 = vld [vmem:[%s1 + $0x38] sm:$0xf]
  %v62 = vld [vmem:[%s1 + $0x3c] sm:$0xf]
  %v63 = vld [vmem:[%s2] sm:$0x1]
  %v65 = vlaneseq
  %v66 = vshrl.u32 %v65, 7
  %v67 = vsub.s32 0, %v66
  %v68 = vrot.slane %v63, %v67
  %v102 = vunpack.c.l.b16 %v15
  %v103 = vunpack.c.l.b16 %v16
  %v104 = vunpack.c.l.b16 %v17
  %v105 = vunpack.c.l.b16 %v18
  %v106 = vunpack.c.l.b16 %v19
  %v107 = vunpack.c.l.b16 %v20
  %v108 = vunpack.c.l.b16 %v21
  %v109 = vunpack.c.l.b16 %v22
  %v110 = vunpack.c.l.b16 %v23
  %v111 = vunpack.c.l.b16 %v24
  %v112 = vunpack.c.l.b16 %v25
  %v113 = vunpack.c.l.b16 %v26
  %v114 = vunpack.c.l.b16 %v27
  %v115 = vunpack.c.l.b16 %v28
  %v116 = vunpack.c.l.b16 %v29
  %v117 = vunpack.c.l.b16 %v30
  %v118 = vunpack.c.l.b16 %v31
  %v119 = vunpack.c.l.b16 %v32
  %v120 = vunpack.c.l.b16 %v33
  %v121 = vunpack.c.l.b16 %v34
  %v122 = vunpack.c.l.b16 %v35
  %v123 = vunpack.c.l.b16 %v36
  %v124 = vunpack.c.l.b16 %v37
  %v125 = vunpack.c.l.b16 %v38
  %v126 = vunpack.c.l.b16 %v39
  %v127 = vunpack.c.l.b16 %v40
  %v128 = vunpack.c.l.b16 %v41
  %v129 = vunpack.c.l.b16 %v42
  %v130 = vunpack.c.l.b16 %v43
  %v131 = vunpack.c.l.b16 %v44
  %v132 = vunpack.c.l.b16 %v45
  %v133 = vunpack.c.l.b16 %v46
  %v134 = vpack.c.b16 %v103, %v102
  %v135 = vpack.c.b16 %v105, %v104
  %v136 = vpack.c.b16 %v107, %v106
  %v137 = vpack.c.b16 %v109, %v108
  %v138 = vpack.c.b16 %v111, %v110
  %v139 = vpack.c.b16 %v113, %v112
  %v140 = vpack.c.b16 %v115, %v114
  %v141 = vpack.c.b16 %v117, %v116
  %v142 = vpack.c.b16 %v119, %v118
  %v143 = vpack.c.b16 %v121, %v120
  %v144 = vpack.c.b16 %v123, %v122
  %v145 = vpack.c.b16 %v125, %v124
  %v146 = vpack.c.b16 %v127, %v126
  %v147 = vpack.c.b16 %v129, %v128
  %v148 = vpack.c.b16 %v131, %v130
  %v149 = vpack.c.b16 %v133, %v132
  %v182 = vunpack.c.l.b16 %v47
  %v183 = vunpack.c.l.b16 %v48
  %v184 = vunpack.c.l.b16 %v49
  %v185 = vunpack.c.l.b16 %v50
  %v186 = vunpack.c.l.b16 %v51
  %v187 = vunpack.c.l.b16 %v52
  %v188 = vunpack.c.l.b16 %v53
  %v189 = vunpack.c.l.b16 %v54
  %v190 = vunpack.c.l.b16 %v55
  %v191 = vunpack.c.l.b16 %v56
  %v192 = vunpack.c.l.b16 %v57
  %v193 = vunpack.c.l.b16 %v58
  %v194 = vunpack.c.l.b16 %v59
  %v195 = vunpack.c.l.b16 %v60
  %v196 = vunpack.c.l.b16 %v61
  %v197 = vunpack.c.l.b16 %v62
  %v198 = vpack.c.b16 %v183, %v182
  %v199 = vpack.c.b16 %v185, %v184
  %v200 = vpack.c.b16 %v187, %v186
  %v201 = vpack.c.b16 %v189, %v188
  %v202 = vpack.c.b16 %v191, %v190
  %v203 = vpack.c.b16 %v193, %v192
  %v204 = vpack.c.b16 %v195, %v194
  %v205 = vpack.c.b16 %v197, %v196
  %214 = vmatprep.subr.bf16.mxu0 0
  %215 = vmatpush1.bf16.msra.mxu0 %v198
  %216 = vmatprep.subr.bf16.mxu0 0
  %217 = vmatpush1.bf16.msra.mxu0 %v199
  %218 = vmatprep.subr.bf16.mxu0 0
  %219 = vmatpush1.bf16.msra.mxu0 %v200
  %220 = vmatprep.subr.bf16.mxu0 0
  %221 = vmatpush1.bf16.msra.mxu0 %v201
  %222 = vmatprep.subr.bf16.mxu0 0
  %223 = vmatpush1.bf16.msra.mxu0 %v202
  %224 = vmatprep.subr.bf16.mxu0 0
  %225 = vmatpush1.bf16.msra.mxu0 %v203
  %226 = vmatprep.subr.bf16.mxu0 0
  %227 = vmatpush1.bf16.msra.mxu0 %v204
  %228 = vmatprep.subr.bf16.mxu0 0
  %229 = vmatpush1.bf16.msra.mxu0 %v205
  %230 = vmatprep.subr.bf16.mxu0 0
  %231 = vmatpush1.bf16.msra.mxu0 0
  %232 = vmatprep.subr.bf16.mxu0 0
  %233 = vmatpush1.bf16.msra.mxu0 0
  %234 = vmatprep.subr.bf16.mxu0 0
  %235 = vmatpush1.bf16.msra.mxu0 0
  %236 = vmatprep.subr.bf16.mxu0 0
  %237 = vmatpush1.bf16.msra.mxu0 0
  %238 = vmatprep.subr.bf16.mxu0 0
  %239 = vmatpush1.bf16.msra.mxu0 0
  %240 = vmatprep.subr.bf16.mxu0 0
  %241 = vmatpush1.bf16.msra.mxu0 0
  %242 = vmatprep.subr.bf16.mxu0 0
  %243 = vmatpush1.bf16.msra.mxu0 0
  %244 = vmatprep.subr.bf16.mxu0 0
  %245 = vmatpush1.bf16.msra.mxu0 0
  %246 = vmatprep.mubr.bf16.mxu0 0
  %247 = vmatmul.mubr.bf16.gmra.mrb[0].mxu0 %v134
  %v248 = vpop.f32.mrb[0].mxu0
  %v249 = vadd.f32 %v68, %v248
  %v250 = vpop.f32.mrb[0].mxu0
  %v251 = vpop.f32.mrb[0].mxu0
  %v252 = vadd.f32 %v68, %v251
  %v253 = vpop.f32.mrb[0].mxu0
  %254 = vmatprep.mubr.bf16.mxu0 0
  %255 = vmatmul.mubr.bf16.gmra.mrb[0].mxu0 %v135
  %v256 = vpop.f32.mrb[0].mxu0
  %v257 = vadd.f32 %v68, %v256
  %v258 = vpop.f32.mrb[0].mxu0
  %v259 = vpop.f32.mrb[0].mxu0
  %v260 = vadd.f32 %v68, %v259
  %v261 = vpop.f32.mrb[0].mxu0
  %262 = vmatprep.mubr.bf16.mxu0 0
  %263 = vmatmul.mubr.bf16.gmra.mrb[0].mxu0 %v136
  %v264 = vpop.f32.mrb[0].mxu0
  %v265 = vadd.f32 %v68, %v264
  %v266 = vpop.f32.mrb[0].mxu0
  %v267 = vpop.f32.mrb[0].mxu0
  %v268 = vadd.f32 %v68, %v267
  %v269 = vpop.f32.mrb[0].mxu0
  %270 = vmatprep.mubr.bf16.mxu0 0
  %271 = vmatmul.mubr.bf16.gmra.mrb[0].mxu0 %v137
  %v272 = vpop.f32.mrb[0].mxu0
  %v273 = vadd.f32 %v68, %v272
  %v274 = vpop.f32.mrb[0].mxu0
  %v275 = vpop.f32.mrb[0].mxu0
  %v276 = vadd.f32 %v68, %v275
  %v277 = vpop.f32.mrb[0].mxu0
  %278 = vmatprep.mubr.bf16.mxu0 0
  %279 = vmatmul.mubr.bf16.gmra.mrb[0].mxu0 %v138
  %v280 = vpop.f32.mrb[0].mxu0
  %v281 = vadd.f32 %v68, %v280
  %v282 = vpop.f32.mrb[0].mxu0
  %v283 = vpop.f32.mrb[0].mxu0
  %v284 = vadd.f32 %v68, %v283
  %v285 = vpop.f32.mrb[0].mxu0
  %286 = vmatprep.mubr.bf16.mxu0 0
  %287 = vmatmul.mubr.bf16.gmra.mrb[0].mxu0 %v139
  %v288 = vpop.f32.mrb[0].mxu0
  %v289 = vadd.f32 %v68, %v288
  %v290 = vpop.f32.mrb[0].mxu0
  %v291 = vpop.f32.mrb[0].mxu0
  %v292 = vadd.f32 %v68, %v291
  %v293 = vpop.f32.mrb[0].mxu0
  %294 = vmatprep.mubr.bf16.mxu0 0
  %295 = vmatmul.mubr.bf16.gmra.mrb[0].mxu0 %v140
  %v296 = vpop.f32.mrb[0].mxu0
  %v297 = vadd.f32 %v68, %v296
  %v298 = vpop.f32.mrb[0].mxu0
  %v299 = vpop.f32.mrb[0].mxu0
  %v300 = vadd.f32 %v68, %v299
  %v301 = vpop.f32.mrb[0].mxu0
  %302 = vmatprep.mubr.bf16.mxu0 0
  %303 = vmatmul.mubr.bf16.gmra.mrb[0].mxu0 %v141
  %v304 = vpop.f32.mrb[0].mxu0
  %v305 = vadd.f32 %v68, %v304
  %v306 = vpop.f32.mrb[0].mxu0
  %v307 = vpop.f32.mrb[0].mxu0
  %v308 = vadd.f32 %v68, %v307
  %v309 = vpop.f32.mrb[0].mxu0
  %310 = vmatprep.mubr.bf16.mxu0 0
  %311 = vmatmul.mubr.bf16.gmra.mrb[0].mxu0 %v142
  %v312 = vpop.f32.mrb[0].mxu0
  %v313 = vadd.f32 %v68, %v312
  %v314 = vpop.f32.mrb[0].mxu0
  %v315 = vpop.f32.mrb[0].mxu0
  %v316 = vadd.f32 %v68, %v315
  %v317 = vpop.f32.mrb[0].mxu0
  %318 = vmatprep.mubr.bf16.mxu0 0
  %319 = vmatmul.mubr.bf16.gmra.mrb[0].mxu0 %v143
  %v320 = vpop.f32.mrb[0].mxu0
  %v321 = vadd.f32 %v68, %v320
  %v322 = vpop.f32.mrb[0].mxu0
  %v323 = vpop.f32.mrb[0].mxu0
  %v324 = vadd.f32 %v68, %v323
  %v325 = vpop.f32.mrb[0].mxu0
  %326 = vmatprep.mubr.bf16.mxu0 0
  %327 = vmatmul.mubr.bf16.gmra.mrb[0].mxu0 %v144
  %v328 = vpop.f32.mrb[0].mxu0
  %v329 = vadd.f32 %v68, %v328
  %v330 = vpop.f32.mrb[0].mxu0
  %v331 = vpop.f32.mrb[0].mxu0
  %v332 = vadd.f32 %v68, %v331
  %v333 = vpop.f32.mrb[0].mxu0
  %334 = vmatprep.mubr.bf16.mxu0 0
  %335 = vmatmul.mubr.bf16.gmra.mrb[0].mxu0 %v145
  %v336 = vpop.f32.mrb[0].mxu0
  %v337 = vadd.f32 %v68, %v336
  %v338 = vpop.f32.mrb[0].mxu0
  %v339 = vpop.f32.mrb[0].mxu0
  %v340 = vadd.f32 %v68, %v339
  %v341 = vpop.f32.mrb[0].mxu0
  %342 = vmatprep.mubr.bf16.mxu0 0
  %343 = vmatmul.mubr.bf16.gmra.mrb[0].mxu0 %v146
  %v344 = vpop.f32.mrb[0].mxu0
  %v345 = vadd.f32 %v68, %v344
  %v346 = vpop.f32.mrb[0].mxu0
  %v347 = vpop.f32.mrb[0].mxu0
  %v348 = vadd.f32 %v68, %v347
  %v349 = vpop.f32.mrb[0].mxu0
  %350 = vmatprep.mubr.bf16.mxu0 0
  %351 = vmatmul.mubr.bf16.gmra.mrb[0].mxu0 %v147
  %v352 = vpop.f32.mrb[0].mxu0
  %v353 = vadd.f32 %v68, %v352
  %v354 = vpop.f32.mrb[0].mxu0
  %v355 = vpop.f32.mrb[0].mxu0
  %v356 = vadd.f32 %v68, %v355
  %v357 = vpop.f32.mrb[0].mxu0
  %358 = vmatprep.mubr.bf16.mxu0 0
  %359 = vmatmul.mubr.bf16.gmra.mrb[0].mxu0 %v148
  %v360 = vpop.f32.mrb[0].mxu0
  %v361 = vadd.f32 %v68, %v360
  %v362 = vpop.f32.mrb[0].mxu0
  %v363 = vpop.f32.mrb[0].mxu0
  %v364 = vadd.f32 %v68, %v363
  %v365 = vpop.f32.mrb[0].mxu0
  %366 = vmatprep.mubr.bf16.mxu0 0
  %367 = vmatmul.mubr.bf16.gmra.mrb[0].mxu0 %v149
  %v368 = vpop.f32.mrb[0].mxu0
  %v369 = vadd.f32 %v68, %v368
  %v370 = vpop.f32.mrb[0].mxu0
  %v371 = vpop.f32.mrb[0].mxu0
  %v372 = vadd.f32 %v68, %v371
  %v373 = vpop.f32.mrb[0].mxu0
  %374 = vdwg.mxu0
  %v375 = vpack.c.bf16 %v252, %v249
  %v376 = vpack.c.bf16 %v260, %v257
  %v377 = vpack.c.bf16 %v268, %v265
  %v378 = vpack.c.bf16 %v276, %v273
  %v379 = vpack.c.bf16 %v284, %v281
  %v380 = vpack.c.bf16 %v292, %v289
  %v381 = vpack.c.bf16 %v300, %v297
  %v382 = vpack.c.bf16 %v308, %v305
  %v383 = vpack.c.bf16 %v316, %v313
  %v384 = vpack.c.bf16 %v324, %v321
  %v385 = vpack.c.bf16 %v332, %v329
  %v386 = vpack.c.bf16 %v340, %v337
  %v387 = vpack.c.bf16 %v348, %v345
  %v388 = vpack.c.bf16 %v356, %v353
  %v389 = vpack.c.bf16 %v364, %v361
  %v390 = vpack.c.bf16 %v372, %v369
  %v407 = vunpack.c.l.b16 %v375
  %v408 = vunpack.c.h.b16 %v375
  %v409 = vunpack.c.l.b16 %v376
  %v410 = vunpack.c.h.b16 %v376
  %v411 = vunpack.c.l.b16 %v377
  %v412 = vunpack.c.h.b16 %v377
  %v413 = vunpack.c.l.b16 %v378
  %v414 = vunpack.c.h.b16 %v378
  %v415 = vunpack.c.l.b16 %v379
  %v416 = vunpack.c.h.b16 %v379
  %v417 = vunpack.c.l.b16 %v380
  %v418 = vunpack.c.h.b16 %v380
  %v419 = vunpack.c.l.b16 %v381
  %v420 = vunpack.c.h.b16 %v381
  %v421 = vunpack.c.l.b16 %v382
  %v422 = vunpack.c.h.b16 %v382
  %v423 = vunpack.c.l.b16 %v383
  %v424 = vunpack.c.h.b16 %v383
  %v425 = vunpack.c.l.b16 %v384
  %v426 = vunpack.c.h.b16 %v384
  %v427 = vunpack.c.l.b16 %v385
  %v428 = vunpack.c.h.b16 %v385
  %v429 = vunpack.c.l.b16 %v386
  %v430 = vunpack.c.h.b16 %v386
  %v431 = vunpack.c.l.b16 %v387
  %v432 = vunpack.c.h.b16 %v387
  %v433 = vunpack.c.l.b16 %v388
  %v434 = vunpack.c.h.b16 %v388
  %v435 = vunpack.c.l.b16 %v389
  %v436 = vunpack.c.h.b16 %v389
  %v437 = vunpack.c.l.b16 %v390
  %v438 = vunpack.c.h.b16 %v390
  %v439 = vpack.c.b16 %v407, %v407
  %v440 = vpack.c.b16 %v408, %v408
  %v441 = vpack.c.b16 %v409, %v409
  %v442 = vpack.c.b16 %v410, %v410
  %v443 = vpack.c.b16 %v411, %v411
  %v444 = vpack.c.b16 %v412, %v412
  %v445 = vpack.c.b16 %v413, %v413
  %v446 = vpack.c.b16 %v414, %v414
  %v447 = vpack.c.b16 %v415, %v415
  %v448 = vpack.c.b16 %v416, %v416
  %v449 = vpack.c.b16 %v417, %v417
  %v450 = vpack.c.b16 %v418, %v418
  %v451 = vpack.c.b16 %v419, %v419
  %v452 = vpack.c.b16 %v420, %v420
  %v453 = vpack.c.b16 %v421, %v421
  %v454 = vpack.c.b16 %v422, %v422
  %v455 = vpack.c.b16 %v423, %v423
  %v456 = vpack.c.b16 %v424, %v424
  %v457 = vpack.c.b16 %v425, %v425
  %v458 = vpack.c.b16 %v426, %v426
  %v459 = vpack.c.b16 %v427, %v427
  %v460 = vpack.c.b16 %v428, %v428
  %v461 = vpack.c.b16 %v429, %v429
  %v462 = vpack.c.b16 %v430, %v430
  %v463 = vpack.c.b16 %v431, %v431
  %v464 = vpack.c.b16 %v432, %v432
  %v465 = vpack.c.b16 %v433, %v433
  %v466 = vpack.c.b16 %v434, %v434
  %v467 = vpack.c.b16 %v435, %v435
  %v468 = vpack.c.b16 %v436, %v436
  %v469 = vpack.c.b16 %v437, %v437
  %v470 = vpack.c.b16 %v438, %v438
  %503 = vst [vmem:[%s3] sm:$0xf] %v439
  %504 = vst [vmem:[%s3 + $0x4] sm:$0xf] %v440
  %505 = vst [vmem:[%s3 + $0x8] sm:$0xf] %v441
  %506 = vst [vmem:[%s3 + $0xc] sm:$0xf] %v442
  %507 = vst [vmem:[%s3 + $0x10] sm:$0xf] %v443
  %508 = vst [vmem:[%s3 + $0x14] sm:$0xf] %v444
  %509 = vst [vmem:[%s3 + $0x18] sm:$0xf] %v445
  %510 = vst [vmem:[%s3 + $0x1c] sm:$0xf] %v446
  %511 = vst [vmem:[%s3 + $0x20] sm:$0xf] %v447
  %512 = vst [vmem:[%s3 + $0x24] sm:$0xf] %v448
  %513 = vst [vmem:[%s3 + $0x28] sm:$0xf] %v449
  %514 = vst [vmem:[%s3 + $0x2c] sm:$0xf] %v450
  %515 = vst [vmem:[%s3 + $0x30] sm:$0xf] %v451
  %516 = vst [vmem:[%s3 + $0x34] sm:$0xf] %v452
  %517 = vst [vmem:[%s3 + $0x38] sm:$0xf] %v453
  %518 = vst [vmem:[%s3 + $0x3c] sm:$0xf] %v454
  %519 = vst [vmem:[%s3 + $0x40] sm:$0xf] %v455
  %520 = vst [vmem:[%s3 + $0x44] sm:$0xf] %v456
  %521 = vst [vmem:[%s3 + $0x48] sm:$0xf] %v457
  %522 = vst [vmem:[%s3 + $0x4c] sm:$0xf] %v458
  %523 = vst [vmem:[%s3 + $0x50] sm:$0xf] %v459
  %524 = vst [vmem:[%s3 + $0x54] sm:$0xf] %v460
  %525 = vst [vmem:[%s3 + $0x58] sm:$0xf] %v461
  %526 = vst [vmem:[%s3 + $0x5c] sm:$0xf] %v462
  %527 = vst [vmem:[%s3 + $0x60] sm:$0xf] %v463
  %528 = vst [vmem:[%s3 + $0x64] sm:$0xf] %v464
  %529 = vst [vmem:[%s3 + $0x68] sm:$0xf] %v465
  %530 = vst [vmem:[%s3 + $0x6c] sm:$0xf] %v466
  %531 = vst [vmem:[%s3 + $0x70] sm:$0xf] %v467
  %532 = vst [vmem:[%s3 + $0x74] sm:$0xf] %v468
  %533 = vst [vmem:[%s3 + $0x78] sm:$0xf] %v469
  %534 = vst [vmem:[%s3 + $0x7c] sm:$0xf] %v470
  // Predicated region
  $region14: #{activation_graphsage_net_forward.4} parent=0 // pred_check
    _
  $region15: #{activation_graphsage_net_forward.4} parent=0 // pred_check_branch
    %536 = sbr.rel (0) target = $region17
  $region16: #{activation_graphsage_net_forward.4} parent=0 // pred_region
    _
  $region17: #{activation_graphsage_net_forward.4} parent=0 // pred_fallthru
    _
  // Predicated region
  $region18: #{activation_graphsage_net_forward.4} parent=0 // pred_check
    _
  $region19: #{activation_graphsage_net_forward.4} parent=0 // pred_check_branch
    %538 = sbr.rel (0) target = $region21
  $region20: #{activation_graphsage_net_forward.4} parent=0 // pred_region
    _
  $region21: #{activation_graphsage_net_forward.4} parent=0 // pred_fallthru
    _

// kernel: activation_graphsage_net_forward.5
$region0: #{activation_graphsage_net_forward.5}
  #allocation0 [shape = 'u32[]', space=smem, size = 0x4, offset = 0x4, fixed_abs, tag = 'smem constant byte address 0x4 - core index']
  #allocation1 [shape = 'u32[144,128]{1,0:T(1,128)}', space=vmem, size = 0x12000, scoped, tag = 'internal scratch']
  #allocation2 [shape = 'f32[128,128]{1,0:T(8,128)}', space=vmem, size = 0x10000, scoped, tag = 'scratch operand']
  #allocation3 [shape = 'f32[128,128]{1,0:T(8,128)}', space=vmem, size = 0x10000, scoped, tag = 'scratch operand']
  #allocation4 [shape = 's32[1]{0}', space=sflag, size = 0x4, scoped, tag = 'scoped memory for activation_graphsage_net_forward.5']
  #allocation5 [shape = 'u8[512]{0}', space=smem, size = 0x200, scoped, tag = 'prefetched SMEM operand 0']
  #allocation6 [shape = 'u8[1024]{0}', space=smem, size = 0x400, scoped, tag = 'prefetched SMEM operand 1']
  %s0 = inlined_call_operand.vmem [shape: s32[2], index: 0, kind: input, shape index: {}]
  %s1 = inlined_call_operand.vmem [shape: s32[2,1], index: 1, kind: input, shape index: {}]
  %s2 = inlined_call_operand.vmem [shape: bf16[256,128], index: 2, kind: input, shape index: {}, may-alias: {2,4}]
  %s3 = inlined_call_operand.vmem [shape: bf16[256,256], index: 3, kind: input, shape index: {}]
  %s4 = inlined_call_operand.vmem [shape: bf16[256,128], index: 4, kind: input, shape index: {}, may-alias: {2,4}]
  %s5 = inlined_call_operand.vmem [shape: f32[256,1], index: 5, kind: input, shape index: {}]
  %s6 = inlined_call_operand.vmem [shape: bf16[128,128], index: 6, kind: input, shape index: {}]
  %s7 = inlined_call_operand.vmem [shape: bf16[128,128], index: 7, kind: input, shape index: {}]
  %s8 = inlined_call_operand.vmem [shape: f32[1,128], index: 8, kind: input, shape index: {}]
  %s9 = inlined_call_operand.vmem [shape: bf16[256,128], index: 9, kind: output, shape index: {}]
  %s10 = sld [smem:[#allocation0]]
  $region73: #{activation_graphsage_net_forward.5} parent=0
    _
  %s12 = ssub.s32 1, %s10
  %s13 = scalar_select 0, %s12, %s10
  %s14 = sshll.u32 %s0, 4
  %s15 = int_to_ptr.vmem [resolvable:$true] %s14
  %17 = dma.vmem_to_smem %s15, 16, [#allocation5], [#allocation4]
  %s18 = sshll.u32 %s1, 4
  %s19 = int_to_ptr.vmem [resolvable:$true] %s18
  %21 = dma.vmem_to_smem %s19, 32, [#allocation6], [#allocation4]
  %22 = dma.done [#allocation4], 48
  %23 = sfence
  loop: start=0, step=1, limit=4
  $region2: #{activation_graphsage_net_forward.5} parent=0 // loop_pre_header
    _
  $region3: #{activation_graphsage_net_forward.5} parent=0 // loop_header
    %s25 = sphi 0, %s29
    %p26 = scmp.ge.s32.totalorder %s25, 4
    %s32 = sphi 0, %s44
    %s33 = sphi 0, %s40
    %s34 = sphi 0, %s32
    %s35 = sphi 0, %s33
    %s36 = sphi 0, %s34
    %s37 = sphi 0, %s35
    %s47 = sphi 0, %s49
    %s50 = sphi 0, %s47
    %s51 = sphi 0, %s50
    %s67 = sphi 0, %s51
    %s91 = sphi 0, %s93
    %s94 = sphi 0, %s91
    %s95 = sphi 0, %s94
    %s111 = sphi 0, %s95
    %s133 = sphi 0, %s135
    %s136 = sphi 0, %s133
    %s137 = sphi 0, %s136
    %s153 = sphi 0, %s137
    %s159 = sphi 0, %s161
    %s162 = sphi 0, %s159
    %s163 = sphi 0, %s162
    %s179 = sphi 0, %s163
    %s183 = sphi 0, %s183
    %s185 = sphi 0, %s183
    %s186 = sphi 0, %s185
    %s200 = sphi 0, %s186
    %s204 = sphi 0, %s204
    %s206 = sphi 0, %s204
    %s207 = sphi 0, %s206
    %s221 = sphi 0, %s207
    %s225 = sphi 0, %s225
    %s227 = sphi 0, %s225
    %s228 = sphi 0, %s227
    %s242 = sphi 0, %s228
    %s248 = sphi 0, %s250
    %s251 = sphi 0, %s248
    %s252 = sphi 0, %s251
    %s268 = sphi 0, %s252
  $region4: #{activation_graphsage_net_forward.5} parent=0 // loop_header_branch
    %28 = sbr.rel (%p26) target = $region8
  $region5: #{activation_graphsage_net_forward.5} parent=0 // loop_body
    %s30 = ssub.s32 %s25, 1
    %s31 = ssub.s32 %s25, 2
    %s38 = sadd.s32 1, %s33
    %p39 = scmp.ge.s32.totalorder %s38, 1
    %s40 = scalar_select %p39, 0, %s38
    %s41 = sadd.s32 1, %s32
    %s42 = scalar_select %p39, %s41, %s32
    %p43 = scmp.ge.s32.totalorder %s42, 2
    %s44 = scalar_select %p43, 0, %s42
    %s45 = ssub.s32 %s32, %s44
    %p46 = scmp.eq.s32.totalorder %s45, 0
    %s48 = sadd.s32 %s47, 1
    %s49 = scalar_select %p46, %s47, %s48
    %p52 = pneg %p46
    %p53 = scmp.eq.s32.totalorder %s25, 1
    %p54 = por %p52, %p53
    %p55 = scmp.ne.s32.totalorder %s47, %s50
    %p56 = scmp.eq.s32.totalorder %s25, 0
    %p57 = por %p55, %p56
    %p58 = scmp.ne.s32.totalorder %s47, %s50
    %p59 = scmp.eq.s32.totalorder %s30, 1
    %p60 = por %p58, %p59
    %p61 = scmp.ne.s32.totalorder %s50, %s51
    %p62 = scmp.eq.s32.totalorder %s30, 0
    %p63 = por %p61, %p62
    %p64 = scmp.ne.s32.totalorder %s50, %s51
    %p65 = scmp.eq.s32.totalorder %s31, 1
    %p66 = por %p64, %p65
    %p68 = scmp.ne.s32.totalorder %s51, %s67
    %p69 = scmp.eq.s32.totalorder %s31, 0
    %p70 = por %p68, %p69
    %s71 = sshra.s32 %s33, 7
    %s72 = sand.u32 %s33, 127
    %s73 = sadd.s32 %s71, %s32
    %s74 = smul.u32 %s73, 128
    %s75 = sshra.s32 %s33, 7
    %s76 = sand.u32 %s33, 127
    %s77 = sadd.s32 %s74, %s76
    %s78 = sld [smem:[#allocation6 + %s77]]
    %s79 = sshra.s32 %s40, 7
    %s80 = sand.u32 %s40, 127
    %s81 = sadd.s32 %s79, %s44
    %s82 = smul.u32 %s81, 128
    %s83 = sshra.s32 %s40, 7
    %s84 = sand.u32 %s40, 127
    %s85 = sadd.s32 %s82, %s84
    %s86 = sld [smem:[#allocation6 + %s85]]
    %s87 = ssub.s32 %s32, %s44
    %s88 = ssub.s32 %s78, %s86
    %s89 = sor.u32 %s87, %s88
    %p90 = scmp.eq.s32.totalorder %s89, 0
    %s92 = sadd.s32 %s91, 1
    %s93 = scalar_select %p90, %s91, %s92
    %p96 = pneg %p90
    %p97 = scmp.eq.s32.totalorder %s25, 1
    %p98 = por %p96, %p97
    %p99 = scmp.ne.s32.totalorder %s91, %s94
    %p100 = scmp.eq.s32.totalorder %s25, 0
    %p101 = por %p99, %p100
    %p102 = scmp.ne.s32.totalorder %s91, %s94
    %p103 = scmp.eq.s32.totalorder %s30, 1
    %p104 = por %p102, %p103
    %p105 = scmp.ne.s32.totalorder %s94, %s95
    %p106 = scmp.eq.s32.totalorder %s30, 0
    %p107 = por %p105, %p106
    %p108 = scmp.ne.s32.totalorder %s94, %s95
    %p109 = scmp.eq.s32.totalorder %s31, 1
    %p110 = por %p108, %p109
    %p112 = scmp.ne.s32.totalorder %s95, %s111
    %p113 = scmp.eq.s32.totalorder %s31, 0
    %p114 = por %p112, %p113
    %s115 = sshra.s32 %s33, 7
    %s116 = sand.u32 %s33, 127
    %s117 = sadd.s32 %s115, %s32
    %s118 = smul.u32 %s117, 128
    %s119 = sshra.s32 %s33, 7
    %s120 = sand.u32 %s33, 127
    %s121 = sadd.s32 %s118, %s120
    %s122 = sld [smem:[#allocation6 + %s121]]
    %s123 = sshra.s32 %s40, 7
    %s124 = sand.u32 %s40, 127
    %s125 = sadd.s32 %s123, %s44
    %s126 = smul.u32 %s125, 128
    %s127 = sshra.s32 %s40, 7
    %s128 = sand.u32 %s40, 127
    %s129 = sadd.s32 %s126, %s128
    %s130 = sld [smem:[#allocation6 + %s129]]
    %s131 = ssub.s32 %s122, %s130
    %p132 = scmp.eq.s32.totalorder %s131, 0
    %s134 = sadd.s32 %s133, 1
    %s135 = scalar_select %p132, %s133, %s134
    %p138 = pneg %p132
    %p139 = scmp.eq.s32.totalorder %s25, 1
    %p140 = por %p138, %p139
    %p141 = scmp.ne.s32.totalorder %s133, %s136
    %p142 = scmp.eq.s32.totalorder %s25, 0
    %p143 = por %p141, %p142
    %p144 = scmp.ne.s32.totalorder %s133, %s136
    %p145 = scmp.eq.s32.totalorder %s30, 1
    %p146 = por %p144, %p145
    %p147 = scmp.ne.s32.totalorder %s136, %s137
    %p148 = scmp.eq.s32.totalorder %s30, 0
    %p149 = por %p147, %p148
    %p150 = scmp.ne.s32.totalorder %s136, %s137
    %p151 = scmp.eq.s32.totalorder %s31, 1
    %p152 = por %p150, %p151
    %p154 = scmp.ne.s32.totalorder %s137, %s153
    %p155 = scmp.eq.s32.totalorder %s31, 0
    %p156 = por %p154, %p155
    %s157 = ssub.s32 %s32, %s44
    %p158 = scmp.eq.s32.totalorder %s157, 0
    %s160 = sadd.s32 %s159, 1
    %s161 = scalar_select %p158, %s159, %s160
    %p164 = pneg %p158
    %p165 = scmp.eq.s32.totalorder %s25, 1
    %p166 = por %p164, %p165
    %p167 = scmp.ne.s32.totalorder %s159, %s162
    %p168 = scmp.eq.s32.totalorder %s25, 0
    %p169 = por %p167, %p168
    %p170 = scmp.ne.s32.totalorder %s159, %s162
    %p171 = scmp.eq.s32.totalorder %s30, 1
    %p172 = por %p170, %p171
    %p173 = scmp.ne.s32.totalorder %s162, %s163
    %p174 = scmp.eq.s32.totalorder %s30, 0
    %p175 = por %p173, %p174
    %p176 = scmp.ne.s32.totalorder %s162, %s163
    %p177 = scmp.eq.s32.totalorder %s31, 1
    %p178 = por %p176, %p177
    %p180 = scmp.ne.s32.totalorder %s163, %s179
    %p181 = scmp.eq.s32.totalorder %s31, 0
    %p182 = por %p180, %p181
    %s184 = sadd.s32 %s183, 1
    %p187 = scmp.eq.s32.totalorder %s25, 1
    %p188 = scmp.ne.s32.totalorder %s183, %s185
    %p189 = scmp.eq.s32.totalorder %s25, 0
    %p190 = por %p188, %p189
    %p191 = scmp.ne.s32.totalorder %s183, %s185
    %p192 = scmp.eq.s32.totalorder %s30, 1
    %p193 = por %p191, %p192
    %p194 = scmp.ne.s32.totalorder %s185, %s186
    %p195 = scmp.eq.s32.totalorder %s30, 0
    %p196 = por %p194, %p195
    %p197 = scmp.ne.s32.totalorder %s185, %s186
    %p198 = scmp.eq.s32.totalorder %s31, 1
    %p199 = por %p197, %p198
    %p201 = scmp.ne.s32.totalorder %s186, %s200
    %p202 = scmp.eq.s32.totalorder %s31, 0
    %p203 = por %p201, %p202
    %s205 = sadd.s32 %s204, 1
    %p208 = scmp.eq.s32.totalorder %s25, 1
    %p209 = scmp.ne.s32.totalorder %s204, %s206
    %p210 = scmp.eq.s32.totalorder %s25, 0
    %p211 = por %p209, %p210
    %p212 = scmp.ne.s32.totalorder %s204, %s206
    %p213 = scmp.eq.s32.totalorder %s30, 1
    %p214 = por %p212, %p213
    %p215 = scmp.ne.s32.totalorder %s206, %s207
    %p216 = scmp.eq.s32.totalorder %s30, 0
    %p217 = por %p215, %p216
    %p218 = scmp.ne.s32.totalorder %s206, %s207
    %p219 = scmp.eq.s32.totalorder %s31, 1
    %p220 = por %p218, %p219
    %p222 = scmp.ne.s32.totalorder %s207, %s221
    %p223 = scmp.eq.s32.totalorder %s31, 0
    %p224 = por %p222, %p223
    %s226 = sadd.s32 %s225, 1
    %p229 = scmp.eq.s32.totalorder %s25, 1
    %p230 = scmp.ne.s32.totalorder %s225, %s227
    %p231 = scmp.eq.s32.totalorder %s25, 0
    %p232 = por %p230, %p231
    %p233 = scmp.ne.s32.totalorder %s225, %s227
    %p234 = scmp.eq.s32.totalorder %s30, 1
    %p235 = por %p233, %p234
    %p236 = scmp.ne.s32.totalorder %s227, %s228
    %p237 = scmp.eq.s32.totalorder %s30, 0
    %p238 = por %p236, %p237
    %p239 = scmp.ne.s32.totalorder %s227, %s228
    %p240 = scmp.eq.s32.totalorder %s31, 1
    %p241 = por %p239, %p240
    %p243 = scmp.ne.s32.totalorder %s228, %s242
    %p244 = scmp.eq.s32.totalorder %s31, 0
    %p245 = por %p243, %p244
    %s246 = ssub.s32 %s32, %s44
    %p247 = scmp.eq.s32.totalorder %s246, 0
    %s249 = sadd.s32 %s248, 1
    %s250 = scalar_select %p247, %s248, %s249
    %p253 = pneg %p247
    %p254 = scmp.eq.s32.totalorder %s25, 1
    %p255 = por %p253, %p254
    %p256 = scmp.ne.s32.totalorder %s248, %s251
    %p257 = scmp.eq.s32.totalorder %s25, 0
    %p258 = por %p256, %p257
    %p259 = scmp.ne.s32.totalorder %s248, %s251
    %p260 = scmp.eq.s32.totalorder %s30, 1
    %p261 = por %p259, %p260
    %p262 = scmp.ne.s32.totalorder %s251, %s252
    %p263 = scmp.eq.s32.totalorder %s30, 0
    %p264 = por %p262, %p263
    %p265 = scmp.ne.s32.totalorder %s251, %s252
    %p266 = scmp.eq.s32.totalorder %s31, 1
    %p267 = por %p265, %p266
    %p269 = scmp.ne.s32.totalorder %s252, %s268
    %p270 = scmp.eq.s32.totalorder %s31, 0
    %p271 = por %p269, %p270
    %p272 = scmp.le.s32.totalorder 1, %s25
    %p273 = scmp.lt.s32.totalorder %s25, 3
    %p274 = pnand %p272, %p273
    %p275 = pneg %p274
    // Predicated region
    $region9: #{activation_graphsage_net_forward.5} parent=5 // pred_check
      _
    $region10: #{activation_graphsage_net_forward.5} parent=5 // pred_check_branch
      %277 = sbr.rel (%p274) target = $region12
    $region11: #{activation_graphsage_net_forward.5} parent=5 // pred_region
      %s278 = ssub.s32 %s25, 1
      // Predicated region
      $region13: #{activation_graphsage_net_forward.5} parent=11 // pred_check
        %p279 = pneg %p196
      $region14: #{activation_graphsage_net_forward.5} parent=11 // pred_check_branch
        %281 = sbr.rel (%p279) target = $region16
      $region15: #{activation_graphsage_net_forward.5} parent=11 // pred_region
        _
      $region16: #{activation_graphsage_net_forward.5} parent=11 // pred_fallthru
        _
      // Predicated region
      $region17: #{activation_graphsage_net_forward.5} parent=11 // pred_check
        %p282 = pneg %p217
      $region18: #{activation_graphsage_net_forward.5} parent=11 // pred_check_branch
        %284 = sbr.rel (%p282) target = $region20
      $region19: #{activation_graphsage_net_forward.5} parent=11 // pred_region
        _
      $region20: #{activation_graphsage_net_forward.5} parent=11 // pred_fallthru
        _
      // Predicated region
      $region21: #{activation_graphsage_net_forward.5} parent=11 // pred_check
        %p285 = pneg %p238
      $region22: #{activation_graphsage_net_forward.5} parent=11 // pred_check_branch
        %287 = sbr.rel (%p285) target = $region24
      $region23: #{activation_graphsage_net_forward.5} parent=11 // pred_region
        _
      $region24: #{activation_graphsage_net_forward.5} parent=11 // pred_fallthru
        _
    $region12: #{activation_graphsage_net_forward.5} parent=5 // pred_fallthru
      _
    %p288 = scmp.lt.s32.totalorder %s25, 2
    // Predicated region
    $region25: #{activation_graphsage_net_forward.5} parent=5 // pred_check
      %p289 = pneg %p288
    $region26: #{activation_graphsage_net_forward.5} parent=5 // pred_check_branch
      %291 = sbr.rel (%p289) target = $region28
    $region27: #{activation_graphsage_net_forward.5} parent=5 // pred_region
      // Predicated region
      $region29: #{activation_graphsage_net_forward.5} parent=27 // pred_check
        %p292 = pneg %p57
      $region30: #{activation_graphsage_net_forward.5} parent=27 // pred_check_branch
        %294 = sbr.rel (%p292) target = $region32
      $region31: #{activation_graphsage_net_forward.5} parent=27 // pred_region
        %s295 = smul.u32 16, %s32
        %p296 = scmp.lt.s32.totalorder %s295, 31
        %s297 = scalar_select %p296, %s295, 31
        %s298 = smul.addr %s297, 4
        %s299 = scalar_lea.vmem %s2, %s298
        %s300 = smul.u32 16, %s32
      $region32: #{activation_graphsage_net_forward.5} parent=27 // pred_fallthru
        _
      // Predicated region
      $region33: #{activation_graphsage_net_forward.5} parent=27 // pred_check
        %p301 = pneg %p101
      $region34: #{activation_graphsage_net_forward.5} parent=27 // pred_check_branch
        %303 = sbr.rel (%p301) target = $region36
      $region35: #{activation_graphsage_net_forward.5} parent=27 // pred_region
        %s304 = sshra.s32 %s33, 7
        %s305 = sand.u32 %s33, 127
        %s306 = sadd.s32 %s304, %s32
        %s307 = smul.u32 %s306, 128
        %s308 = sshra.s32 %s33, 7
        %s309 = sand.u32 %s33, 127
        %s310 = sadd.s32 %s307, %s309
        %s311 = sld [smem:[#allocation6 + %s310]]
        %s312 = smul.u32 16, %s32
        %s313 = smul.u32 2, %s311
        %p314 = scmp.lt.s32.totalorder %s312, 31
        %s315 = scalar_select %p314, %s312, 31
        %p316 = scmp.lt.s32.totalorder %s313, 1
        %s317 = scalar_select %p316, %s313, 1
        %s318 = smul.addr %s315, 2
        %s319 = sadd.s32 %s317, %s318
        %s320 = smul.addr %s319, 4
        %s321 = scalar_lea.vmem %s3, %s320
        %s322 = sshra.s32 %s33, 7
        %s323 = sand.u32 %s33, 127
        %s324 = sadd.s32 %s322, %s32
        %s325 = smul.u32 %s324, 128
        %s326 = sshra.s32 %s33, 7
        %s327 = sand.u32 %s33, 127
        %s328 = sadd.s32 %s325, %s327
        %s329 = sld [smem:[#allocation6 + %s328]]
        %s330 = smul.u32 16, %s32
        %s331 = smul.u32 2, %s329
      $region36: #{activation_graphsage_net_forward.5} parent=27 // pred_fallthru
        _
      // Predicated region
      $region37: #{activation_graphsage_net_forward.5} parent=27 // pred_check
        %p332 = pneg %p143
      $region38: #{activation_graphsage_net_forward.5} parent=27 // pred_check_branch
        %334 = sbr.rel (%p332) target = $region40
      $region39: #{activation_graphsage_net_forward.5} parent=27 // pred_region
        %s335 = sshra.s32 %s33, 7
        %s336 = sand.u32 %s33, 127
        %s337 = sadd.s32 %s335, %s32
        %s338 = smul.u32 %s337, 128
        %s339 = sshra.s32 %s33, 7
        %s340 = sand.u32 %s33, 127
        %s341 = sadd.s32 %s338, %s340
        %s342 = sld [smem:[#allocation6 + %s341]]
        %s343 = smul.u32 32, %s342
        %p344 = scmp.lt.s32.totalorder %s343, 31
        %s345 = scalar_select %p344, %s343, 31
        %s346 = smul.addr %s345, 4
        %s347 = scalar_lea.vmem %s4, %s346
        %s348 = sshra.s32 %s33, 7
        %s349 = sand.u32 %s33, 127
        %s350 = sadd.s32 %s348, %s32
        %s351 = smul.u32 %s350, 128
        %s352 = sshra.s32 %s33, 7
        %s353 = sand.u32 %s33, 127
        %s354 = sadd.s32 %s351, %s353
        %s355 = sld [smem:[#allocation6 + %s354]]
        %s356 = smul.u32 32, %s355
      $region40: #{activation_graphsage_net_forward.5} parent=27 // pred_fallthru
        _
      // Predicated region
      $region41: #{activation_graphsage_net_forward.5} parent=27 // pred_check
        %p357 = pneg %p169
      $region42: #{activation_graphsage_net_forward.5} parent=27 // pred_check_branch
        %359 = sbr.rel (%p357) target = $region44
      $region43: #{activation_graphsage_net_forward.5} parent=27 // pred_region
        %s360 = smul.u32 16, %s32
        %p361 = scmp.lt.s32.totalorder %s360, 31
        %s362 = scalar_select %p361, %s360, 31
        %s363 = smul.addr %s362, 8
        %s364 = scalar_lea.vmem %s5, %s363
        %s365 = smul.u32 16, %s32
      $region44: #{activation_graphsage_net_forward.5} parent=27 // pred_fallthru
        _
    $region28: #{activation_graphsage_net_forward.5} parent=5 // pred_fallthru
      _
    %p366 = scmp.le.s32.totalorder 1, %s25
    %p367 = scmp.lt.s32.totalorder %s25, 3
    %p368 = pnand %p366, %p367
    %p369 = pneg %p368
    // Predicated region
    $region45: #{activation_graphsage_net_forward.5} parent=5 // pred_check
      _
    $region46: #{activation_graphsage_net_forward.5} parent=5 // pred_check_branch
      %371 = sbr.rel (%p368) target = $region48
    $region47: #{activation_graphsage_net_forward.5} parent=5 // pred_region
      %s372 = ssub.s32 %s25, 1
      %s373 = smul.u32 16, %s34
      %p374 = scmp.lt.s32.totalorder %s373, 31
      %s375 = scalar_select %p374, %s373, 31
      %s376 = smul.addr %s375, 4
      %s377 = scalar_lea.vmem %s2, %s376
      %p378 = pneg %p63
      %p379 = pneg %p60
      %s380 = sshra.s32 %s35, 7
      %s381 = sand.u32 %s35, 127
      %s382 = sadd.s32 %s380, %s34
      %s383 = smul.u32 %s382, 128
      %s384 = sshra.s32 %s35, 7
      %s385 = sand.u32 %s35, 127
      %s386 = sadd.s32 %s383, %s385
      %s387 = sld [smem:[#allocation6 + %s386]]
      %s388 = smul.u32 16, %s34
      %s389 = smul.u32 2, %s387
      %p390 = scmp.lt.s32.totalorder %s388, 31
      %s391 = scalar_select %p390, %s388, 31
      %p392 = scmp.lt.s32.totalorder %s389, 1
      %s393 = scalar_select %p392, %s389, 1
      %s394 = smul.addr %s391, 2
      %s395 = sadd.s32 %s393, %s394
      %s396 = smul.addr %s395, 4
      %s397 = scalar_lea.vmem %s3, %s396
      %p398 = pneg %p107
      %p399 = pneg %p104
      %s400 = sshra.s32 %s35, 7
      %s401 = sand.u32 %s35, 127
      %s402 = sadd.s32 %s400, %s34
      %s403 = smul.u32 %s402, 128
      %s404 = sshra.s32 %s35, 7
      %s405 = sand.u32 %s35, 127
      %s406 = sadd.s32 %s403, %s405
      %s407 = sld [smem:[#allocation6 + %s406]]
      %s408 = smul.u32 32, %s407
      %p409 = scmp.lt.s32.totalorder %s408, 31
      %s410 = scalar_select %p409, %s408, 31
      %s411 = smul.addr %s410, 4
      %s412 = scalar_lea.vmem %s4, %s411
      %p413 = pneg %p149
      %p414 = pneg %p146
      %s415 = smul.u32 16, %s34
      %p416 = scmp.lt.s32.totalorder %s415, 31
      %s417 = scalar_select %p416, %s415, 31
      %s418 = smul.addr %s417, 8
      %s419 = scalar_lea.vmem %s5, %s418
      %p420 = pneg %p175
      %p421 = pneg %p172
      %p422 = pneg %p196
      %p423 = pneg %p193
      %p424 = pneg %p217
      %p425 = pneg %p214
      %p426 = pneg %p238
      %p427 = pneg %p235
      %p428 = pneg %p264
      %p429 = pneg %p261
      %s430 = smul.u32 16, %s34
      %p431 = scmp.lt.s32.totalorder %s430, 31
      %s432 = scalar_select %p431, %s430, 31
      %s433 = smul.addr %s432, 4
      %s434 = scalar_lea.vmem %s9, %s433
      %s435 = smul.u32 16, %s34
      %p436 = scmp.lt.s32.totalorder %s435, 31
      %s437 = scalar_select %p436, %s435, 31
      %s438 = smul.addr %s437, 4
      %s439 = scalar_lea.vmem %s2, %s438
      %s440 = smul.u32 16, %s34
      %s441 = sshra.s32 %s35, 7
      %s442 = sand.u32 %s35, 127
      %s443 = sadd.s32 %s441, %s34
      %s444 = smul.u32 %s443, 128
      %s445 = sshra.s32 %s35, 7
      %s446 = sand.u32 %s35, 127
      %s447 = sadd.s32 %s444, %s446
      %s448 = sld [smem:[#allocation6 + %s447]]
      %s449 = smul.u32 16, %s34
      %s450 = smul.u32 2, %s448
      %p451 = scmp.lt.s32.totalorder %s449, 31
      %s452 = scalar_select %p451, %s449, 31
      %p453 = scmp.lt.s32.totalorder %s450, 1
      %s454 = scalar_select %p453, %s450, 1
      %s455 = smul.addr %s452, 2
      %s456 = sadd.s32 %s454, %s455
      %s457 = smul.addr %s456, 4
      %s458 = scalar_lea.vmem %s3, %s457
      %s459 = sshra.s32 %s35, 7
      %s460 = sand.u32 %s35, 127
      %s461 = sadd.s32 %s459, %s34
      %s462 = smul.u32 %s461, 128
      %s463 = sshra.s32 %s35, 7
      %s464 = sand.u32 %s35, 127
      %s465 = sadd.s32 %s462, %s464
      %s466 = sld [smem:[#allocation6 + %s465]]
      %s467 = smul.u32 16, %s34
      %s468 = smul.u32 2, %s466
      %s469 = sshra.s32 %s35, 7
      %s470 = sand.u32 %s35, 127
      %s471 = sadd.s32 %s469, %s34
      %s472 = smul.u32 %s471, 128
      %s473 = sshra.s32 %s35, 7
      %s474 = sand.u32 %s35, 127
      %s475 = sadd.s32 %s472, %s474
      %s476 = sld [smem:[#allocation6 + %s475]]
      %s477 = smul.u32 32, %s476
      %p478 = scmp.lt.s32.totalorder %s477, 31
      %s479 = scalar_select %p478, %s477, 31
      %s480 = smul.addr %s479, 4
      %s481 = scalar_lea.vmem %s4, %s480
      %s482 = sshra.s32 %s35, 7
      %s483 = sand.u32 %s35, 127
      %s484 = sadd.s32 %s482, %s34
      %s485 = smul.u32 %s484, 128
      %s486 = sshra.s32 %s35, 7
      %s487 = sand.u32 %s35, 127
      %s488 = sadd.s32 %s485, %s487
      %s489 = sld [smem:[#allocation6 + %s488]]
      %s490 = smul.u32 32, %s489
      %s491 = smul.u32 16, %s34
      %p492 = scmp.lt.s32.totalorder %s491, 31
      %s493 = scalar_select %p492, %s491, 31
      %s494 = smul.addr %s493, 8
      %s495 = scalar_lea.vmem %s5, %s494
      %s496 = smul.u32 16, %s34
      %s497 = smul.u32 16, %s34
      %p498 = scmp.lt.s32.totalorder %s497, 31
      %s499 = scalar_select %p498, %s497, 31
      %s500 = smul.addr %s499, 4
      %s501 = scalar_lea.vmem %s9, %s500
      %s502 = smul.u32 16, %s34
      %p504 = scmp.eq.s32.totalorder %s35, 0
      // Predicated region
      $region49: #{activation_graphsage_net_forward.5} parent=47 // pred_check
        %p505 = pneg %p504
      $region50: #{activation_graphsage_net_forward.5} parent=47 // pred_check_branch
        %507 = sbr.rel (%p505) target = $region52
      $region51: #{activation_graphsage_net_forward.5} parent=47 // pred_region
        %508 = vst [vmem:[#allocation2] sm:$0xff] 0.0
        %509 = vst [vmem:[#allocation2 + $0x8] sm:$0xff] 0.0
        %510 = vst [vmem:[#allocation2 + $0x10] sm:$0xff] 0.0
        %511 = vst [vmem:[#allocation2 + $0x18] sm:$0xff] 0.0
        %512 = vst [vmem:[#allocation2 + $0x20] sm:$0xff] 0.0
        %513 = vst [vmem:[#allocation2 + $0x28] sm:$0xff] 0.0
        %514 = vst [vmem:[#allocation2 + $0x30] sm:$0xff] 0.0
        %515 = vst [vmem:[#allocation2 + $0x38] sm:$0xff] 0.0
        %516 = vst [vmem:[#allocation2 + $0x40] sm:$0xff] 0.0
        %517 = vst [vmem:[#allocation2 + $0x48] sm:$0xff] 0.0
        %518 = vst [vmem:[#allocation2 + $0x50] sm:$0xff] 0.0
        %519 = vst [vmem:[#allocation2 + $0x58] sm:$0xff] 0.0
        %520 = vst [vmem:[#allocation2 + $0x60] sm:$0xff] 0.0
        %521 = vst [vmem:[#allocation2 + $0x68] sm:$0xff] 0.0
        %522 = vst [vmem:[#allocation2 + $0x70] sm:$0xff] 0.0
        %523 = vst [vmem:[#allocation2 + $0x78] sm:$0xff] 0.0
        %v524 = vld [vmem:[%s439] sm:$0xf]
        %v525 = vld [vmem:[%s439 + $0x4] sm:$0xf]
        %v526 = vld [vmem:[%s439 + $0x8] sm:$0xf]
        %v527 = vld [vmem:[%s439 + $0xc] sm:$0xf]
        %v528 = vld [vmem:[%s439 + $0x10] sm:$0xf]
        %v529 = vld [vmem:[%s439 + $0x14] sm:$0xf]
        %v530 = vld [vmem:[%s439 + $0x18] sm:$0xf]
        %v531 = vld [vmem:[%s439 + $0x1c] sm:$0xf]
        %v532 = vld [vmem:[%s439 + $0x20] sm:$0xf]
        %v533 = vld [vmem:[%s439 + $0x24] sm:$0xf]
        %v534 = vld [vmem:[%s439 + $0x28] sm:$0xf]
        %v535 = vld [vmem:[%s439 + $0x2c] sm:$0xf]
        %v536 = vld [vmem:[%s439 + $0x30] sm:$0xf]
        %v537 = vld [vmem:[%s439 + $0x34] sm:$0xf]
        %v538 = vld [vmem:[%s439 + $0x38] sm:$0xf]
        %v539 = vld [vmem:[%s439 + $0x3c] sm:$0xf]
        %v540 = vld [vmem:[%s6] sm:$0xf]
        %v541 = vld [vmem:[%s6 + $0x4] sm:$0xf]
        %v542 = vld [vmem:[%s6 + $0x8] sm:$0xf]
        %v543 = vld [vmem:[%s6 + $0xc] sm:$0xf]
        %v544 = vld [vmem:[%s6 + $0x10] sm:$0xf]
        %v545 = vld [vmem:[%s6 + $0x14] sm:$0xf]
        %v546 = vld [vmem:[%s6 + $0x18] sm:$0xf]
        %v547 = vld [vmem:[%s6 + $0x1c] sm:$0xf]
        %v548 = vld [vmem:[%s6 + $0x20] sm:$0xf]
        %v549 = vld [vmem:[%s6 + $0x24] sm:$0xf]
        %v550 = vld [vmem:[%s6 + $0x28] sm:$0xf]
        %v551 = vld [vmem:[%s6 + $0x2c] sm:$0xf]
        %v552 = vld [vmem:[%s6 + $0x30] sm:$0xf]
        %v553 = vld [vmem:[%s6 + $0x34] sm:$0xf]
        %v554 = vld [vmem:[%s6 + $0x38] sm:$0xf]
        %v555 = vld [vmem:[%s6 + $0x3c] sm:$0xf]
        %v556 = vld [vmem:[%s8] sm:$0x1]
        %v558 = vlaneseq
        %v559 = vshrl.u32 %v558, 7
        %v560 = vsub.s32 0, %v559
        %v561 = vrot.slane %v556, %v560
        %v579 = vunpack.c.l.b16 %v524
        %v580 = vunpack.c.l.b16 %v525
        %v581 = vunpack.c.l.b16 %v526
        %v582 = vunpack.c.l.b16 %v527
        %v583 = vunpack.c.l.b16 %v528
        %v584 = vunpack.c.l.b16 %v529
        %v585 = vunpack.c.l.b16 %v530
        %v586 = vunpack.c.l.b16 %v531
        %v587 = vunpack.c.l.b16 %v532
        %v588 = vunpack.c.l.b16 %v533
        %v589 = vunpack.c.l.b16 %v534
        %v590 = vunpack.c.l.b16 %v535
        %v591 = vunpack.c.l.b16 %v536
        %v592 = vunpack.c.l.b16 %v537
        %v593 = vunpack.c.l.b16 %v538
        %v594 = vunpack.c.l.b16 %v539
        %v595 = vpack.c.b16 %v580, %v579
        %v596 = vpack.c.b16 %v582, %v581
        %v597 = vpack.c.b16 %v584, %v583
        %v598 = vpack.c.b16 %v586, %v585
        %v599 = vpack.c.b16 %v588, %v587
        %v600 = vpack.c.b16 %v590, %v589
        %v601 = vpack.c.b16 %v592, %v591
        %v602 = vpack.c.b16 %v594, %v593
        %v627 = vunpack.c.l.b16 %v540
        %v628 = vunpack.c.l.b16 %v541
        %v629 = vunpack.c.l.b16 %v542
        %v630 = vunpack.c.l.b16 %v543
        %v631 = vunpack.c.l.b16 %v544
        %v632 = vunpack.c.l.b16 %v545
        %v633 = vunpack.c.l.b16 %v546
        %v634 = vunpack.c.l.b16 %v547
        %v635 = vunpack.c.l.b16 %v548
        %v636 = vunpack.c.l.b16 %v549
        %v637 = vunpack.c.l.b16 %v550
        %v638 = vunpack.c.l.b16 %v551
        %v639 = vunpack.c.l.b16 %v552
        %v640 = vunpack.c.l.b16 %v553
        %v641 = vunpack.c.l.b16 %v554
        %v642 = vunpack.c.l.b16 %v555
        %v643 = vpack.c.b16 %v628, %v627
        %v644 = vpack.c.b16 %v630, %v629
        %v645 = vpack.c.b16 %v632, %v631
        %v646 = vpack.c.b16 %v634, %v633
        %v647 = vpack.c.b16 %v636, %v635
        %v648 = vpack.c.b16 %v638, %v637
        %v649 = vpack.c.b16 %v640, %v639
        %v650 = vpack.c.b16 %v642, %v641
        %659 = vmatprep.subr.bf16.mxu0 0
        %660 = vmatpush1.bf16.msra.mxu0 %v643
        %661 = vmatprep.subr.bf16.mxu0 0
        %662 = vmatpush1.bf16.msra.mxu0 %v644
        %663 = vmatprep.subr.bf16.mxu0 0
        %664 = vmatpush1.bf16.msra.mxu0 %v645
        %665 = vmatprep.subr.bf16.mxu0 0
        %666 = vmatpush1.bf16.msra.mxu0 %v646
        %667 = vmatprep.subr.bf16.mxu0 0
        %668 = vmatpush1.bf16.msra.mxu0 %v647
        %669 = vmatprep.subr.bf16.mxu0 0
        %670 = vmatpush1.bf16.msra.mxu0 %v648
        %671 = vmatprep.subr.bf16.mxu0 0
        %672 = vmatpush1.bf16.msra.mxu0 %v649
        %673 = vmatprep.subr.bf16.mxu0 0
        %674 = vmatpush1.bf16.msra.mxu0 %v650
        %675 = vmatprep.subr.bf16.mxu0 0
        %676 = vmatpush1.bf16.msra.mxu0 0
        %677 = vmatprep.subr.bf16.mxu0 0
        %678 = vmatpush1.bf16.msra.mxu0 0
        %679 = vmatprep.subr.bf16.mxu0 0
        %680 = vmatpush1.bf16.msra.mxu0 0
        %681 = vmatprep.subr.bf16.mxu0 0
        %682 = vmatpush1.bf16.msra.mxu0 0
        %683 = vmatprep.subr.bf16.mxu0 0
        %684 = vmatpush1.bf16.msra.mxu0 0
        %685 = vmatprep.subr.bf16.mxu0 0
        %686 = vmatpush1.bf16.msra.mxu0 0
        %687 = vmatprep.subr.bf16.mxu0 0
        %688 = vmatpush1.bf16.msra.mxu0 0
        %689 = vmatprep.subr.bf16.mxu0 0
        %690 = vmatpush1.bf16.msra.mxu0 0
        %691 = vmatprep.mubr.bf16.mxu0 0
        %692 = vmatmul.mubr.bf16.gmra.mrb[0].mxu0 %v595
        %v693 = vpop.f32.mrb[0].mxu0
        %v694 = vadd.f32 %v561, %v693
        %v695 = vpop.f32.mrb[0].mxu0
        %v696 = vpop.f32.mrb[0].mxu0
        %v697 = vadd.f32 %v561, %v696
        %v698 = vpop.f32.mrb[0].mxu0
        %699 = vmatprep.mubr.bf16.mxu0 0
        %700 = vmatmul.mubr.bf16.gmra.mrb[0].mxu0 %v596
        %v701 = vpop.f32.mrb[0].mxu0
        %v702 = vadd.f32 %v561, %v701
        %v703 = vpop.f32.mrb[0].mxu0
        %v704 = vpop.f32.mrb[0].mxu0
        %v705 = vadd.f32 %v561, %v704
        %v706 = vpop.f32.mrb[0].mxu0
        %707 = vmatprep.mubr.bf16.mxu0 0
        %708 = vmatmul.mubr.bf16.gmra.mrb[0].mxu0 %v597
        %v709 = vpop.f32.mrb[0].mxu0
        %v710 = vadd.f32 %v561, %v709
        %v711 = vpop.f32.mrb[0].mxu0
        %v712 = vpop.f32.mrb[0].mxu0
        %v713 = vadd.f32 %v561, %v712
        %v714 = vpop.f32.mrb[0].mxu0
        %715 = vmatprep.mubr.bf16.mxu0 0
        %716 = vmatmul.mubr.bf16.gmra.mrb[0].mxu0 %v598
        %v717 = vpop.f32.mrb[0].mxu0
        %v718 = vadd.f32 %v561, %v717
        %v719 = vpop.f32.mrb[0].mxu0
        %v720 = vpop.f32.mrb[0].mxu0
        %v721 = vadd.f32 %v561, %v720
        %v722 = vpop.f32.mrb[0].mxu0
        %723 = vmatprep.mubr.bf16.mxu0 0
        %724 = vmatmul.mubr.bf16.gmra.mrb[0].mxu0 %v599
        %v725 = vpop.f32.mrb[0].mxu0
        %v726 = vadd.f32 %v561, %v725
        %v727 = vpop.f32.mrb[0].mxu0
        %v728 = vpop.f32.mrb[0].mxu0
        %v729 = vadd.f32 %v561, %v728
        %v730 = vpop.f32.mrb[0].mxu0
        %731 = vmatprep.mubr.bf16.mxu0 0
        %732 = vmatmul.mubr.bf16.gmra.mrb[0].mxu0 %v600
        %v733 = vpop.f32.mrb[0].mxu0
        %v734 = vadd.f32 %v561, %v733
        %v735 = vpop.f32.mrb[0].mxu0
        %v736 = vpop.f32.mrb[0].mxu0
        %v737 = vadd.f32 %v561, %v736
        %v738 = vpop.f32.mrb[0].mxu0
        %739 = vmatprep.mubr.bf16.mxu0 0
        %740 = vmatmul.mubr.bf16.gmra.mrb[0].mxu0 %v601
        %v741 = vpop.f32.mrb[0].mxu0
        %v742 = vadd.f32 %v561, %v741
        %v743 = vpop.f32.mrb[0].mxu0
        %v744 = vpop.f32.mrb[0].mxu0
        %v745 = vadd.f32 %v561, %v744
        %v746 = vpop.f32.mrb[0].mxu0
        %747 = vmatprep.mubr.bf16.mxu0 0
        %748 = vmatmul.mubr.bf16.gmra.mrb[0].mxu0 %v602
        %v749 = vpop.f32.mrb[0].mxu0
        %v750 = vadd.f32 %v561, %v749
        %v751 = vpop.f32.mrb[0].mxu0
        %v752 = vpop.f32.mrb[0].mxu0
        %v753 = vadd.f32 %v561, %v752
        %v754 = vpop.f32.mrb[0].mxu0
        %755 = vdwg.mxu0
        %756 = vst [vmem:[#allocation3] sm:$0xff] %v694
        %757 = vst [vmem:[#allocation3 + $0x8] sm:$0xff] %v697
        %758 = vst [vmem:[#allocation3 + $0x10] sm:$0xff] %v702
        %759 = vst [vmem:[#allocation3 + $0x18] sm:$0xff] %v705
        %760 = vst [vmem:[#allocation3 + $0x20] sm:$0xff] %v710
        %761 = vst [vmem:[#allocation3 + $0x28] sm:$0xff] %v713
        %762 = vst [vmem:[#allocation3 + $0x30] sm:$0xff] %v718
        %763 = vst [vmem:[#allocation3 + $0x38] sm:$0xff] %v721
        %764 = vst [vmem:[#allocation3 + $0x40] sm:$0xff] %v726
        %765 = vst [vmem:[#allocation3 + $0x48] sm:$0xff] %v729
        %766 = vst [vmem:[#allocation3 + $0x50] sm:$0xff] %v734
        %767 = vst [vmem:[#allocation3 + $0x58] sm:$0xff] %v737
        %768 = vst [vmem:[#allocation3 + $0x60] sm:$0xff] %v742
        %769 = vst [vmem:[#allocation3 + $0x68] sm:$0xff] %v745
        %770 = vst [vmem:[#allocation3 + $0x70] sm:$0xff] %v750
        %771 = vst [vmem:[#allocation3 + $0x78] sm:$0xff] %v753
      $region52: #{activation_graphsage_net_forward.5} parent=47 // pred_fallthru
        _
      %s772 = sld [smem:[#allocation5 + %s34]]
      %p773 = scmp.lt.s32.totalorder %s35, %s772
      // Predicated region
      $region53: #{activation_graphsage_net_forward.5} parent=47 // pred_check
        %p774 = pneg %p773
      $region54: #{activation_graphsage_net_forward.5} parent=47 // pred_check_branch
        %776 = sbr.rel (%p774) target = $region56
      $region55: #{activation_graphsage_net_forward.5} parent=47 // pred_region
        %v777 = vld [vmem:[#allocation2] sm:$0xff]
        %v778 = vld [vmem:[#allocation2 + $0x8] sm:$0xff]
        %v779 = vld [vmem:[#allocation2 + $0x10] sm:$0xff]
        %v780 = vld [vmem:[#allocation2 + $0x18] sm:$0xff]
        %v781 = vld [vmem:[#allocation2 + $0x20] sm:$0xff]
        %v782 = vld [vmem:[#allocation2 + $0x28] sm:$0xff]
        %v783 = vld [vmem:[#allocation2 + $0x30] sm:$0xff]
        %v784 = vld [vmem:[#allocation2 + $0x38] sm:$0xff]
        %v785 = vld [vmem:[#allocation2 + $0x40] sm:$0xff]
        %v786 = vld [vmem:[#allocation2 + $0x48] sm:$0xff]
        %v787 = vld [vmem:[#allocation2 + $0x50] sm:$0xff]
        %v788 = vld [vmem:[#allocation2 + $0x58] sm:$0xff]
        %v789 = vld [vmem:[#allocation2 + $0x60] sm:$0xff]
        %v790 = vld [vmem:[#allocation2 + $0x68] sm:$0xff]
        %v791 = vld [vmem:[#allocation2 + $0x70] sm:$0xff]
        %v792 = vld [vmem:[#allocation2 + $0x78] sm:$0xff]
        %v793 = vld [vmem:[%s458] sm:$0xff]
        %v794 = vld [vmem:[%s458 + $0x8] sm:$0xff]
        %v795 = vld [vmem:[%s458 + $0x10] sm:$0xff]
        %v796 = vld [vmem:[%s458 + $0x18] sm:$0xff]
        %v797 = vld [vmem:[%s458 + $0x20] sm:$0xff]
        %v798 = vld [vmem:[%s458 + $0x28] sm:$0xff]
        %v799 = vld [vmem:[%s458 + $0x30] sm:$0xff]
        %v800 = vld [vmem:[%s458 + $0x38] sm:$0xff]
        %v801 = vld [vmem:[%s458 + $0x40] sm:$0xff]
        %v802 = vld [vmem:[%s458 + $0x48] sm:$0xff]
        %v803 = vld [vmem:[%s458 + $0x50] sm:$0xff]
        %v804 = vld [vmem:[%s458 + $0x58] sm:$0xff]
        %v805 = vld [vmem:[%s458 + $0x60] sm:$0xff]
        %v806 = vld [vmem:[%s458 + $0x68] sm:$0xff]
        %v807 = vld [vmem:[%s458 + $0x70] sm:$0xff]
        %v808 = vld [vmem:[%s458 + $0x78] sm:$0xff]
        %v809 = vld [vmem:[%s481] sm:$0xf]
        %v810 = vld [vmem:[%s481 + $0x4] sm:$0xf]
        %v811 = vld [vmem:[%s481 + $0x8] sm:$0xf]
        %v812 = vld [vmem:[%s481 + $0xc] sm:$0xf]
        %v813 = vld [vmem:[%s481 + $0x10] sm:$0xf]
        %v814 = vld [vmem:[%s481 + $0x14] sm:$0xf]
        %v815 = vld [vmem:[%s481 + $0x18] sm:$0xf]
        %v816 = vld [vmem:[%s481 + $0x1c] sm:$0xf]
        %v817 = vld [vmem:[%s481 + $0x20] sm:$0xf]
        %v818 = vld [vmem:[%s481 + $0x24] sm:$0xf]
        %v819 = vld [vmem:[%s481 + $0x28] sm:$0xf]
        %v820 = vld [vmem:[%s481 + $0x2c] sm:$0xf]
        %v821 = vld [vmem:[%s481 + $0x30] sm:$0xf]
        %v822 = vld [vmem:[%s481 + $0x34] sm:$0xf]
        %v823 = vld [vmem:[%s481 + $0x38] sm:$0xf]
        %v824 = vld [vmem:[%s481 + $0x3c] sm:$0xf]
        %v825 = vld [vmem:[%s481 + $0x40] sm:$0xf]
        %v826 = vld [vmem:[%s481 + $0x44] sm:$0xf]
        %v827 = vld [vmem:[%s481 + $0x48] sm:$0xf]
        %v828 = vld [vmem:[%s481 + $0x4c] sm:$0xf]
        %v829 = vld [vmem:[%s481 + $0x50] sm:$0xf]
        %v830 = vld [vmem:[%s481 + $0x54] sm:$0xf]
        %v831 = vld [vmem:[%s481 + $0x58] sm:$0xf]
        %v832 = vld [vmem:[%s481 + $0x5c] sm:$0xf]
        %v833 = vld [vmem:[%s481 + $0x60] sm:$0xf]
        %v834 = vld [vmem:[%s481 + $0x64] sm:$0xf]
        %v835 = vld [vmem:[%s481 + $0x68] sm:$0xf]
        %v836 = vld [vmem:[%s481 + $0x6c] sm:$0xf]
        %v837 = vld [vmem:[%s481 + $0x70] sm:$0xf]
        %v838 = vld [vmem:[%s481 + $0x74] sm:$0xf]
        %v839 = vld [vmem:[%s481 + $0x78] sm:$0xf]
        %v840 = vld [vmem:[%s481 + $0x7c] sm:$0xf]
        %v857 = vunpack.c.l.b16 %v793
        %v858 = vunpack.c.h.b16 %v793
        %v859 = vunpack.c.l.b16 %v794
        %v860 = vunpack.c.h.b16 %v794
        %v861 = vunpack.c.l.b16 %v795
        %v862 = vunpack.c.h.b16 %v795
        %v863 = vunpack.c.l.b16 %v796
        %v864 = vunpack.c.h.b16 %v796
        %v865 = vunpack.c.l.b16 %v797
        %v866 = vunpack.c.h.b16 %v797
        %v867 = vunpack.c.l.b16 %v798
        %v868 = vunpack.c.h.b16 %v798
        %v869 = vunpack.c.l.b16 %v799
        %v870 = vunpack.c.h.b16 %v799
        %v871 = vunpack.c.l.b16 %v800
        %v872 = vunpack.c.h.b16 %v800
        %v873 = vunpack.c.l.b16 %v801
        %v874 = vunpack.c.h.b16 %v801
        %v875 = vunpack.c.l.b16 %v802
        %v876 = vunpack.c.h.b16 %v802
        %v877 = vunpack.c.l.b16 %v803
        %v878 = vunpack.c.h.b16 %v803
        %v879 = vunpack.c.l.b16 %v804
        %v880 = vunpack.c.h.b16 %v804
        %v881 = vunpack.c.l.b16 %v805
        %v882 = vunpack.c.h.b16 %v805
        %v883 = vunpack.c.l.b16 %v806
        %v884 = vunpack.c.h.b16 %v806
        %v885 = vunpack.c.l.b16 %v807
        %v886 = vunpack.c.h.b16 %v807
        %v887 = vunpack.c.l.b16 %v808
        %v888 = vunpack.c.h.b16 %v808
        %v889 = vpack.c.b16 %v859, %v857
        %v890 = vpack.c.b16 %v860, %v858
        %v891 = vpack.c.b16 %v863, %v861
        %v892 = vpack.c.b16 %v864, %v862
        %v893 = vpack.c.b16 %v867, %v865
        %v894 = vpack.c.b16 %v868, %v866
        %v895 = vpack.c.b16 %v871, %v869
        %v896 = vpack.c.b16 %v872, %v870
        %v897 = vpack.c.b16 %v875, %v873
        %v898 = vpack.c.b16 %v876, %v874
        %v899 = vpack.c.b16 %v879, %v877
        %v900 = vpack.c.b16 %v880, %v878
        %v901 = vpack.c.b16 %v883, %v881
        %v902 = vpack.c.b16 %v884, %v882
        %v903 = vpack.c.b16 %v887, %v885
        %v904 = vpack.c.b16 %v888, %v886
        %v953 = vunpack.c.l.b16 %v809
        %v954 = vunpack.c.l.b16 %v810
        %v955 = vunpack.c.l.b16 %v811
        %v956 = vunpack.c.l.b16 %v812
        %v957 = vunpack.c.l.b16 %v813
        %v958 = vunpack.c.l.b16 %v814
        %v959 = vunpack.c.l.b16 %v815
        %v960 = vunpack.c.l.b16 %v816
        %v961 = vunpack.c.l.b16 %v817
        %v962 = vunpack.c.l.b16 %v818
        %v963 = vunpack.c.l.b16 %v819
        %v964 = vunpack.c.l.b16 %v820
        %v965 = vunpack.c.l.b16 %v821
        %v966 = vunpack.c.l.b16 %v822
        %v967 = vunpack.c.l.b16 %v823
        %v968 = vunpack.c.l.b16 %v824
        %v969 = vunpack.c.l.b16 %v825
        %v970 = vunpack.c.l.b16 %v826
        %v971 = vunpack.c.l.b16 %v827
        %v972 = vunpack.c.l.b16 %v828
        %v973 = vunpack.c.l.b16 %v829
        %v974 = vunpack.c.l.b16 %v830
        %v975 = vunpack.c.l.b16 %v831
        %v976 = vunpack.c.l.b16 %v832
        %v977 = vunpack.c.l.b16 %v833
        %v978 = vunpack.c.l.b16 %v834
        %v979 = vunpack.c.l.b16 %v835
        %v980 = vunpack.c.l.b16 %v836
        %v981 = vunpack.c.l.b16 %v837
        %v982 = vunpack.c.l.b16 %v838
        %v983 = vunpack.c.l.b16 %v839
        %v984 = vunpack.c.l.b16 %v840
        %v985 = vpack.c.b16 %v954, %v953
        %v986 = vpack.c.b16 %v956, %v955
        %v987 = vpack.c.b16 %v958, %v957
        %v988 = vpack.c.b16 %v960, %v959
        %v989 = vpack.c.b16 %v962, %v961
        %v990 = vpack.c.b16 %v964, %v963
        %v991 = vpack.c.b16 %v966, %v965
        %v992 = vpack.c.b16 %v968, %v967
        %v993 = vpack.c.b16 %v970, %v969
        %v994 = vpack.c.b16 %v972, %v971
        %v995 = vpack.c.b16 %v974, %v973
        %v996 = vpack.c.b16 %v976, %v975
        %v997 = vpack.c.b16 %v978, %v977
        %v998 = vpack.c.b16 %v980, %v979
        %v999 = vpack.c.b16 %v982, %v981
        %v1000 = vpack.c.b16 %v984, %v983
        %1017 = vmatprep.subr.bf16.mxu0 0
        %1018 = vmatpush1.bf16.msra.mxu0 %v985
        %1019 = vmatprep.subr.bf16.mxu0 0
        %1020 = vmatpush1.bf16.msra.mxu0 %v986
        %1021 = vmatprep.subr.bf16.mxu0 0
        %1022 = vmatpush1.bf16.msra.mxu0 %v987
        %1023 = vmatprep.subr.bf16.mxu0 0
        %1024 = vmatpush1.bf16.msra.mxu0 %v988
        %1025 = vmatprep.subr.bf16.mxu0 0
        %1026 = vmatpush1.bf16.msra.mxu0 %v989
        %1027 = vmatprep.subr.bf16.mxu0 0
        %1028 = vmatpush1.bf16.msra.mxu0 %v990
        %1029 = vmatprep.subr.bf16.mxu0 0
        %1030 = vmatpush1.bf16.msra.mxu0 %v991
        %1031 = vmatprep.subr.bf16.mxu0 0
        %1032 = vmatpush1.bf16.msra.mxu0 %v992
        %1033 = vmatprep.subr.bf16.mxu0 0
        %1034 = vmatpush1.bf16.msra.mxu0 %v993
        %1035 = vmatprep.subr.bf16.mxu0 0
        %1036 = vmatpush1.bf16.msra.mxu0 %v994
        %1037 = vmatprep.subr.bf16.mxu0 0
        %1038 = vmatpush1.bf16.msra.mxu0 %v995
        %1039 = vmatprep.subr.bf16.mxu0 0
        %1040 = vmatpush1.bf16.msra.mxu0 %v996
        %1041 = vmatprep.subr.bf16.mxu0 0
        %1042 = vmatpush1.bf16.msra.mxu0 %v997
        %1043 = vmatprep.subr.bf16.mxu0 0
        %1044 = vmatpush1.bf16.msra.mxu0 %v998
        %1045 = vmatprep.subr.bf16.mxu0 0
        %1046 = vmatpush1.bf16.msra.mxu0 %v999
        %1047 = vmatprep.subr.bf16.mxu0 0
        %1048 = vmatpush1.bf16.msra.mxu0 %v1000
        %1049 = vmatprep.mubr.bf16.mxu0 %v890
        %1050 = vmatmul.mubr.bf16.gmra.mrb[0].mxu0 %v889
        %v1051 = vpop.f32.mrb[0].mxu0
        %v1052 = vadd.f32 0.0, %v1051
        %v1053 = vpop.f32.mrb[0].mxu0
        %v1054 = vpop.f32.mrb[0].mxu0
        %v1055 = vadd.f32 0.0, %v1054
        %v1056 = vpop.f32.mrb[0].mxu0
        %1057 = vmatprep.mubr.bf16.mxu0 %v892
        %1058 = vmatmul.mubr.bf16.gmra.mrb[0].mxu0 %v891
        %v1059 = vpop.f32.mrb[0].mxu0
        %v1060 = vadd.f32 0.0, %v1059
        %v1061 = vpop.f32.mrb[0].mxu0
        %v1062 = vpop.f32.mrb[0].mxu0
        %v1063 = vadd.f32 0.0, %v1062
        %v1064 = vpop.f32.mrb[0].mxu0
        %1065 = vmatprep.mubr.bf16.mxu0 %v894
        %1066 = vmatmul.mubr.bf16.gmra.mrb[0].mxu0 %v893
        %v1067 = vpop.f32.mrb[0].mxu0
        %v1068 = vadd.f32 0.0, %v1067
        %v1069 = vpop.f32.mrb[0].mxu0
        %v1070 = vpop.f32.mrb[0].mxu0
        %v1071 = vadd.f32 0.0, %v1070
        %v1072 = vpop.f32.mrb[0].mxu0
        %1073 = vmatprep.mubr.bf16.mxu0 %v896
        %1074 = vmatmul.mubr.bf16.gmra.mrb[0].mxu0 %v895
        %v1075 = vpop.f32.mrb[0].mxu0
        %v1076 = vadd.f32 0.0, %v1075
        %v1077 = vpop.f32.mrb[0].mxu0
        %v1078 = vpop.f32.mrb[0].mxu0
        %v1079 = vadd.f32 0.0, %v1078
        %v1080 = vpop.f32.mrb[0].mxu0
        %1081 = vmatprep.mubr.bf16.mxu0 %v898
        %1082 = vmatmul.mubr.bf16.gmra.mrb[0].mxu0 %v897
        %v1083 = vpop.f32.mrb[0].mxu0
        %v1084 = vadd.f32 0.0, %v1083
        %v1085 = vpop.f32.mrb[0].mxu0
        %v1086 = vpop.f32.mrb[0].mxu0
        %v1087 = vadd.f32 0.0, %v1086
        %v1088 = vpop.f32.mrb[0].mxu0
        %1089 = vmatprep.mubr.bf16.mxu0 %v900
        %1090 = vmatmul.mubr.bf16.gmra.mrb[0].mxu0 %v899
        %v1091 = vpop.f32.mrb[0].mxu0
        %v1092 = vadd.f32 0.0, %v1091
        %v1093 = vpop.f32.mrb[0].mxu0
        %v1094 = vpop.f32.mrb[0].mxu0
        %v1095 = vadd.f32 0.0, %v1094
        %v1096 = vpop.f32.mrb[0].mxu0
        %1097 = vmatprep.mubr.bf16.mxu0 %v902
        %1098 = vmatmul.mubr.bf16.gmra.mrb[0].mxu0 %v901
        %v1099 = vpop.f32.mrb[0].mxu0
        %v1100 = vadd.f32 0.0, %v1099
        %v1101 = vpop.f32.mrb[0].mxu0
        %v1102 = vpop.f32.mrb[0].mxu0
        %v1103 = vadd.f32 0.0, %v1102
        %v1104 = vpop.f32.mrb[0].mxu0
        %1105 = vmatprep.mubr.bf16.mxu0 %v904
        %1106 = vmatmul.mubr.bf16.gmra.mrb[0].mxu0 %v903
        %v1107 = vpop.f32.mrb[0].mxu0
        %v1108 = vadd.f32 0.0, %v1107
        %v1109 = vpop.f32.mrb[0].mxu0
        %v1110 = vpop.f32.mrb[0].mxu0
        %v1111 = vadd.f32 0.0, %v1110
        %v1112 = vpop.f32.mrb[0].mxu0
        %1113 = vdwg.mxu0
        %v1114 = vadd.f32 %v777, %v1052
        %v1115 = vadd.f32 %v778, %v1055
        %v1116 = vadd.f32 %v779, %v1060
        %v1117 = vadd.f32 %v780, %v1063
        %v1118 = vadd.f32 %v781, %v1068
        %v1119 = vadd.f32 %v782, %v1071
        %v1120 = vadd.f32 %v783, %v1076
        %v1121 = vadd.f32 %v784, %v1079
        %v1122 = vadd.f32 %v785, %v1084
        %v1123 = vadd.f32 %v786, %v1087
        %v1124 = vadd.f32 %v787, %v1092
        %v1125 = vadd.f32 %v788, %v1095
        %v1126 = vadd.f32 %v789, %v1100
        %v1127 = vadd.f32 %v790, %v1103
        %v1128 = vadd.f32 %v791, %v1108
        %v1129 = vadd.f32 %v792, %v1111
        %1130 = vst [vmem:[#allocation2] sm:$0xff] %v1114
        %1131 = vst [vmem:[#allocation2 + $0x8] sm:$0xff] %v1115
        %1132 = vst [vmem:[#allocation2 + $0x10] sm:$0xff] %v1116
        %1133 = vst [vmem:[#allocation2 + $0x18] sm:$0xff] %v1117
        %1134 = vst [vmem:[#allocation2 + $0x20] sm:$0xff] %v1118
        %1135 = vst [vmem:[#allocation2 + $0x28] sm:$0xff] %v1119
        %1136 = vst [vmem:[#allocation2 + $0x30] sm:$0xff] %v1120
        %1137 = vst [vmem:[#allocation2 + $0x38] sm:$0xff] %v1121
        %1138 = vst [vmem:[#allocation2 + $0x40] sm:$0xff] %v1122
        %1139 = vst [vmem:[#allocation2 + $0x48] sm:$0xff] %v1123
        %1140 = vst [vmem:[#allocation2 + $0x50] sm:$0xff] %v1124
        %1141 = vst [vmem:[#allocation2 + $0x58] sm:$0xff] %v1125
        %1142 = vst [vmem:[#allocation2 + $0x60] sm:$0xff] %v1126
        %1143 = vst [vmem:[#allocation2 + $0x68] sm:$0xff] %v1127
        %1144 = vst [vmem:[#allocation2 + $0x70] sm:$0xff] %v1128
        %1145 = vst [vmem:[#allocation2 + $0x78] sm:$0xff] %v1129
      $region56: #{activation_graphsage_net_forward.5} parent=47 // pred_fallthru
        _
      // Predicated region
      $region57: #{activation_graphsage_net_forward.5} parent=47 // pred_check
        %p1146 = pneg %p504
      $region58: #{activation_graphsage_net_forward.5} parent=47 // pred_check_branch
        %1148 = sbr.rel (%p1146) target = $region60
      $region59: #{activation_graphsage_net_forward.5} parent=47 // pred_region
        %v1149 = vld [vmem:[#allocation2] sm:$0xff]
        %v1150 = vld [vmem:[#allocation2 + $0x8] sm:$0xff]
        %v1151 = vld [vmem:[#allocation2 + $0x10] sm:$0xff]
        %v1152 = vld [vmem:[#allocation2 + $0x18] sm:$0xff]
        %v1153 = vld [vmem:[#allocation2 + $0x20] sm:$0xff]
        %v1154 = vld [vmem:[#allocation2 + $0x28] sm:$0xff]
        %v1155 = vld [vmem:[#allocation2 + $0x30] sm:$0xff]
        %v1156 = vld [vmem:[#allocation2 + $0x38] sm:$0xff]
        %v1157 = vld [vmem:[#allocation2 + $0x40] sm:$0xff]
        %v1158 = vld [vmem:[#allocation2 + $0x48] sm:$0xff]
        %v1159 = vld [vmem:[#allocation2 + $0x50] sm:$0xff]
        %v1160 = vld [vmem:[#allocation2 + $0x58] sm:$0xff]
        %v1161 = vld [vmem:[#allocation2 + $0x60] sm:$0xff]
        %v1162 = vld [vmem:[#allocation2 + $0x68] sm:$0xff]
        %v1163 = vld [vmem:[#allocation2 + $0x70] sm:$0xff]
        %v1164 = vld [vmem:[#allocation2 + $0x78] sm:$0xff]
        %v1165 = vld [vmem:[%s495] sm:$0xff]
        %v1166 = vld [vmem:[%s495 + $0x8] sm:$0xff]
        %v1167 = vld [vmem:[%s495 + $0x10] sm:$0xff]
        %v1168 = vld [vmem:[%s495 + $0x18] sm:$0xff]
        %v1169 = vld [vmem:[%s495 + $0x20] sm:$0xff]
        %v1170 = vld [vmem:[%s495 + $0x28] sm:$0xff]
        %v1171 = vld [vmem:[%s495 + $0x30] sm:$0xff]
        %v1172 = vld [vmem:[%s495 + $0x38] sm:$0xff]
        %v1173 = vld [vmem:[%s495 + $0x40] sm:$0xff]
        %v1174 = vld [vmem:[%s495 + $0x48] sm:$0xff]
        %v1175 = vld [vmem:[%s495 + $0x50] sm:$0xff]
        %v1176 = vld [vmem:[%s495 + $0x58] sm:$0xff]
        %v1177 = vld [vmem:[%s495 + $0x60] sm:$0xff]
        %v1178 = vld [vmem:[%s495 + $0x68] sm:$0xff]
        %v1179 = vld [vmem:[%s495 + $0x70] sm:$0xff]
        %v1180 = vld [vmem:[%s495 + $0x78] sm:$0xff]
        %1182 = vset.pattern.permute.xlu0 0
        %1183 = vperm.xlu0 %1182, %v1165
        %v1184 = vpop.permute.xlu0 %1183
        %1187 = vset.pattern.permute.xlu0 0
        %1188 = vperm.xlu0 %1187, %v1166
        %v1189 = vpop.permute.xlu0 %1188
        %1192 = vset.pattern.permute.xlu0 0
        %1193 = vperm.xlu0 %1192, %v1167
        %v1194 = vpop.permute.xlu0 %1193
        %1197 = vset.pattern.permute.xlu0 0
        %1198 = vperm.xlu0 %1197, %v1168
        %v1199 = vpop.permute.xlu0 %1198
        %1202 = vset.pattern.permute.xlu0 0
        %1203 = vperm.xlu0 %1202, %v1169
        %v1204 = vpop.permute.xlu0 %1203
        %1207 = vset.pattern.permute.xlu0 0
        %1208 = vperm.xlu0 %1207, %v1170
        %v1209 = vpop.permute.xlu0 %1208
        %1212 = vset.pattern.permute.xlu0 0
        %1213 = vperm.xlu0 %1212, %v1171
        %v1214 = vpop.permute.xlu0 %1213
        %1217 = vset.pattern.permute.xlu0 0
        %1218 = vperm.xlu0 %1217, %v1172
        %v1219 = vpop.permute.xlu0 %1218
        %1222 = vset.pattern.permute.xlu0 0
        %1223 = vperm.xlu0 %1222, %v1173
        %v1224 = vpop.permute.xlu0 %1223
        %1227 = vset.pattern.permute.xlu0 0
        %1228 = vperm.xlu0 %1227, %v1174
        %v1229 = vpop.permute.xlu0 %1228
        %1232 = vset.pattern.permute.xlu0 0
        %1233 = vperm.xlu0 %1232, %v1175
        %v1234 = vpop.permute.xlu0 %1233
        %1237 = vset.pattern.permute.xlu0 0
        %1238 = vperm.xlu0 %1237, %v1176
        %v1239 = vpop.permute.xlu0 %1238
        %1242 = vset.pattern.permute.xlu0 0
        %1243 = vperm.xlu0 %1242, %v1177
        %v1244 = vpop.permute.xlu0 %1243
        %1247 = vset.pattern.permute.xlu0 0
        %1248 = vperm.xlu0 %1247, %v1178
        %v1249 = vpop.permute.xlu0 %1248
        %1252 = vset.pattern.permute.xlu0 0
        %1253 = vperm.xlu0 %1252, %v1179
        %v1254 = vpop.permute.xlu0 %1253
        %1257 = vset.pattern.permute.xlu0 0
        %1258 = vperm.xlu0 %1257, %v1180
        %v1259 = vpop.permute.xlu0 %1258
        %v1261 = vmul.f32 %v1149, %v1184
        %v1262 = vmul.f32 %v1150, %v1189
        %v1263 = vmul.f32 %v1151, %v1194
        %v1264 = vmul.f32 %v1152, %v1199
        %v1265 = vmul.f32 %v1153, %v1204
        %v1266 = vmul.f32 %v1154, %v1209
        %v1267 = vmul.f32 %v1155, %v1214
        %v1268 = vmul.f32 %v1156, %v1219
        %v1269 = vmul.f32 %v1157, %v1224
        %v1270 = vmul.f32 %v1158, %v1229
        %v1271 = vmul.f32 %v1159, %v1234
        %v1272 = vmul.f32 %v1160, %v1239
        %v1273 = vmul.f32 %v1161, %v1244
        %v1274 = vmul.f32 %v1162, %v1249
        %v1275 = vmul.f32 %v1163, %v1254
        %v1276 = vmul.f32 %v1164, %v1259
        %v1277 = vpack.c.bf16 %v1262, %v1261
        %v1278 = vpack.c.bf16 %v1264, %v1263
        %v1279 = vpack.c.bf16 %v1266, %v1265
        %v1280 = vpack.c.bf16 %v1268, %v1267
        %v1281 = vpack.c.bf16 %v1270, %v1269
        %v1282 = vpack.c.bf16 %v1272, %v1271
        %v1283 = vpack.c.bf16 %v1274, %v1273
        %v1284 = vpack.c.bf16 %v1276, %v1275
        %v1285 = vld [vmem:[#allocation3] sm:$0xff]
        %v1286 = vld [vmem:[#allocation3 + $0x8] sm:$0xff]
        %v1287 = vld [vmem:[#allocation3 + $0x10] sm:$0xff]
        %v1288 = vld [vmem:[#allocation3 + $0x18] sm:$0xff]
        %v1289 = vld [vmem:[#allocation3 + $0x20] sm:$0xff]
        %v1290 = vld [vmem:[#allocation3 + $0x28] sm:$0xff]
        %v1291 = vld [vmem:[#allocation3 + $0x30] sm:$0xff]
        %v1292 = vld [vmem:[#allocation3 + $0x38] sm:$0xff]
        %v1293 = vld [vmem:[#allocation3 + $0x40] sm:$0xff]
        %v1294 = vld [vmem:[#allocation3 + $0x48] sm:$0xff]
        %v1295 = vld [vmem:[#allocation3 + $0x50] sm:$0xff]
        %v1296 = vld [vmem:[#allocation3 + $0x58] sm:$0xff]
        %v1297 = vld [vmem:[#allocation3 + $0x60] sm:$0xff]
        %v1298 = vld [vmem:[#allocation3 + $0x68] sm:$0xff]
        %v1299 = vld [vmem:[#allocation3 + $0x70] sm:$0xff]
        %v1300 = vld [vmem:[#allocation3 + $0x78] sm:$0xff]
        %v1301 = vld [vmem:[%s7] sm:$0xf]
        %v1302 = vld [vmem:[%s7 + $0x4] sm:$0xf]
        %v1303 = vld [vmem:[%s7 + $0x8] sm:$0xf]
        %v1304 = vld [vmem:[%s7 + $0xc] sm:$0xf]
        %v1305 = vld [vmem:[%s7 + $0x10] sm:$0xf]
        %v1306 = vld [vmem:[%s7 + $0x14] sm:$0xf]
        %v1307 = vld [vmem:[%s7 + $0x18] sm:$0xf]
        %v1308 = vld [vmem:[%s7 + $0x1c] sm:$0xf]
        %v1309 = vld [vmem:[%s7 + $0x20] sm:$0xf]
        %v1310 = vld [vmem:[%s7 + $0x24] sm:$0xf]
        %v1311 = vld [vmem:[%s7 + $0x28] sm:$0xf]
        %v1312 = vld [vmem:[%s7 + $0x2c] sm:$0xf]
        %v1313 = vld [vmem:[%s7 + $0x30] sm:$0xf]
        %v1314 = vld [vmem:[%s7 + $0x34] sm:$0xf]
        %v1315 = vld [vmem:[%s7 + $0x38] sm:$0xf]
        %v1316 = vld [vmem:[%s7 + $0x3c] sm:$0xf]
        %v1333 = vunpack.c.l.b16 %v1301
        %v1334 = vunpack.c.l.b16 %v1302
        %v1335 = vunpack.c.l.b16 %v1303
        %v1336 = vunpack.c.l.b16 %v1304
        %v1337 = vunpack.c.l.b16 %v1305
        %v1338 = vunpack.c.l.b16 %v1306
        %v1339 = vunpack.c.l.b16 %v1307
        %v1340 = vunpack.c.l.b16 %v1308
        %v1341 = vunpack.c.l.b16 %v1309
        %v1342 = vunpack.c.l.b16 %v1310
        %v1343 = vunpack.c.l.b16 %v1311
        %v1344 = vunpack.c.l.b16 %v1312
        %v1345 = vunpack.c.l.b16 %v1313
        %v1346 = vunpack.c.l.b16 %v1314
        %v1347 = vunpack.c.l.b16 %v1315
        %v1348 = vunpack.c.l.b16 %v1316
        %v1349 = vpack.c.b16 %v1334, %v1333
        %v1350 = vpack.c.b16 %v1336, %v1335
        %v1351 = vpack.c.b16 %v1338, %v1337
        %v1352 = vpack.c.b16 %v1340, %v1339
        %v1353 = vpack.c.b16 %v1342, %v1341
        %v1354 = vpack.c.b16 %v1344, %v1343
        %v1355 = vpack.c.b16 %v1346, %v1345
        %v1356 = vpack.c.b16 %v1348, %v1347
        %1365 = vmatprep.subr.bf16.mxu0 0
        %1366 = vmatpush1.bf16.msra.mxu0 %v1349
        %1367 = vmatprep.subr.bf16.mxu0 0
        %1368 = vmatpush1.bf16.msra.mxu0 %v1350
        %1369 = vmatprep.subr.bf16.mxu0 0
        %1370 = vmatpush1.bf16.msra.mxu0 %v1351
        %1371 = vmatprep.subr.bf16.mxu0 0
        %1372 = vmatpush1.bf16.msra.mxu0 %v1352
        %1373 = vmatprep.subr.bf16.mxu0 0
        %1374 = vmatpush1.bf16.msra.mxu0 %v1353
        %1375 = vmatprep.subr.bf16.mxu0 0
        %1376 = vmatpush1.bf16.msra.mxu0 %v1354
        %1377 = vmatprep.subr.bf16.mxu0 0
        %1378 = vmatpush1.bf16.msra.mxu0 %v1355
        %1379 = vmatprep.subr.bf16.mxu0 0
        %1380 = vmatpush1.bf16.msra.mxu0 %v1356
        %1381 = vmatprep.subr.bf16.mxu0 0
        %1382 = vmatpush1.bf16.msra.mxu0 0
        %1383 = vmatprep.subr.bf16.mxu0 0
        %1384 = vmatpush1.bf16.msra.mxu0 0
        %1385 = vmatprep.subr.bf16.mxu0 0
        %1386 = vmatpush1.bf16.msra.mxu0 0
        %1387 = vmatprep.subr.bf16.mxu0 0
        %1388 = vmatpush1.bf16.msra.mxu0 0
        %1389 = vmatprep.subr.bf16.mxu0 0
        %1390 = vmatpush1.bf16.msra.mxu0 0
        %1391 = vmatprep.subr.bf16.mxu0 0
        %1392 = vmatpush1.bf16.msra.mxu0 0
        %1393 = vmatprep.subr.bf16.mxu0 0
        %1394 = vmatpush1.bf16.msra.mxu0 0
        %1395 = vmatprep.subr.bf16.mxu0 0
        %1396 = vmatpush1.bf16.msra.mxu0 0
        %1397 = vmatprep.mubr.bf16.mxu0 0
        %1398 = vmatmul.mubr.bf16.gmra.mrb[0].mxu0 %v1277
        %v1399 = vpop.f32.mrb[0].mxu0
        %v1400 = vadd.f32 0.0, %v1399
        %v1401 = vpop.f32.mrb[0].mxu0
        %v1402 = vpop.f32.mrb[0].mxu0
        %v1403 = vadd.f32 0.0, %v1402
        %v1404 = vpop.f32.mrb[0].mxu0
        %1405 = vmatprep.mubr.bf16.mxu0 0
        %1406 = vmatmul.mubr.bf16.gmra.mrb[0].mxu0 %v1278
        %v1407 = vpop.f32.mrb[0].mxu0
        %v1408 = vadd.f32 0.0, %v1407
        %v1409 = vpop.f32.mrb[0].mxu0
        %v1410 = vpop.f32.mrb[0].mxu0
        %v1411 = vadd.f32 0.0, %v1410
        %v1412 = vpop.f32.mrb[0].mxu0
        %1413 = vmatprep.mubr.bf16.mxu0 0
        %1414 = vmatmul.mubr.bf16.gmra.mrb[0].mxu0 %v1279
        %v1415 = vpop.f32.mrb[0].mxu0
        %v1416 = vadd.f32 0.0, %v1415
        %v1417 = vpop.f32.mrb[0].mxu0
        %v1418 = vpop.f32.mrb[0].mxu0
        %v1419 = vadd.f32 0.0, %v1418
        %v1420 = vpop.f32.mrb[0].mxu0
        %1421 = vmatprep.mubr.bf16.mxu0 0
        %1422 = vmatmul.mubr.bf16.gmra.mrb[0].mxu0 %v1280
        %v1423 = vpop.f32.mrb[0].mxu0
        %v1424 = vadd.f32 0.0, %v1423
        %v1425 = vpop.f32.mrb[0].mxu0
        %v1426 = vpop.f32.mrb[0].mxu0
        %v1427 = vadd.f32 0.0, %v1426
        %v1428 = vpop.f32.mrb[0].mxu0
        %1429 = vmatprep.mubr.bf16.mxu0 0
        %1430 = vmatmul.mubr.bf16.gmra.mrb[0].mxu0 %v1281
        %v1431 = vpop.f32.mrb[0].mxu0
        %v1432 = vadd.f32 0.0, %v1431
        %v1433 = vpop.f32.mrb[0].mxu0
        %v1434 = vpop.f32.mrb[0].mxu0
        %v1435 = vadd.f32 0.0, %v1434
        %v1436 = vpop.f32.mrb[0].mxu0
        %1437 = vmatprep.mubr.bf16.mxu0 0
        %1438 = vmatmul.mubr.bf16.gmra.mrb[0].mxu0 %v1282
        %v1439 = vpop.f32.mrb[0].mxu0
        %v1440 = vadd.f32 0.0, %v1439
        %v1441 = vpop.f32.mrb[0].mxu0
        %v1442 = vpop.f32.mrb[0].mxu0
        %v1443 = vadd.f32 0.0, %v1442
        %v1444 = vpop.f32.mrb[0].mxu0
        %1445 = vmatprep.mubr.bf16.mxu0 0
        %1446 = vmatmul.mubr.bf16.gmra.mrb[0].mxu0 %v1283
        %v1447 = vpop.f32.mrb[0].mxu0
        %v1448 = vadd.f32 0.0, %v1447
        %v1449 = vpop.f32.mrb[0].mxu0
        %v1450 = vpop.f32.mrb[0].mxu0
        %v1451 = vadd.f32 0.0, %v1450
        %v1452 = vpop.f32.mrb[0].mxu0
        %1453 = vmatprep.mubr.bf16.mxu0 0
        %1454 = vmatmul.mubr.bf16.gmra.mrb[0].mxu0 %v1284
        %v1455 = vpop.f32.mrb[0].mxu0
        %v1456 = vadd.f32 0.0, %v1455
        %v1457 = vpop.f32.mrb[0].mxu0
        %v1458 = vpop.f32.mrb[0].mxu0
        %v1459 = vadd.f32 0.0, %v1458
        %v1460 = vpop.f32.mrb[0].mxu0
        %1461 = vdwg.mxu0
        %v1462 = vadd.f32 %v1285, %v1400
        %v1463 = vadd.f32 %v1286, %v1403
        %v1464 = vadd.f32 %v1287, %v1408
        %v1465 = vadd.f32 %v1288, %v1411
        %v1466 = vadd.f32 %v1289, %v1416
        %v1467 = vadd.f32 %v1290, %v1419
        %v1468 = vadd.f32 %v1291, %v1424
        %v1469 = vadd.f32 %v1292, %v1427
        %v1470 = vadd.f32 %v1293, %v1432
        %v1471 = vadd.f32 %v1294, %v1435
        %v1472 = vadd.f32 %v1295, %v1440
        %v1473 = vadd.f32 %v1296, %v1443
        %v1474 = vadd.f32 %v1297, %v1448
        %v1475 = vadd.f32 %v1298, %v1451
        %v1476 = vadd.f32 %v1299, %v1456
        %v1477 = vadd.f32 %v1300, %v1459
        %v1478 = vmul.f32 %v1462, %v1462
        %v1479 = vmul.f32 %v1463, %v1463
        %v1480 = vmul.f32 %v1464, %v1464
        %v1481 = vmul.f32 %v1465, %v1465
        %v1482 = vmul.f32 %v1466, %v1466
        %v1483 = vmul.f32 %v1467, %v1467
        %v1484 = vmul.f32 %v1468, %v1468
        %v1485 = vmul.f32 %v1469, %v1469
        %v1486 = vmul.f32 %v1470, %v1470
        %v1487 = vmul.f32 %v1471, %v1471
        %v1488 = vmul.f32 %v1472, %v1472
        %v1489 = vmul.f32 %v1473, %v1473
        %v1490 = vmul.f32 %v1474, %v1474
        %v1491 = vmul.f32 %v1475, %v1475
        %v1492 = vmul.f32 %v1476, %v1476
        %v1493 = vmul.f32 %v1477, %v1477
        %1494 = vadd.xlane.f32.xlu0 %v1478
        %v1495 = vpop.xlane.xlu0 %1494
        %1496 = vadd.xlane.f32.xlu0 %v1479
        %v1497 = vpop.xlane.xlu0 %1496
        %1498 = vadd.xlane.f32.xlu0 %v1480
        %v1499 = vpop.xlane.xlu0 %1498
        %1500 = vadd.xlane.f32.xlu0 %v1481
        %v1501 = vpop.xlane.xlu0 %1500
        %1502 = vadd.xlane.f32.xlu0 %v1482
        %v1503 = vpop.xlane.xlu0 %1502
        %1504 = vadd.xlane.f32.xlu0 %v1483
        %v1505 = vpop.xlane.xlu0 %1504
        %1506 = vadd.xlane.f32.xlu0 %v1484
        %v1507 = vpop.xlane.xlu0 %1506
        %1508 = vadd.xlane.f32.xlu0 %v1485
        %v1509 = vpop.xlane.xlu0 %1508
        %1510 = vadd.xlane.f32.xlu0 %v1486
        %v1511 = vpop.xlane.xlu0 %1510
        %1512 = vadd.xlane.f32.xlu0 %v1487
        %v1513 = vpop.xlane.xlu0 %1512
        %1514 = vadd.xlane.f32.xlu0 %v1488
        %v1515 = vpop.xlane.xlu0 %1514
        %1516 = vadd.xlane.f32.xlu0 %v1489
        %v1517 = vpop.xlane.xlu0 %1516
        %1518 = vadd.xlane.f32.xlu0 %v1490
        %v1519 = vpop.xlane.xlu0 %1518
        %1520 = vadd.xlane.f32.xlu0 %v1491
        %v1521 = vpop.xlane.xlu0 %1520
        %1522 = vadd.xlane.f32.xlu0 %v1492
        %v1523 = vpop.xlane.xlu0 %1522
        %1524 = vadd.xlane.f32.xlu0 %v1493
        %v1525 = vpop.xlane.xlu0 %1524
        %v1526 = vmax.f32 %v1495, 1e-24
        %v1527 = vmax.f32 %v1497, 1e-24
        %v1528 = vmax.f32 %v1499, 1e-24
        %v1529 = vmax.f32 %v1501, 1e-24
        %v1530 = vmax.f32 %v1503, 1e-24
        %v1531 = vmax.f32 %v1505, 1e-24
        %v1532 = vmax.f32 %v1507, 1e-24
        %v1533 = vmax.f32 %v1509, 1e-24
        %v1534 = vmax.f32 %v1511, 1e-24
        %v1535 = vmax.f32 %v1513, 1e-24
        %v1536 = vmax.f32 %v1515, 1e-24
        %v1537 = vmax.f32 %v1517, 1e-24
        %v1538 = vmax.f32 %v1519, 1e-24
        %v1539 = vmax.f32 %v1521, 1e-24
        %v1540 = vmax.f32 %v1523, 1e-24
        %v1541 = vmax.f32 %v1525, 1e-24
        %v1542 = vrsqrt.pop %v1526
        %v1543 = vrsqrt.pop %v1527
        %v1544 = vrsqrt.pop %v1528
        %v1545 = vrsqrt.pop %v1529
        %v1546 = vrsqrt.pop %v1530
        %v1547 = vrsqrt.pop %v1531
        %v1548 = vrsqrt.pop %v1532
        %v1549 = vrsqrt.pop %v1533
        %v1550 = vrsqrt.pop %v1534
        %v1551 = vrsqrt.pop %v1535
        %v1552 = vrsqrt.pop %v1536
        %v1553 = vrsqrt.pop %v1537
        %v1554 = vrsqrt.pop %v1538
        %v1555 = vrsqrt.pop %v1539
        %v1556 = vrsqrt.pop %v1540
        %v1557 = vrsqrt.pop %v1541
        %v1558 = vmul.f32 %v1542, 0.999995
        %v1559 = vmul.f32 %v1543, 0.999995
        %v1560 = vmul.f32 %v1544, 0.999995
        %v1561 = vmul.f32 %v1545, 0.999995
        %v1562 = vmul.f32 %v1546, 0.999995
        %v1563 = vmul.f32 %v1547, 0.999995
        %v1564 = vmul.f32 %v1548, 0.999995
        %v1565 = vmul.f32 %v1549, 0.999995
        %v1566 = vmul.f32 %v1550, 0.999995
        %v1567 = vmul.f32 %v1551, 0.999995
        %v1568 = vmul.f32 %v1552, 0.999995
        %v1569 = vmul.f32 %v1553, 0.999995
        %v1570 = vmul.f32 %v1554, 0.999995
        %v1571 = vmul.f32 %v1555, 0.999995
        %v1572 = vmul.f32 %v1556, 0.999995
        %v1573 = vmul.f32 %v1557, 0.999995
        %v1574 = vmax.f32 %v1462, 0.0
        %v1575 = vmax.f32 %v1463, 0.0
        %v1576 = vmax.f32 %v1464, 0.0
        %v1577 = vmax.f32 %v1465, 0.0
        %v1578 = vmax.f32 %v1466, 0.0
        %v1579 = vmax.f32 %v1467, 0.0
        %v1580 = vmax.f32 %v1468, 0.0
        %v1581 = vmax.f32 %v1469, 0.0
        %v1582 = vmax.f32 %v1470, 0.0
        %v1583 = vmax.f32 %v1471, 0.0
        %v1584 = vmax.f32 %v1472, 0.0
        %v1585 = vmax.f32 %v1473, 0.0
        %v1586 = vmax.f32 %v1474, 0.0
        %v1587 = vmax.f32 %v1475, 0.0
        %v1588 = vmax.f32 %v1476, 0.0
        %v1589 = vmax.f32 %v1477, 0.0
        %v1590 = vmul.f32 %v1574, %v1558
        %v1591 = vmul.f32 %v1575, %v1559
        %v1592 = vmul.f32 %v1576, %v1560
        %v1593 = vmul.f32 %v1577, %v1561
        %v1594 = vmul.f32 %v1578, %v1562
        %v1595 = vmul.f32 %v1579, %v1563
        %v1596 = vmul.f32 %v1580, %v1564
        %v1597 = vmul.f32 %v1581, %v1565
        %v1598 = vmul.f32 %v1582, %v1566
        %v1599 = vmul.f32 %v1583, %v1567
        %v1600 = vmul.f32 %v1584, %v1568
        %v1601 = vmul.f32 %v1585, %v1569
        %v1602 = vmul.f32 %v1586, %v1570
        %v1603 = vmul.f32 %v1587, %v1571
        %v1604 = vmul.f32 %v1588, %v1572
        %v1605 = vmul.f32 %v1589, %v1573
        %v1606 = vpack.c.bf16 %v1591, %v1590
        %v1607 = vpack.c.bf16 %v1593, %v1592
        %v1608 = vpack.c.bf16 %v1595, %v1594
        %v1609 = vpack.c.bf16 %v1597, %v1596
        %v1610 = vpack.c.bf16 %v1599, %v1598
        %v1611 = vpack.c.bf16 %v1601, %v1600
        %v1612 = vpack.c.bf16 %v1603, %v1602
        %v1613 = vpack.c.bf16 %v1605, %v1604
        %v1622 = vunpack.c.l.b16 %v1606
        %v1623 = vunpack.c.h.b16 %v1606
        %v1624 = vunpack.c.l.b16 %v1607
        %v1625 = vunpack.c.h.b16 %v1607
        %v1626 = vunpack.c.l.b16 %v1608
        %v1627 = vunpack.c.h.b16 %v1608
        %v1628 = vunpack.c.l.b16 %v1609
        %v1629 = vunpack.c.h.b16 %v1609
        %v1630 = vunpack.c.l.b16 %v1610
        %v1631 = vunpack.c.h.b16 %v1610
        %v1632 = vunpack.c.l.b16 %v1611
        %v1633 = vunpack.c.h.b16 %v1611
        %v1634 = vunpack.c.l.b16 %v1612
        %v1635 = vunpack.c.h.b16 %v1612
        %v1636 = vunpack.c.l.b16 %v1613
        %v1637 = vunpack.c.h.b16 %v1613
        %v1638 = vpack.c.b16 %v1622, %v1622
        %v1639 = vpack.c.b16 %v1623, %v1623
        %v1640 = vpack.c.b16 %v1624, %v1624
        %v1641 = vpack.c.b16 %v1625, %v1625
        %v1642 = vpack.c.b16 %v1626, %v1626
        %v1643 = vpack.c.b16 %v1627, %v1627
        %v1644 = vpack.c.b16 %v1628, %v1628
        %v1645 = vpack.c.b16 %v1629, %v1629
        %v1646 = vpack.c.b16 %v1630, %v1630
        %v1647 = vpack.c.b16 %v1631, %v1631
        %v1648 = vpack.c.b16 %v1632, %v1632
        %v1649 = vpack.c.b16 %v1633, %v1633
        %v1650 = vpack.c.b16 %v1634, %v1634
        %v1651 = vpack.c.b16 %v1635, %v1635
        %v1652 = vpack.c.b16 %v1636, %v1636
        %v1653 = vpack.c.b16 %v1637, %v1637
        %1670 = vst [vmem:[%s501] sm:$0xf] %v1638
        %1671 = vst [vmem:[%s501 + $0x4] sm:$0xf] %v1639
        %1672 = vst [vmem:[%s501 + $0x8] sm:$0xf] %v1640
        %1673 = vst [vmem:[%s501 + $0xc] sm:$0xf] %v1641
        %1674 = vst [vmem:[%s501 + $0x10] sm:$0xf] %v1642
        %1675 = vst [vmem:[%s501 + $0x14] sm:$0xf] %v1643
        %1676 = vst [vmem:[%s501 + $0x18] sm:$0xf] %v1644
        %1677 = vst [vmem:[%s501 + $0x1c] sm:$0xf] %v1645
        %1678 = vst [vmem:[%s501 + $0x20] sm:$0xf] %v1646
        %1679 = vst [vmem:[%s501 + $0x24] sm:$0xf] %v1647
        %1680 = vst [vmem:[%s501 + $0x28] sm:$0xf] %v1648
        %1681 = vst [vmem:[%s501 + $0x2c] sm:$0xf] %v1649
        %1682 = vst [vmem:[%s501 + $0x30] sm:$0xf] %v1650
        %1683 = vst [vmem:[%s501 + $0x34] sm:$0xf] %v1651
        %1684 = vst [vmem:[%s501 + $0x38] sm:$0xf] %v1652
        %1685 = vst [vmem:[%s501 + $0x3c] sm:$0xf] %v1653
      $region60: #{activation_graphsage_net_forward.5} parent=47 // pred_fallthru
        _
      %s1686 = smul.u32 16, %s34
      %p1687 = scmp.lt.s32.totalorder %s1686, 31
      %s1688 = scalar_select %p1687, %s1686, 31
      %s1689 = smul.addr %s1688, 4
      %s1690 = scalar_lea.vmem %s9, %s1689
      // Predicated region
      $region61: #{activation_graphsage_net_forward.5} parent=47 // pred_check
        %p1691 = pneg %p261
      $region62: #{activation_graphsage_net_forward.5} parent=47 // pred_check_branch
        %1693 = sbr.rel (%p1691) target = $region64
      $region63: #{activation_graphsage_net_forward.5} parent=47 // pred_region
        %s1694 = smul.u32 16, %s34
      $region64: #{activation_graphsage_net_forward.5} parent=47 // pred_fallthru
        _
    $region48: #{activation_graphsage_net_forward.5} parent=5 // pred_fallthru
      _
    %p1695 = scmp.le.s32.totalorder 2, %s25
    // Predicated region
    $region65: #{activation_graphsage_net_forward.5} parent=5 // pred_check
      %p1696 = pneg %p1695
    $region66: #{activation_graphsage_net_forward.5} parent=5 // pred_check_branch
      %1698 = sbr.rel (%p1696) target = $region68
    $region67: #{activation_graphsage_net_forward.5} parent=5 // pred_region
      %s1699 = ssub.s32 %s25, 2
      // Predicated region
      $region69: #{activation_graphsage_net_forward.5} parent=67 // pred_check
        %p1700 = pneg %p267
      $region70: #{activation_graphsage_net_forward.5} parent=67 // pred_check_branch
        %1702 = sbr.rel (%p1700) target = $region72
      $region71: #{activation_graphsage_net_forward.5} parent=67 // pred_region
        %s1703 = smul.u32 16, %s36
        %p1704 = scmp.lt.s32.totalorder %s1703, 31
        %s1705 = scalar_select %p1704, %s1703, 31
        %s1706 = smul.addr %s1705, 4
        %s1707 = scalar_lea.vmem %s9, %s1706
      $region72: #{activation_graphsage_net_forward.5} parent=67 // pred_fallthru
        _
    $region68: #{activation_graphsage_net_forward.5} parent=5 // pred_fallthru
      _
  $region6: #{activation_graphsage_net_forward.5} parent=0 // loop_footer
    %s29 = sadd.s32 1, %s25
  $region7: #{activation_graphsage_net_forward.5} parent=0 // loop_footer_branch
    %24 = sbr.rel target = $region3
  $region8: #{activation_graphsage_net_forward.5} parent=0 // loop_exit
    _

</llo_original>
